<compile_context>
chip_gen: v7x
topology: tpu7x:2x2x1
jax: 0.10.0
libtpu: 0.0.40
codegen_flags: <defaults>
</compile_context>

<pallas_src>
import functools
import math

import jax
import jax.numpy as jnp
from jax.experimental import pallas as pl
from jax.experimental.pallas import tpu as pltpu

_BN_EPS = 1e-5
_PARALLEL_1D = pltpu.CompilerParams(dimension_semantics=("parallel",))
_ROW_TILE_CAP = 512        # row tile for the (M, D) BN/FFN passes
_MHA_ROW_CAP = 256         # max TB*N rows processed per MHA grid step
_MHA_SCORE_CAP = 2 << 20   # max bytes of one (TB, N, N) f32 score tile


# ----------------------------------------------------------------------------
# Small host-side helpers
# ----------------------------------------------------------------------------
def _round_up(x, m):
    return ((x + m - 1) // m) * m


def _pad_to(a, shape):
    pads = [(0, t - s) for s, t in zip(a.shape, shape)]
    if all(p == (0, 0) for p in pads):
        return a
    return jnp.pad(a, pads)


def _choose_tb(b, n):
    """Batch elements per MHA grid step.

    TB > 1 requires N % 8 == 0 so the in-kernel (TB, N, .) <-> (TB*N, .)
    reshapes are exact (8,128)-tile reinterpretations.  Keep >= 2 grid steps
    when possible so a 2-TC chip (v7x) has parallel work.
    """
    if n % 8 != 0:
        return 1
    best = 1
    for t in range(1, b + 1):
        if b % t != 0:
            continue
        if t * n > _MHA_ROW_CAP:
            continue
        if t * n * n * 4 > _MHA_SCORE_CAP:
            continue
        if b >= 2 and b // t < 2:
            continue
        best = t
    return best


def _row_tiling(m, cap=_ROW_TILE_CAP):
    """(tile_rows, padded_rows) for the flattened (M, D) row-wise passes."""
    if m <= cap:
        return m, m
    for t in range(cap, 15, -16):   # multiples of 16: tile-safe for any dtype
        if m % t == 0:
            return t, m
    return cap, _round_up(m, cap)   # pad M instead of one giant block


def _fold_bn(stats, gamma, beta, m_total):
    """Fold partial [sum; sumsq] stats + affine params into y = x*scale+shift."""
    tot = jnp.sum(stats, axis=0)                       # (2, D)
    mean = tot[0] * (1.0 / m_total)
    var = jnp.maximum(tot[1] * (1.0 / m_total) - mean * mean, 0.0)
    inv = jax.lax.rsqrt(var + _BN_EPS)
    scale = gamma * inv                                # (1, D)
    shift = beta - mean * scale
    return scale, shift


# ----------------------------------------------------------------------------
# In-kernel helpers
# ----------------------------------------------------------------------------
def _row_stats(h2d):
    """(rows, D) -> (2, D) partial [sum; sum of squares] over rows."""
    return jnp.concatenate(
        [jnp.sum(h2d, axis=0, keepdims=True),
         jnp.sum(h2d * h2d, axis=0, keepdims=True)], axis=0)


def _mha_residual(hf, tb, n, blocked, wq, wk, wv, wo, n_heads, dk):
    """hf: (tb*n, Dp) f32.  Returns hf + MultiHeadAttention(hf), (tb*n, Dp).

    wq/wk/wv: (Dp, H*dk) bf16 (head-fused, 1/sqrt(dk) folded into wq);
    wo: (H*dk, Dp) bf16.  Projections are full-width bf16 MXU matmuls; only
    the N x N score / PV part stays per-head.
    """
    hdk = n_heads * dk
    hb = hf.astype(jnp.bfloat16)
    q = jnp.dot(hb, wq, preferred_element_type=jnp.float32).reshape(tb, n, hdk)
    k = jnp.dot(hb, wk, preferred_element_type=jnp.float32).reshape(tb, n, hdk)
    v = jnp.dot(hb, wv, preferred_element_type=jnp.float32).reshape(tb, n, hdk)
    ctx = []
    for h in range(n_heads):
        lo = h * dk
        s = jnp.einsum('bqc,bkc->bqk', q[:, :, lo:lo + dk], k[:, :, lo:lo + dk],
                       preferred_element_type=jnp.float32)
        if blocked is not None:        # only the first layer is masked
            s = jnp.where(blocked, -1e9, s)
        s = s - jnp.max(s, axis=-1, keepdims=True)
        e = jnp.exp(s)
        p = e * pl.reciprocal(jnp.sum(e, axis=-1, keepdims=True), approx=True)
        ctx.append(jnp.einsum('bqk,bkc->bqc', p, v[:, :, lo:lo + dk],
                              preferred_element_type=jnp.float32))
    ctx = jnp.concatenate(ctx, axis=-1).reshape(tb * n, hdk)
    out = jnp.dot(ctx.astype(jnp.bfloat16), wo,
                  preferred_element_type=jnp.float32)
    return hf + out


# ----------------------------------------------------------------------------
# Kernels
# ----------------------------------------------------------------------------
def _embed_mha_kernel(x_ref, m_ref, w0_ref, b0_ref,
                      wq_ref, wk_ref, wv_ref, wo_ref,
                      h1_ref, st_ref, *, n_heads, dk):
    # init_embed Linear + masked MHA + skip connection + BN1 partial stats.
    tb, n, nd = x_ref.shape
    dp = w0_ref.shape[1]
    x = x_ref[...].reshape(tb * n, nd)
    h0 = jnp.dot(x, w0_ref[...], preferred_element_type=jnp.float32) + b0_ref[...]
    blocked = m_ref[...] != 0                       # (tb, n, n) bool
    h1 = _mha_residual(h0, tb, n, blocked, wq_ref[...], wk_ref[...],
                       wv_ref[...], wo_ref[...], n_heads, dk)
    h1_ref[...] = h1.reshape(tb, n, dp)
    st_ref[0] = _row_stats(h1)


def _bn_mha_kernel(h_ref, sc_ref, sh_ref,
                   wq_ref, wk_ref, wv_ref, wo_ref,
                   h1_ref, st_ref, *, n_heads, dk):
    # previous layer's BN2-apply + (unmasked) MHA + skip + BN1 partial stats.
    tb, n, dp = h_ref.shape
    hf = h_ref[...].reshape(tb * n, dp) * sc_ref[...] + sh_ref[...]
    h1 = _mha_residual(hf, tb, n, None, wq_ref[...], wk_ref[...],
                       wv_ref[...], wo_ref[...], n_heads, dk)
    h1_ref[...] = h1.reshape(tb, n, dp)
    st_ref[0] = _row_stats(h1)


def _bn_ffn_kernel(h_ref, sc_ref, sh_ref, w1_ref, b1_ref, w2_ref, b2_ref,
                   h3_ref, st_ref, *, m_valid, tm, masked):
    # BN1-apply + FFN + skip + BN2 partial stats (row-wise, tiled over M).
    h2 = h_ref[...] * sc_ref[...] + sh_ref[...]
    hid = jnp.maximum(
        jnp.dot(h2.astype(jnp.bfloat16), w1_ref[...],
                preferred_element_type=jnp.float32) + b1_ref[...], 0.0)
    h3 = h2 + jnp.dot(hid.astype(jnp.bfloat16), w2_ref[...],
                      preferred_element_type=jnp.float32) + b2_ref[...]
    h3_ref[...] = h3
    if masked:   # exclude padded rows from the batch statistics
        row = (pl.program_id(0) * tm
               + jax.lax.broadcasted_iota(jnp.int32, (tm, 1), 0))
        hs = jnp.where(row < m_valid, h3, 0.0)
    else:
        hs = h3
    st_ref[0] = jnp.concatenate(
        [jnp.sum(hs, axis=0, keepdims=True),
         jnp.sum(hs * h3, axis=0, keepdims=True)], axis=0)


def _bn_apply_kernel(h_ref, sc_ref, sh_ref, o_ref):
    o_ref[...] = h_ref[...] * sc_ref[...] + sh_ref[...]


# ----------------------------------------------------------------------------
# pallas_call wrappers
# ----------------------------------------------------------------------------
def embed_mha(x, mask_i8, w0, b0, wq, wk, wv, wo, tb, n_heads):
    B, N, nd = x.shape
    Dp = w0.shape[1]
    Hdk = wq.shape[1]
    dk = Hdk // n_heads
    nb = B // tb
    kernel = functools.partial(_embed_mha_kernel, n_heads=n_heads, dk=dk)
    return pl.pallas_call(
        kernel,
        out_shape=(jax.ShapeDtypeStruct((B, N, Dp), jnp.float32),
                   jax.ShapeDtypeStruct((nb, 2, Dp), jnp.float32)),
        grid=(nb,),
        in_specs=[
            pl.BlockSpec((tb, N, nd), lambda i: (i, 0, 0)),
            pl.BlockSpec((tb, N, N), lambda i: (i, 0, 0)),
            pl.BlockSpec((nd, Dp), lambda i: (0, 0)),
            pl.BlockSpec((1, Dp), lambda i: (0, 0)),
            pl.BlockSpec((Dp, Hdk), lambda i: (0, 0)),
            pl.BlockSpec((Dp, Hdk), lambda i: (0, 0)),
            pl.BlockSpec((Dp, Hdk), lambda i: (0, 0)),
            pl.BlockSpec((Hdk, Dp), lambda i: (0, 0)),
        ],
        out_specs=(
            pl.BlockSpec((tb, N, Dp), lambda i: (i, 0, 0)),
            pl.BlockSpec((1, 2, Dp), lambda i: (i, 0, 0)),
        ),
        compiler_params=_PARALLEL_1D,
    )(x, mask_i8, w0, b0, wq, wk, wv, wo)


def bn_mha(h_prev, scale, shift, wq, wk, wv, wo, tb, n_heads):
    B, N, Dp = h_prev.shape
    Hdk = wq.shape[1]
    dk = Hdk // n_heads
    nb = B // tb
    kernel = functools.partial(_bn_mha_kernel, n_heads=n_heads, dk=dk)
    return pl.pallas_call(
        kernel,
        out_shape=(jax.ShapeDtypeStruct((B, N, Dp), jnp.float32),
                   jax.ShapeDtypeStruct((nb, 2, Dp), jnp.float32)),
        grid=(nb,),
        in_specs=[
            pl.BlockSpec((tb, N, Dp), lambda i: (i, 0, 0)),
            pl.BlockSpec((1, Dp), lambda i: (0, 0)),
            pl.BlockSpec((1, Dp), lambda i: (0, 0)),
            pl.BlockSpec((Dp, Hdk), lambda i: (0, 0)),
            pl.BlockSpec((Dp, Hdk), lambda i: (0, 0)),
            pl.BlockSpec((Dp, Hdk), lambda i: (0, 0)),
            pl.BlockSpec((Hdk, Dp), lambda i: (0, 0)),
        ],
        out_specs=(
            pl.BlockSpec((tb, N, Dp), lambda i: (i, 0, 0)),
            pl.BlockSpec((1, 2, Dp), lambda i: (i, 0, 0)),
        ),
        compiler_params=_PARALLEL_1D,
    )(h_prev, scale, shift, wq, wk, wv, wo)


def bn_ffn(h_flat, scale, shift, w1, b1, w2, b2, m_valid):
    M, Dp = h_flat.shape
    Fp = w1.shape[1]
    tm, mp = _row_tiling(M)
    if mp != M:
        h_flat = jnp.pad(h_flat, ((0, mp - M), (0, 0)))
    nt = mp // tm
    kernel = functools.partial(_bn_ffn_kernel, m_valid=m_valid, tm=tm,
                               masked=(mp != M))
    return pl.pallas_call(
        kernel,
        out_shape=(jax.ShapeDtypeStruct((mp, Dp), jnp.float32),
                   jax.ShapeDtypeStruct((nt, 2, Dp), jnp.float32)),
        grid=(nt,),
        in_specs=[
            pl.BlockSpec((tm, Dp), lambda i: (i, 0)),
            pl.BlockSpec((1, Dp), lambda i: (0, 0)),
            pl.BlockSpec((1, Dp), lambda i: (0, 0)),
            pl.BlockSpec((Dp, Fp), lambda i: (0, 0)),
            pl.BlockSpec((1, Fp), lambda i: (0, 0)),
            pl.BlockSpec((Fp, Dp), lambda i: (0, 0)),
            pl.BlockSpec((1, Dp), lambda i: (0, 0)),
        ],
        out_specs=(
            pl.BlockSpec((tm, Dp), lambda i: (i, 0)),
            pl.BlockSpec((1, 2, Dp), lambda i: (i, 0, 0)),
        ),
        compiler_params=_PARALLEL_1D,
    )(h_flat, scale, shift, w1, b1, w2, b2)


def bn_apply(h_flat, scale, shift):
    M, Dp = h_flat.shape
    tm, mp = _row_tiling(M)
    if mp != M:
        h_flat = jnp.pad(h_flat, ((0, mp - M), (0, 0)))
    nt = mp // tm
    return pl.pallas_call(
        _bn_apply_kernel,
        out_shape=jax.ShapeDtypeStruct((mp, Dp), jnp.float32),
        grid=(nt,),
        in_specs=[
            pl.BlockSpec((tm, Dp), lambda i: (i, 0)),
            pl.BlockSpec((1, Dp), lambda i: (0, 0)),
            pl.BlockSpec((1, Dp), lambda i: (0, 0)),
        ],
        out_specs=pl.BlockSpec((tm, Dp), lambda i: (i, 0)),
        compiler_params=_PARALLEL_1D,
    )(h_flat, scale, shift)


# ----------------------------------------------------------------------------
# Parameter construction (deterministic, mirrors PyTorch module shapes)
# ----------------------------------------------------------------------------
def init_encoder_params(key, *, n_heads, embed_dim, n_layers, node_dim,
                        feed_forward_hidden):
    dk = embed_dim // n_heads
    assert dk * n_heads == embed_dim

    def uniform(k, shape, fan):
        stdv = 1.0 / math.sqrt(fan)
        return jax.random.uniform(k, shape, jnp.float32, -stdv, stdv)

    keys = jax.random.split(key, 2 + n_layers)
    params = {
        "init_w": uniform(keys[0], (node_dim, embed_dim), node_dim),
        "init_b": uniform(keys[1], (1, embed_dim), node_dim),
        "layers": [],
    }
    for l in range(n_layers):
        lk = jax.random.split(keys[2 + l], 8)
        params["layers"].append({
            # per-head projections (H, D, dk); output projection (H, dk, D)
            "wq": uniform(lk[0], (n_heads, embed_dim, dk), dk),
            "wk": uniform(lk[1], (n_heads, embed_dim, dk), dk),
            "wv": uniform(lk[2], (n_heads, embed_dim, dk), dk),
            "wo": uniform(lk[3], (n_heads, dk, embed_dim), embed_dim),
            # BatchNorm affine params (PyTorch defaults: gamma=1, beta=0)
            "bn1_g": jnp.ones((1, embed_dim), jnp.float32),
            "bn1_b": jnp.zeros((1, embed_dim), jnp.float32),
            "bn2_g": jnp.ones((1, embed_dim), jnp.float32),
            "bn2_b": jnp.zeros((1, embed_dim), jnp.float32),
            # Feed-forward
            "w1": uniform(lk[4], (embed_dim, feed_forward_hidden), embed_dim),
            "b1": uniform(lk[5], (1, feed_forward_hidden), embed_dim),
            "w2": uniform(lk[6], (feed_forward_hidden, embed_dim),
                          feed_forward_hidden),
            "b2": uniform(lk[7], (1, embed_dim), feed_forward_hidden),
        })
    return params


def _prepare_layer(layer, Dp, Fp, n_heads, dk):
    """Fuse heads, fold 1/sqrt(dk), zero-pad feature dims, cast weights bf16."""
    def fuse_qkv(w, scale=1.0):
        d = w.shape[1]
        wf = jnp.transpose(w, (1, 0, 2)).reshape(d, n_heads * dk) * scale
        return _pad_to(wf, (Dp, n_heads * dk)).astype(jnp.bfloat16)

    wo = layer["wo"].reshape(n_heads * dk, -1)          # (H*dk, D)
    return {
        "wq": fuse_qkv(layer["wq"], 1.0 / math.sqrt(dk)),
        "wk": fuse_qkv(layer["wk"]),
        "wv": fuse_qkv(layer["wv"]),
        "wo": _pad_to(wo, (n_heads * dk, Dp)).astype(jnp.bfloat16),
        "bn1_g": _pad_to(layer["bn1_g"], (1, Dp)),
        "bn1_b": _pad_to(layer["bn1_b"], (1, Dp)),
        "bn2_g": _pad_to(layer["bn2_g"], (1, Dp)),
        "bn2_b": _pad_to(layer["bn2_b"], (1, Dp)),
        "w1": _pad_to(layer["w1"], (Dp, Fp)).astype(jnp.bfloat16),
        "b1": _pad_to(layer["b1"], (1, Fp)),
        "w2": _pad_to(layer["w2"], (Fp, Dp)).astype(jnp.bfloat16),
        "b2": _pad_to(layer["b2"], (1, Dp)),
    }


# ----------------------------------------------------------------------------
# Encoder forward
# ----------------------------------------------------------------------------
def encoder_forward(params, x, mask=None, *, n_heads):
    B, N, node_dim = x.shape
    assert params["layers"], "Encoder needs at least one layer"
    assert params["layers"][0]["wq"].shape[0] == n_heads
    D = params["init_w"].shape[1]
    F = params["layers"][0]["w1"].shape[1]
    dk = D // n_heads
    Dp = _round_up(D, 128)          # lane-dense feature dims (zero padding)
    Fp = _round_up(F, 128)
    M = B * N
    tb = _choose_tb(B, N)

    # PyTorch: mask = (mask == 0) -> nonzero means "blocked".
    if mask is None:
        mask_i8 = jnp.zeros((B, N, N), jnp.int8)
    else:
        mask_i8 = (mask == 0).astype(jnp.int8)

    init_w = _pad_to(params["init_w"], (node_dim, Dp))      # tiny, kept f32
    init_b = _pad_to(params["init_b"], (1, Dp))
    layers = [_prepare_layer(l, Dp, Fp, n_heads, dk) for l in params["layers"]]

    # ---- layer 0: fused init_embed + masked MHA + skip + BN1 stats ----------
    lyr = layers[0]
    h1, st1 = embed_mha(x, mask_i8, init_w, init_b,
                        lyr["wq"], lyr["wk"], lyr["wv"], lyr["wo"], tb, n_heads)
    sc1, sh1 = _fold_bn(st1, lyr["bn1_g"], lyr["bn1_b"], M)
    h3, st3 = bn_ffn(h1.reshape(M, Dp), sc1, sh1,
                     lyr["w1"], lyr["b1"], lyr["w2"], lyr["b2"], M)
    prev_g, prev_b = lyr["bn2_g"], lyr["bn2_b"]

    # ---- layers 1..L-1: previous BN2 fused into the MHA call ----------------
    # (the reference Normalization drops the mask tuple, so these MHAs run
    #  unmasked, exactly like the PyTorch module.)
    for lyr in layers[1:]:
        sc2, sh2 = _fold_bn(st3, prev_g, prev_b, M)
        h_in = h3[:M].reshape(B, N, Dp)       # no-op slice unless rows padded
        h1, st1 = bn_mha(h_in, sc2, sh2,
                         lyr["wq"], lyr["wk"], lyr["wv"], lyr["wo"], tb, n_heads)
        sc1, sh1 = _fold_bn(st1, lyr["bn1_g"], lyr["bn1_b"], M)
        h3, st3 = bn_ffn(h1.reshape(M, Dp), sc1, sh1,
                         lyr["w1"], lyr["b1"], lyr["w2"], lyr["b2"], M)
        prev_g, prev_b = lyr["bn2_g"], lyr["bn2_b"]

    # ---- final BN2 of the last layer ----------------------------------------
    sc2, sh2 = _fold_bn(st3, prev_g, prev_b, M)
    h_out = bn_apply(h3, sc2, sh2)[:M].reshape(B, N, Dp)
    return h_out[:, :, :D]


# ----------------------------------------------------------------------------
if __name__ == "__main__":
    batch_size = 4
    num_nodes = 8
    node_dim = 4
    embed_dim = 16
    n_heads = 2
    n_layers = 2
    feed_forward_hidden = 32

    key = jax.random.PRNGKey(0)
    k_params, k_x = jax.random.split(key)

    params = init_encoder_params(
        k_params, n_heads=n_heads, embed_dim=embed_dim, n_layers=n_layers,
        node_dim=node_dim, feed_forward_hidden=feed_forward_hidden)
    x = jax.random.normal(k_x, (batch_size, num_nodes, node_dim), jnp.float32)

    fwd = jax.jit(functools.partial(encoder_forward, n_heads=n_heads))
    h = jax.block_until_ready(fwd(params, x))

    assert h.shape == (batch_size, num_nodes, embed_dim)
    assert bool(jnp.all(jnp.isfinite(h)))
    print("KERNEL_OK")
</pallas_src>

<mosaic_0001>
module attributes {stable_mosaic.version = 11 : i64} {
  func.func @_embed_mha_kernel(%arg0: i32, %arg1: memref<2x8x4xf32, #tpu.memory_space<vmem>>, %arg2: memref<2x8x8xi8, #tpu.memory_space<vmem>>, %arg3: memref<4x128xf32, #tpu.memory_space<vmem>>, %arg4: memref<1x128xf32, #tpu.memory_space<vmem>>, %arg5: memref<128x16xbf16, #tpu.memory_space<vmem>>, %arg6: memref<128x16xbf16, #tpu.memory_space<vmem>>, %arg7: memref<128x16xbf16, #tpu.memory_space<vmem>>, %arg8: memref<16x128xbf16, #tpu.memory_space<vmem>>, %arg9: memref<2x8x128xf32, #tpu.memory_space<vmem>>, %arg10: memref<1x2x128xf32, #tpu.memory_space<vmem>>) attributes {dimension_semantics = [#tpu.dimension_semantics<parallel>], iteration_bounds = array<i64: 2>, scalar_prefetch = 0 : i64, scratch_operands = 0 : i64, tpu.core_type = #tpu.core_type<tc>, window_params = [{transform_indices = @transform_0, window_bounds = array<i64: 2, 8, 4>}, {transform_indices = @transform_1, window_bounds = array<i64: 2, 8, 8>}, {pipeline_mode = #tpu.pipeline_mode<synchronous>, transform_indices = @transform_2, window_bounds = array<i64: 4, 128>}, {pipeline_mode = #tpu.pipeline_mode<synchronous>, transform_indices = @transform_3, window_bounds = array<i64: 1, 128>}, {pipeline_mode = #tpu.pipeline_mode<synchronous>, transform_indices = @transform_4, window_bounds = array<i64: 128, 16>}, {pipeline_mode = #tpu.pipeline_mode<synchronous>, transform_indices = @transform_5, window_bounds = array<i64: 128, 16>}, {pipeline_mode = #tpu.pipeline_mode<synchronous>, transform_indices = @transform_6, window_bounds = array<i64: 128, 16>}, {pipeline_mode = #tpu.pipeline_mode<synchronous>, transform_indices = @transform_7, window_bounds = array<i64: 16, 128>}, {transform_indices = @transform_8, window_bounds = array<i64: 2, 8, 128>}, {transform_indices = @transform_9, window_bounds = array<i64: 1, 2, 128>}]} {
    %c0 = arith.constant 0 : index
    %c0_0 = arith.constant 0 : index
    %c0_1 = arith.constant 0 : index
    %0 = vector.load %arg1[%c0, %c0_0, %c0_1] : memref<2x8x4xf32, #tpu.memory_space<vmem>>, vector<2x8x4xf32>
    %1 = vector.shape_cast %0 : vector<2x8x4xf32> to vector<16x4xf32>
    %c0_2 = arith.constant 0 : index
    %c0_3 = arith.constant 0 : index
    %2 = vector.load %arg3[%c0_2, %c0_3] : memref<4x128xf32, #tpu.memory_space<vmem>>, vector<4x128xf32>
    %cst = arith.constant dense<0.000000e+00> : vector<16x128xf32>
    %3 = tpu.matmul %1, %2, %cst {dimension_numbers = #tpu.dot_dimension_numbers<[1], [0], [0], [1], [0, 0, 1, 1], [], []>} : vector<16x4xf32>, vector<4x128xf32>, vector<16x128xf32> -> vector<16x128xf32>
    %c0_4 = arith.constant 0 : index
    %c0_5 = arith.constant 0 : index
    %4 = vector.load %arg4[%c0_4, %c0_5] : memref<1x128xf32, #tpu.memory_space<vmem>>, vector<1x128xf32>
    %5 = vector.broadcast %4 : vector<1x128xf32> to vector<16x128xf32>
    %6 = arith.addf %3, %5 : vector<16x128xf32>
    %c0_6 = arith.constant 0 : index
    %c0_7 = arith.constant 0 : index
    %c0_8 = arith.constant 0 : index
    %7 = vector.load %arg2[%c0_6, %c0_7, %c0_8] : memref<2x8x8xi8, #tpu.memory_space<vmem>>, vector<2x8x8xi8>
    %c0_i8 = arith.constant 0 : i8
    %8 = vector.broadcast %c0_i8 : i8 to vector<2x8x8xi8>
    %9 = arith.cmpi ne, %7, %8 : vector<2x8x8xi8>
    %c0_9 = arith.constant 0 : index
    %c0_10 = arith.constant 0 : index
    %10 = vector.load %arg5[%c0_9, %c0_10] : memref<128x16xbf16, #tpu.memory_space<vmem>>, vector<128x16xbf16>
    %c0_11 = arith.constant 0 : index
    %c0_12 = arith.constant 0 : index
    %11 = vector.load %arg6[%c0_11, %c0_12] : memref<128x16xbf16, #tpu.memory_space<vmem>>, vector<128x16xbf16>
    %c0_13 = arith.constant 0 : index
    %c0_14 = arith.constant 0 : index
    %12 = vector.load %arg7[%c0_13, %c0_14] : memref<128x16xbf16, #tpu.memory_space<vmem>>, vector<128x16xbf16>
    %c0_15 = arith.constant 0 : index
    %c0_16 = arith.constant 0 : index
    %13 = vector.load %arg8[%c0_15, %c0_16] : memref<16x128xbf16, #tpu.memory_space<vmem>>, vector<16x128xbf16>
    %14 = arith.truncf %6 : vector<16x128xf32> to vector<16x128xbf16>
    %cst_17 = arith.constant dense<0.000000e+00> : vector<16x16xf32>
    %15 = tpu.matmul %14, %10, %cst_17 {dimension_numbers = #tpu.dot_dimension_numbers<[1], [0], [0], [1], [0, 0, 1, 1], [], []>} : vector<16x128xbf16>, vector<128x16xbf16>, vector<16x16xf32> -> vector<16x16xf32>
    %16 = vector.shape_cast %15 : vector<16x16xf32> to vector<2x8x16xf32>
    %cst_18 = arith.constant dense<0.000000e+00> : vector<16x16xf32>
    %17 = tpu.matmul %14, %11, %cst_18 {dimension_numbers = #tpu.dot_dimension_numbers<[1], [0], [0], [1], [0, 0, 1, 1], [], []>} : vector<16x128xbf16>, vector<128x16xbf16>, vector<16x16xf32> -> vector<16x16xf32>
    %18 = vector.shape_cast %17 : vector<16x16xf32> to vector<2x8x16xf32>
    %cst_19 = arith.constant dense<0.000000e+00> : vector<16x16xf32>
    %19 = tpu.matmul %14, %12, %cst_19 {dimension_numbers = #tpu.dot_dimension_numbers<[1], [0], [0], [1], [0, 0, 1, 1], [], []>} : vector<16x128xbf16>, vector<128x16xbf16>, vector<16x16xf32> -> vector<16x16xf32>
    %20 = vector.shape_cast %19 : vector<16x16xf32> to vector<2x8x16xf32>
    %21 = vector.extract_strided_slice %16 {offsets = [0, 0, 0], sizes = [2, 8, 8], strides = [1, 1, 1]} : vector<2x8x16xf32> to vector<2x8x8xf32>
    %22 = vector.extract_strided_slice %18 {offsets = [0, 0, 0], sizes = [2, 8, 8], strides = [1, 1, 1]} : vector<2x8x16xf32> to vector<2x8x8xf32>
    "tpu.trace_start"() <{level = 10 : i32, message = "bqc,bkc->bqk"}> : () -> ()
    %cst_20 = arith.constant dense<0.000000e+00> : vector<2x8x8xf32>
    %23 = tpu.matmul %21, %22, %cst_20 {dimension_numbers = #tpu.dot_dimension_numbers<[2], [2], [1], [1], [0, 0, 0, 1, 1, 1], [0], [0]>} : vector<2x8x8xf32>, vector<2x8x8xf32>, vector<2x8x8xf32> -> vector<2x8x8xf32>
    %cst_21 = arith.constant -1.000000e+09 : f32
    "tpu.trace_stop"() : () -> ()
    %24 = vector.broadcast %cst_21 : f32 to vector<2x8x8xf32>
    %25 = arith.select %9, %24, %23 : vector<2x8x8xi1>, vector<2x8x8xf32>
    %cst_22 = arith.constant dense<0xFF800000> : vector<2x8xf32>
    %26 = vector.multi_reduction <maximumf>, %25, %cst_22 [2] : vector<2x8x8xf32> to vector<2x8xf32>
    %27 = vector.shape_cast %26 : vector<2x8xf32> to vector<2x8x1xf32>
    %28 = vector.broadcast %27 : vector<2x8x1xf32> to vector<2x8x8xf32>
    %29 = arith.subf %25, %28 : vector<2x8x8xf32>
    %30 = math.exp %29 : vector<2x8x8xf32>
    %cst_23 = arith.constant dense<0.000000e+00> : vector<2x8xf32>
    %31 = vector.multi_reduction <add>, %30, %cst_23 [2] : vector<2x8x8xf32> to vector<2x8xf32>
    %32 = vector.shape_cast %31 : vector<2x8xf32> to vector<2x8x1xf32>
    %33 = tpu.reciprocal %32 {approx = true} : vector<2x8x1xf32> -> vector<2x8x1xf32>
    %34 = vector.broadcast %33 : vector<2x8x1xf32> to vector<2x8x8xf32>
    %35 = arith.mulf %30, %34 : vector<2x8x8xf32>
    %36 = vector.extract_strided_slice %20 {offsets = [0, 0, 0], sizes = [2, 8, 8], strides = [1, 1, 1]} : vector<2x8x16xf32> to vector<2x8x8xf32>
    "tpu.trace_start"() <{level = 10 : i32, message = "bqk,bkc->bqc"}> : () -> ()
    %cst_24 = arith.constant dense<0.000000e+00> : vector<2x8x8xf32>
    %37 = tpu.matmul %35, %36, %cst_24 {dimension_numbers = #tpu.dot_dimension_numbers<[2], [1], [1], [2], [0, 0, 0, 1, 1, 2], [0], [0]>} : vector<2x8x8xf32>, vector<2x8x8xf32>, vector<2x8x8xf32> -> vector<2x8x8xf32>
    "tpu.trace_stop"() : () -> ()
    %38 = vector.extract_strided_slice %16 {offsets = [0, 0, 8], sizes = [2, 8, 8], strides = [1, 1, 1]} : vector<2x8x16xf32> to vector<2x8x8xf32>
    %39 = vector.extract_strided_slice %18 {offsets = [0, 0, 8], sizes = [2, 8, 8], strides = [1, 1, 1]} : vector<2x8x16xf32> to vector<2x8x8xf32>
    "tpu.trace_start"() <{level = 10 : i32, message = "bqc,bkc->bqk"}> : () -> ()
    %cst_25 = arith.constant dense<0.000000e+00> : vector<2x8x8xf32>
    %40 = tpu.matmul %38, %39, %cst_25 {dimension_numbers = #tpu.dot_dimension_numbers<[2], [2], [1], [1], [0, 0, 0, 1, 1, 1], [0], [0]>} : vector<2x8x8xf32>, vector<2x8x8xf32>, vector<2x8x8xf32> -> vector<2x8x8xf32>
    %cst_26 = arith.constant -1.000000e+09 : f32
    "tpu.trace_stop"() : () -> ()
    %41 = vector.broadcast %cst_26 : f32 to vector<2x8x8xf32>
    %42 = arith.select %9, %41, %40 : vector<2x8x8xi1>, vector<2x8x8xf32>
    %cst_27 = arith.constant dense<0xFF800000> : vector<2x8xf32>
    %43 = vector.multi_reduction <maximumf>, %42, %cst_27 [2] : vector<2x8x8xf32> to vector<2x8xf32>
    %44 = vector.shape_cast %43 : vector<2x8xf32> to vector<2x8x1xf32>
    %45 = vector.broadcast %44 : vector<2x8x1xf32> to vector<2x8x8xf32>
    %46 = arith.subf %42, %45 : vector<2x8x8xf32>
    %47 = math.exp %46 : vector<2x8x8xf32>
    %cst_28 = arith.constant dense<0.000000e+00> : vector<2x8xf32>
    %48 = vector.multi_reduction <add>, %47, %cst_28 [2] : vector<2x8x8xf32> to vector<2x8xf32>
    %49 = vector.shape_cast %48 : vector<2x8xf32> to vector<2x8x1xf32>
    %50 = tpu.reciprocal %49 {approx = true} : vector<2x8x1xf32> -> vector<2x8x1xf32>
    %51 = vector.broadcast %50 : vector<2x8x1xf32> to vector<2x8x8xf32>
    %52 = arith.mulf %47, %51 : vector<2x8x8xf32>
    %53 = vector.extract_strided_slice %20 {offsets = [0, 0, 8], sizes = [2, 8, 8], strides = [1, 1, 1]} : vector<2x8x16xf32> to vector<2x8x8xf32>
    "tpu.trace_start"() <{level = 10 : i32, message = "bqk,bkc->bqc"}> : () -> ()
    %cst_29 = arith.constant dense<0.000000e+00> : vector<2x8x8xf32>
    %54 = tpu.matmul %52, %53, %cst_29 {dimension_numbers = #tpu.dot_dimension_numbers<[2], [1], [1], [2], [0, 0, 0, 1, 1, 2], [0], [0]>} : vector<2x8x8xf32>, vector<2x8x8xf32>, vector<2x8x8xf32> -> vector<2x8x8xf32>
    "tpu.trace_stop"() : () -> ()
    %55 = tpu.concatenate %37, %54 in 2 : vector<2x8x8xf32>, vector<2x8x8xf32> -> vector<2x8x16xf32>
    %56 = vector.shape_cast %55 : vector<2x8x16xf32> to vector<16x16xf32>
    %57 = arith.truncf %56 : vector<16x16xf32> to vector<16x16xbf16>
    %cst_30 = arith.constant dense<0.000000e+00> : vector<16x128xf32>
    %58 = tpu.matmul %57, %13, %cst_30 {dimension_numbers = #tpu.dot_dimension_numbers<[1], [0], [0], [1], [0, 0, 1, 1], [], []>} : vector<16x16xbf16>, vector<16x128xbf16>, vector<16x128xf32> -> vector<16x128xf32>
    %59 = arith.addf %6, %58 : vector<16x128xf32>
    %60 = vector.shape_cast %59 : vector<16x128xf32> to vector<2x8x128xf32>
    %c0_31 = arith.constant 0 : index
    %c0_32 = arith.constant 0 : index
    %c0_33 = arith.constant 0 : index
    %61 = vector.load %arg9[%c0_31, %c0_32, %c0_33] : memref<2x8x128xf32, #tpu.memory_space<vmem>>, vector<2x8x128xf32>
    tpu.vector_store %arg9[%c0_31, %c0_32, %c0_33], %60 {strides = array<i32>} : memref<2x8x128xf32, #tpu.memory_space<vmem>>, vector<2x8x128xf32>,
    %cst_34 = arith.constant dense<0.000000e+00> : vector<128xf32>
    %62 = vector.multi_reduction <add>, %59, %cst_34 [0] : vector<16x128xf32> to vector<128xf32>
    %63 = vector.shape_cast %62 : vector<128xf32> to vector<1x128xf32>
    %64 = arith.mulf %59, %59 : vector<16x128xf32>
    %cst_35 = arith.constant dense<0.000000e+00> : vector<128xf32>
    %65 = vector.multi_reduction <add>, %64, %cst_35 [0] : vector<16x128xf32> to vector<128xf32>
    %66 = vector.shape_cast %65 : vector<128xf32> to vector<1x128xf32>
    %67 = tpu.concatenate %63, %66 in 0 : vector<1x128xf32>, vector<1x128xf32> -> vector<2x128xf32>
    %c0_36 = arith.constant 0 : index
    %c0_37 = arith.constant 0 : index
    %c0_38 = arith.constant 0 : index
    %68 = vector.load %arg10[%c0_36, %c0_37, %c0_38] : memref<1x2x128xf32, #tpu.memory_space<vmem>>, vector<1x2x128xf32>
    %69 = vector.shape_cast %68 : vector<1x2x128xf32> to vector<2x128xf32>
    %70 = vector.shape_cast %67 : vector<2x128xf32> to vector<1x2x128xf32>
    tpu.vector_store %arg10[%c0_36, %c0_37, %c0_38], %70 {strides = array<i32>} : memref<1x2x128xf32, #tpu.memory_space<vmem>>, vector<1x2x128xf32>,
    return
  }
  func.func @transform_0(%arg0: i32) -> (i32, i32, i32) {
    %c0_i32 = arith.constant 0 : i32
    %c0_i32_0 = arith.constant 0 : i32
    %c0_i32_1 = arith.constant 0 : i32
    return %arg0, %c0_i32, %c0_i32_0 : i32, i32, i32
  }
  func.func @transform_1(%arg0: i32) -> (i32, i32, i32) {
    %c0_i32 = arith.constant 0 : i32
    %c0_i32_0 = arith.constant 0 : i32
    %c0_i32_1 = arith.constant 0 : i32
    return %arg0, %c0_i32, %c0_i32_0 : i32, i32, i32
  }
  func.func @transform_2(%arg0: i32) -> (i32, i32) {
    %c0_i32 = arith.constant 0 : i32
    %c0_i32_0 = arith.constant 0 : i32
    %c0_i32_1 = arith.constant 0 : i32
    return %c0_i32, %c0_i32_0 : i32, i32
  }
  func.func @transform_3(%arg0: i32) -> (i32, i32) {
    %c0_i32 = arith.constant 0 : i32
    %c0_i32_0 = arith.constant 0 : i32
    %c0_i32_1 = arith.constant 0 : i32
    return %c0_i32, %c0_i32_0 : i32, i32
  }
  func.func @transform_4(%arg0: i32) -> (i32, i32) {
    %c0_i32 = arith.constant 0 : i32
    %c0_i32_0 = arith.constant 0 : i32
    %c0_i32_1 = arith.constant 0 : i32
    return %c0_i32, %c0_i32_0 : i32, i32
  }
  func.func @transform_5(%arg0: i32) -> (i32, i32) {
    %c0_i32 = arith.constant 0 : i32
    %c0_i32_0 = arith.constant 0 : i32
    %c0_i32_1 = arith.constant 0 : i32
    return %c0_i32, %c0_i32_0 : i32, i32
  }
  func.func @transform_6(%arg0: i32) -> (i32, i32) {
    %c0_i32 = arith.constant 0 : i32
    %c0_i32_0 = arith.constant 0 : i32
    %c0_i32_1 = arith.constant 0 : i32
    return %c0_i32, %c0_i32_0 : i32, i32
  }
  func.func @transform_7(%arg0: i32) -> (i32, i32) {
    %c0_i32 = arith.constant 0 : i32
    %c0_i32_0 = arith.constant 0 : i32
    %c0_i32_1 = arith.constant 0 : i32
    return %c0_i32, %c0_i32_0 : i32, i32
  }
  func.func @transform_8(%arg0: i32) -> (i32, i32, i32) {
    %c0_i32 = arith.constant 0 : i32
    %c0_i32_0 = arith.constant 0 : i32
    %c0_i32_1 = arith.constant 0 : i32
    return %arg0, %c0_i32, %c0_i32_0 : i32, i32, i32
  }
  func.func @transform_9(%arg0: i32) -> (i32, i32, i32) {
    %c0_i32 = arith.constant 0 : i32
    %c0_i32_0 = arith.constant 0 : i32
    %c0_i32_1 = arith.constant 0 : i32
    return %arg0, %c0_i32, %c0_i32_0 : i32, i32, i32
  }
}

module attributes {stable_mosaic.version = 11 : i64} {
  func.func @_bn_ffn_kernel(%arg0: i32, %arg1: memref<32x128xf32, #tpu.memory_space<vmem>>, %arg2: memref<1x128xf32, #tpu.memory_space<vmem>>, %arg3: memref<1x128xf32, #tpu.memory_space<vmem>>, %arg4: memref<128x128xbf16, #tpu.memory_space<vmem>>, %arg5: memref<1x128xf32, #tpu.memory_space<vmem>>, %arg6: memref<128x128xbf16, #tpu.memory_space<vmem>>, %arg7: memref<1x128xf32, #tpu.memory_space<vmem>>, %arg8: memref<32x128xf32, #tpu.memory_space<vmem>>, %arg9: memref<1x2x128xf32, #tpu.memory_space<vmem>>) attributes {dimension_semantics = [#tpu.dimension_semantics<parallel>], iteration_bounds = array<i64: 1>, scalar_prefetch = 0 : i64, scratch_operands = 0 : i64, tpu.core_type = #tpu.core_type<tc>, window_params = [{transform_indices = @transform_0, window_bounds = array<i64: 32, 128>}, {pipeline_mode = #tpu.pipeline_mode<synchronous>, transform_indices = @transform_1, window_bounds = array<i64: 1, 128>}, {pipeline_mode = #tpu.pipeline_mode<synchronous>, transform_indices = @transform_2, window_bounds = array<i64: 1, 128>}, {pipeline_mode = #tpu.pipeline_mode<synchronous>, transform_indices = @transform_3, window_bounds = array<i64: 128, 128>}, {pipeline_mode = #tpu.pipeline_mode<synchronous>, transform_indices = @transform_4, window_bounds = array<i64: 1, 128>}, {pipeline_mode = #tpu.pipeline_mode<synchronous>, transform_indices = @transform_5, window_bounds = array<i64: 128, 128>}, {pipeline_mode = #tpu.pipeline_mode<synchronous>, transform_indices = @transform_6, window_bounds = array<i64: 1, 128>}, {transform_indices = @transform_7, window_bounds = array<i64: 32, 128>}, {transform_indices = @transform_8, window_bounds = array<i64: 1, 2, 128>}]} {
    %c0 = arith.constant 0 : index
    %c0_0 = arith.constant 0 : index
    %0 = vector.load %arg1[%c0, %c0_0] : memref<32x128xf32, #tpu.memory_space<vmem>>, vector<32x128xf32>
    %c0_1 = arith.constant 0 : index
    %c0_2 = arith.constant 0 : index
    %1 = vector.load %arg2[%c0_1, %c0_2] : memref<1x128xf32, #tpu.memory_space<vmem>>, vector<1x128xf32>
    %2 = vector.broadcast %1 : vector<1x128xf32> to vector<32x128xf32>
    %3 = arith.mulf %0, %2 : vector<32x128xf32>
    %c0_3 = arith.constant 0 : index
    %c0_4 = arith.constant 0 : index
    %4 = vector.load %arg3[%c0_3, %c0_4] : memref<1x128xf32, #tpu.memory_space<vmem>>, vector<1x128xf32>
    %5 = vector.broadcast %4 : vector<1x128xf32> to vector<32x128xf32>
    %6 = arith.addf %3, %5 : vector<32x128xf32>
    %7 = arith.truncf %6 : vector<32x128xf32> to vector<32x128xbf16>
    %c0_5 = arith.constant 0 : index
    %c0_6 = arith.constant 0 : index
    %8 = vector.load %arg4[%c0_5, %c0_6] : memref<128x128xbf16, #tpu.memory_space<vmem>>, vector<128x128xbf16>
    %cst = arith.constant dense<0.000000e+00> : vector<32x128xf32>
    %9 = tpu.matmul %7, %8, %cst {dimension_numbers = #tpu.dot_dimension_numbers<[1], [0], [0], [1], [0, 0, 1, 1], [], []>} : vector<32x128xbf16>, vector<128x128xbf16>, vector<32x128xf32> -> vector<32x128xf32>
    %c0_7 = arith.constant 0 : index
    %c0_8 = arith.constant 0 : index
    %10 = vector.load %arg5[%c0_7, %c0_8] : memref<1x128xf32, #tpu.memory_space<vmem>>, vector<1x128xf32>
    %11 = vector.broadcast %10 : vector<1x128xf32> to vector<32x128xf32>
    %12 = arith.addf %9, %11 : vector<32x128xf32>
    %cst_9 = arith.constant 0.000000e+00 : f32
    %13 = vector.broadcast %cst_9 : f32 to vector<32x128xf32>
    %14 = arith.maximumf %12, %13 : vector<32x128xf32>
    %15 = arith.truncf %14 : vector<32x128xf32> to vector<32x128xbf16>
    %c0_10 = arith.constant 0 : index
    %c0_11 = arith.constant 0 : index
    %16 = vector.load %arg6[%c0_10, %c0_11] : memref<128x128xbf16, #tpu.memory_space<vmem>>, vector<128x128xbf16>
    %cst_12 = arith.constant dense<0.000000e+00> : vector<32x128xf32>
    %17 = tpu.matmul %15, %16, %cst_12 {dimension_numbers = #tpu.dot_dimension_numbers<[1], [0], [0], [1], [0, 0, 1, 1], [], []>} : vector<32x128xbf16>, vector<128x128xbf16>, vector<32x128xf32> -> vector<32x128xf32>
    %18 = arith.addf %6, %17 : vector<32x128xf32>
    %c0_13 = arith.constant 0 : index
    %c0_14 = arith.constant 0 : index
    %19 = vector.load %arg7[%c0_13, %c0_14] : memref<1x128xf32, #tpu.memory_space<vmem>>, vector<1x128xf32>
    %20 = vector.broadcast %19 : vector<1x128xf32> to vector<32x128xf32>
    %21 = arith.addf %18, %20 : vector<32x128xf32>
    %c0_15 = arith.constant 0 : index
    %c0_16 = arith.constant 0 : index
    %22 = vector.load %arg8[%c0_15, %c0_16] : memref<32x128xf32, #tpu.memory_space<vmem>>, vector<32x128xf32>
    tpu.vector_store %arg8[%c0_15, %c0_16], %21 {strides = array<i32>} : memref<32x128xf32, #tpu.memory_space<vmem>>, vector<32x128xf32>,
    %cst_17 = arith.constant dense<0.000000e+00> : vector<128xf32>
    %23 = vector.multi_reduction <add>, %21, %cst_17 [0] : vector<32x128xf32> to vector<128xf32>
    %24 = vector.shape_cast %23 : vector<128xf32> to vector<1x128xf32>
    %25 = arith.mulf %21, %21 : vector<32x128xf32>
    %cst_18 = arith.constant dense<0.000000e+00> : vector<128xf32>
    %26 = vector.multi_reduction <add>, %25, %cst_18 [0] : vector<32x128xf32> to vector<128xf32>
    %27 = vector.shape_cast %26 : vector<128xf32> to vector<1x128xf32>
    %28 = tpu.concatenate %24, %27 in 0 : vector<1x128xf32>, vector<1x128xf32> -> vector<2x128xf32>
    %c0_19 = arith.constant 0 : index
    %c0_20 = arith.constant 0 : index
    %c0_21 = arith.constant 0 : index
    %29 = vector.load %arg9[%c0_19, %c0_20, %c0_21] : memref<1x2x128xf32, #tpu.memory_space<vmem>>, vector<1x2x128xf32>
    %30 = vector.shape_cast %29 : vector<1x2x128xf32> to vector<2x128xf32>
    %31 = vector.shape_cast %28 : vector<2x128xf32> to vector<1x2x128xf32>
    tpu.vector_store %arg9[%c0_19, %c0_20, %c0_21], %31 {strides = array<i32>} : memref<1x2x128xf32, #tpu.memory_space<vmem>>, vector<1x2x128xf32>,
    return
  }
  func.func @transform_0(%arg0: i32) -> (i32, i32) {
    %c0_i32 = arith.constant 0 : i32
    %c0_i32_0 = arith.constant 0 : i32
    return %arg0, %c0_i32 : i32, i32
  }
  func.func @transform_1(%arg0: i32) -> (i32, i32) {
    %c0_i32 = arith.constant 0 : i32
    %c0_i32_0 = arith.constant 0 : i32
    %c0_i32_1 = arith.constant 0 : i32
    return %c0_i32, %c0_i32_0 : i32, i32
  }
  func.func @transform_2(%arg0: i32) -> (i32, i32) {
    %c0_i32 = arith.constant 0 : i32
    %c0_i32_0 = arith.constant 0 : i32
    %c0_i32_1 = arith.constant 0 : i32
    return %c0_i32, %c0_i32_0 : i32, i32
  }
  func.func @transform_3(%arg0: i32) -> (i32, i32) {
    %c0_i32 = arith.constant 0 : i32
    %c0_i32_0 = arith.constant 0 : i32
    %c0_i32_1 = arith.constant 0 : i32
    return %c0_i32, %c0_i32_0 : i32, i32
  }
  func.func @transform_4(%arg0: i32) -> (i32, i32) {
    %c0_i32 = arith.constant 0 : i32
    %c0_i32_0 = arith.constant 0 : i32
    %c0_i32_1 = arith.constant 0 : i32
    return %c0_i32, %c0_i32_0 : i32, i32
  }
  func.func @transform_5(%arg0: i32) -> (i32, i32) {
    %c0_i32 = arith.constant 0 : i32
    %c0_i32_0 = arith.constant 0 : i32
    %c0_i32_1 = arith.constant 0 : i32
    return %c0_i32, %c0_i32_0 : i32, i32
  }
  func.func @transform_6(%arg0: i32) -> (i32, i32) {
    %c0_i32 = arith.constant 0 : i32
    %c0_i32_0 = arith.constant 0 : i32
    %c0_i32_1 = arith.constant 0 : i32
    return %c0_i32, %c0_i32_0 : i32, i32
  }
  func.func @transform_7(%arg0: i32) -> (i32, i32) {
    %c0_i32 = arith.constant 0 : i32
    %c0_i32_0 = arith.constant 0 : i32
    return %arg0, %c0_i32 : i32, i32
  }
  func.func @transform_8(%arg0: i32) -> (i32, i32, i32) {
    %c0_i32 = arith.constant 0 : i32
    %c0_i32_0 = arith.constant 0 : i32
    %c0_i32_1 = arith.constant 0 : i32
    return %arg0, %c0_i32, %c0_i32_0 : i32, i32, i32
  }
}

module attributes {stable_mosaic.version = 11 : i64} {
  func.func @_bn_apply_kernel(%arg0: i32, %arg1: memref<32x128xf32, #tpu.memory_space<vmem>>, %arg2: memref<1x128xf32, #tpu.memory_space<vmem>>, %arg3: memref<1x128xf32, #tpu.memory_space<vmem>>, %arg4: memref<32x128xf32, #tpu.memory_space<vmem>>) attributes {dimension_semantics = [#tpu.dimension_semantics<parallel>], iteration_bounds = array<i64: 1>, scalar_prefetch = 0 : i64, scratch_operands = 0 : i64, tpu.core_type = #tpu.core_type<tc>, window_params = [{transform_indices = @transform_0, window_bounds = array<i64: 32, 128>}, {pipeline_mode = #tpu.pipeline_mode<synchronous>, transform_indices = @transform_1, window_bounds = array<i64: 1, 128>}, {pipeline_mode = #tpu.pipeline_mode<synchronous>, transform_indices = @transform_2, window_bounds = array<i64: 1, 128>}, {transform_indices = @transform_3, window_bounds = array<i64: 32, 128>}]} {
    %c0 = arith.constant 0 : index
    %c0_0 = arith.constant 0 : index
    %0 = vector.load %arg1[%c0, %c0_0] : memref<32x128xf32, #tpu.memory_space<vmem>>, vector<32x128xf32>
    %c0_1 = arith.constant 0 : index
    %c0_2 = arith.constant 0 : index
    %1 = vector.load %arg2[%c0_1, %c0_2] : memref<1x128xf32, #tpu.memory_space<vmem>>, vector<1x128xf32>
    %2 = vector.broadcast %1 : vector<1x128xf32> to vector<32x128xf32>
    %3 = arith.mulf %0, %2 : vector<32x128xf32>
    %c0_3 = arith.constant 0 : index
    %c0_4 = arith.constant 0 : index
    %4 = vector.load %arg3[%c0_3, %c0_4] : memref<1x128xf32, #tpu.memory_space<vmem>>, vector<1x128xf32>
    %5 = vector.broadcast %4 : vector<1x128xf32> to vector<32x128xf32>
    %6 = arith.addf %3, %5 : vector<32x128xf32>
    %c0_5 = arith.constant 0 : index
    %c0_6 = arith.constant 0 : index
    %7 = vector.load %arg4[%c0_5, %c0_6] : memref<32x128xf32, #tpu.memory_space<vmem>>, vector<32x128xf32>
    tpu.vector_store %arg4[%c0_5, %c0_6], %6 {strides = array<i32>} : memref<32x128xf32, #tpu.memory_space<vmem>>, vector<32x128xf32>,
    return
  }
  func.func @transform_0(%arg0: i32) -> (i32, i32) {
    %c0_i32 = arith.constant 0 : i32
    %c0_i32_0 = arith.constant 0 : i32
    return %arg0, %c0_i32 : i32, i32
  }
  func.func @transform_1(%arg0: i32) -> (i32, i32) {
    %c0_i32 = arith.constant 0 : i32
    %c0_i32_0 = arith.constant 0 : i32
    %c0_i32_1 = arith.constant 0 : i32
    return %c0_i32, %c0_i32_0 : i32, i32
  }
  func.func @transform_2(%arg0: i32) -> (i32, i32) {
    %c0_i32 = arith.constant 0 : i32
    %c0_i32_0 = arith.constant 0 : i32
    %c0_i32_1 = arith.constant 0 : i32
    return %c0_i32, %c0_i32_0 : i32, i32
  }
  func.func @transform_3(%arg0: i32) -> (i32, i32) {
    %c0_i32 = arith.constant 0 : i32
    %c0_i32_0 = arith.constant 0 : i32
    return %arg0, %c0_i32 : i32, i32
  }
}

module attributes {stable_mosaic.version = 11 : i64} {
  func.func @_bn_mha_kernel(%arg0: i32, %arg1: memref<2x8x128xf32, #tpu.memory_space<vmem>>, %arg2: memref<1x128xf32, #tpu.memory_space<vmem>>, %arg3: memref<1x128xf32, #tpu.memory_space<vmem>>, %arg4: memref<128x16xbf16, #tpu.memory_space<vmem>>, %arg5: memref<128x16xbf16, #tpu.memory_space<vmem>>, %arg6: memref<128x16xbf16, #tpu.memory_space<vmem>>, %arg7: memref<16x128xbf16, #tpu.memory_space<vmem>>, %arg8: memref<2x8x128xf32, #tpu.memory_space<vmem>>, %arg9: memref<1x2x128xf32, #tpu.memory_space<vmem>>) attributes {dimension_semantics = [#tpu.dimension_semantics<parallel>], iteration_bounds = array<i64: 2>, scalar_prefetch = 0 : i64, scratch_operands = 0 : i64, tpu.core_type = #tpu.core_type<tc>, window_params = [{transform_indices = @transform_0, window_bounds = array<i64: 2, 8, 128>}, {pipeline_mode = #tpu.pipeline_mode<synchronous>, transform_indices = @transform_1, window_bounds = array<i64: 1, 128>}, {pipeline_mode = #tpu.pipeline_mode<synchronous>, transform_indices = @transform_2, window_bounds = array<i64: 1, 128>}, {pipeline_mode = #tpu.pipeline_mode<synchronous>, transform_indices = @transform_3, window_bounds = array<i64: 128, 16>}, {pipeline_mode = #tpu.pipeline_mode<synchronous>, transform_indices = @transform_4, window_bounds = array<i64: 128, 16>}, {pipeline_mode = #tpu.pipeline_mode<synchronous>, transform_indices = @transform_5, window_bounds = array<i64: 128, 16>}, {pipeline_mode = #tpu.pipeline_mode<synchronous>, transform_indices = @transform_6, window_bounds = array<i64: 16, 128>}, {transform_indices = @transform_7, window_bounds = array<i64: 2, 8, 128>}, {transform_indices = @transform_8, window_bounds = array<i64: 1, 2, 128>}]} {
    %c0 = arith.constant 0 : index
    %c0_0 = arith.constant 0 : index
    %c0_1 = arith.constant 0 : index
    %0 = vector.load %arg1[%c0, %c0_0, %c0_1] : memref<2x8x128xf32, #tpu.memory_space<vmem>>, vector<2x8x128xf32>
    %1 = vector.shape_cast %0 : vector<2x8x128xf32> to vector<16x128xf32>
    %c0_2 = arith.constant 0 : index
    %c0_3 = arith.constant 0 : index
    %2 = vector.load %arg2[%c0_2, %c0_3] : memref<1x128xf32, #tpu.memory_space<vmem>>, vector<1x128xf32>
    %3 = vector.broadcast %2 : vector<1x128xf32> to vector<16x128xf32>
    %4 = arith.mulf %1, %3 : vector<16x128xf32>
    %c0_4 = arith.constant 0 : index
    %c0_5 = arith.constant 0 : index
    %5 = vector.load %arg3[%c0_4, %c0_5] : memref<1x128xf32, #tpu.memory_space<vmem>>, vector<1x128xf32>
    %6 = vector.broadcast %5 : vector<1x128xf32> to vector<16x128xf32>
    %7 = arith.addf %4, %6 : vector<16x128xf32>
    %c0_6 = arith.constant 0 : index
    %c0_7 = arith.constant 0 : index
    %8 = vector.load %arg4[%c0_6, %c0_7] : memref<128x16xbf16, #tpu.memory_space<vmem>>, vector<128x16xbf16>
    %c0_8 = arith.constant 0 : index
    %c0_9 = arith.constant 0 : index
    %9 = vector.load %arg5[%c0_8, %c0_9] : memref<128x16xbf16, #tpu.memory_space<vmem>>, vector<128x16xbf16>
    %c0_10 = arith.constant 0 : index
    %c0_11 = arith.constant 0 : index
    %10 = vector.load %arg6[%c0_10, %c0_11] : memref<128x16xbf16, #tpu.memory_space<vmem>>, vector<128x16xbf16>
    %c0_12 = arith.constant 0 : index
    %c0_13 = arith.constant 0 : index
    %11 = vector.load %arg7[%c0_12, %c0_13] : memref<16x128xbf16, #tpu.memory_space<vmem>>, vector<16x128xbf16>
    %12 = arith.truncf %7 : vector<16x128xf32> to vector<16x128xbf16>
    %cst = arith.constant dense<0.000000e+00> : vector<16x16xf32>
    %13 = tpu.matmul %12, %8, %cst {dimension_numbers = #tpu.dot_dimension_numbers<[1], [0], [0], [1], [0, 0, 1, 1], [], []>} : vector<16x128xbf16>, vector<128x16xbf16>, vector<16x16xf32> -> vector<16x16xf32>
    %14 = vector.shape_cast %13 : vector<16x16xf32> to vector<2x8x16xf32>
    %cst_14 = arith.constant dense<0.000000e+00> : vector<16x16xf32>
    %15 = tpu.matmul %12, %9, %cst_14 {dimension_numbers = #tpu.dot_dimension_numbers<[1], [0], [0], [1], [0, 0, 1, 1], [], []>} : vector<16x128xbf16>, vector<128x16xbf16>, vector<16x16xf32> -> vector<16x16xf32>
    %16 = vector.shape_cast %15 : vector<16x16xf32> to vector<2x8x16xf32>
    %cst_15 = arith.constant dense<0.000000e+00> : vector<16x16xf32>
    %17 = tpu.matmul %12, %10, %cst_15 {dimension_numbers = #tpu.dot_dimension_numbers<[1], [0], [0], [1], [0, 0, 1, 1], [], []>} : vector<16x128xbf16>, vector<128x16xbf16>, vector<16x16xf32> -> vector<16x16xf32>
    %18 = vector.shape_cast %17 : vector<16x16xf32> to vector<2x8x16xf32>
    %19 = vector.extract_strided_slice %14 {offsets = [0, 0, 0], sizes = [2, 8, 8], strides = [1, 1, 1]} : vector<2x8x16xf32> to vector<2x8x8xf32>
    %20 = vector.extract_strided_slice %16 {offsets = [0, 0, 0], sizes = [2, 8, 8], strides = [1, 1, 1]} : vector<2x8x16xf32> to vector<2x8x8xf32>
    "tpu.trace_start"() <{level = 10 : i32, message = "bqc,bkc->bqk"}> : () -> ()
    %cst_16 = arith.constant dense<0.000000e+00> : vector<2x8x8xf32>
    %21 = tpu.matmul %19, %20, %cst_16 {dimension_numbers = #tpu.dot_dimension_numbers<[2], [2], [1], [1], [0, 0, 0, 1, 1, 1], [0], [0]>} : vector<2x8x8xf32>, vector<2x8x8xf32>, vector<2x8x8xf32> -> vector<2x8x8xf32>
    "tpu.trace_stop"() : () -> ()
    %cst_17 = arith.constant dense<0xFF800000> : vector<2x8xf32>
    %22 = vector.multi_reduction <maximumf>, %21, %cst_17 [2] : vector<2x8x8xf32> to vector<2x8xf32>
    %23 = vector.shape_cast %22 : vector<2x8xf32> to vector<2x8x1xf32>
    %24 = vector.broadcast %23 : vector<2x8x1xf32> to vector<2x8x8xf32>
    %25 = arith.subf %21, %24 : vector<2x8x8xf32>
    %26 = math.exp %25 : vector<2x8x8xf32>
    %cst_18 = arith.constant dense<0.000000e+00> : vector<2x8xf32>
    %27 = vector.multi_reduction <add>, %26, %cst_18 [2] : vector<2x8x8xf32> to vector<2x8xf32>
    %28 = vector.shape_cast %27 : vector<2x8xf32> to vector<2x8x1xf32>
    %29 = tpu.reciprocal %28 {approx = true} : vector<2x8x1xf32> -> vector<2x8x1xf32>
    %30 = vector.broadcast %29 : vector<2x8x1xf32> to vector<2x8x8xf32>
    %31 = arith.mulf %26, %30 : vector<2x8x8xf32>
    %32 = vector.extract_strided_slice %18 {offsets = [0, 0, 0], sizes = [2, 8, 8], strides = [1, 1, 1]} : vector<2x8x16xf32> to vector<2x8x8xf32>
    "tpu.trace_start"() <{level = 10 : i32, message = "bqk,bkc->bqc"}> : () -> ()
    %cst_19 = arith.constant dense<0.000000e+00> : vector<2x8x8xf32>
    %33 = tpu.matmul %31, %32, %cst_19 {dimension_numbers = #tpu.dot_dimension_numbers<[2], [1], [1], [2], [0, 0, 0, 1, 1, 2], [0], [0]>} : vector<2x8x8xf32>, vector<2x8x8xf32>, vector<2x8x8xf32> -> vector<2x8x8xf32>
    "tpu.trace_stop"() : () -> ()
    %34 = vector.extract_strided_slice %14 {offsets = [0, 0, 8], sizes = [2, 8, 8], strides = [1, 1, 1]} : vector<2x8x16xf32> to vector<2x8x8xf32>
    %35 = vector.extract_strided_slice %16 {offsets = [0, 0, 8], sizes = [2, 8, 8], strides = [1, 1, 1]} : vector<2x8x16xf32> to vector<2x8x8xf32>
    "tpu.trace_start"() <{level = 10 : i32, message = "bqc,bkc->bqk"}> : () -> ()
    %cst_20 = arith.constant dense<0.000000e+00> : vector<2x8x8xf32>
    %36 = tpu.matmul %34, %35, %cst_20 {dimension_numbers = #tpu.dot_dimension_numbers<[2], [2], [1], [1], [0, 0, 0, 1, 1, 1], [0], [0]>} : vector<2x8x8xf32>, vector<2x8x8xf32>, vector<2x8x8xf32> -> vector<2x8x8xf32>
    "tpu.trace_stop"() : () -> ()
    %cst_21 = arith.constant dense<0xFF800000> : vector<2x8xf32>
    %37 = vector.multi_reduction <maximumf>, %36, %cst_21 [2] : vector<2x8x8xf32> to vector<2x8xf32>
    %38 = vector.shape_cast %37 : vector<2x8xf32> to vector<2x8x1xf32>
    %39 = vector.broadcast %38 : vector<2x8x1xf32> to vector<2x8x8xf32>
    %40 = arith.subf %36, %39 : vector<2x8x8xf32>
    %41 = math.exp %40 : vector<2x8x8xf32>
    %cst_22 = arith.constant dense<0.000000e+00> : vector<2x8xf32>
    %42 = vector.multi_reduction <add>, %41, %cst_22 [2] : vector<2x8x8xf32> to vector<2x8xf32>
    %43 = vector.shape_cast %42 : vector<2x8xf32> to vector<2x8x1xf32>
    %44 = tpu.reciprocal %43 {approx = true} : vector<2x8x1xf32> -> vector<2x8x1xf32>
    %45 = vector.broadcast %44 : vector<2x8x1xf32> to vector<2x8x8xf32>
    %46 = arith.mulf %41, %45 : vector<2x8x8xf32>
    %47 = vector.extract_strided_slice %18 {offsets = [0, 0, 8], sizes = [2, 8, 8], strides = [1, 1, 1]} : vector<2x8x16xf32> to vector<2x8x8xf32>
    "tpu.trace_start"() <{level = 10 : i32, message = "bqk,bkc->bqc"}> : () -> ()
    %cst_23 = arith.constant dense<0.000000e+00> : vector<2x8x8xf32>
    %48 = tpu.matmul %46, %47, %cst_23 {dimension_numbers = #tpu.dot_dimension_numbers<[2], [1], [1], [2], [0, 0, 0, 1, 1, 2], [0], [0]>} : vector<2x8x8xf32>, vector<2x8x8xf32>, vector<2x8x8xf32> -> vector<2x8x8xf32>
    "tpu.trace_stop"() : () -> ()
    %49 = tpu.concatenate %33, %48 in 2 : vector<2x8x8xf32>, vector<2x8x8xf32> -> vector<2x8x16xf32>
    %50 = vector.shape_cast %49 : vector<2x8x16xf32> to vector<16x16xf32>
    %51 = arith.truncf %50 : vector<16x16xf32> to vector<16x16xbf16>
    %cst_24 = arith.constant dense<0.000000e+00> : vector<16x128xf32>
    %52 = tpu.matmul %51, %11, %cst_24 {dimension_numbers = #tpu.dot_dimension_numbers<[1], [0], [0], [1], [0, 0, 1, 1], [], []>} : vector<16x16xbf16>, vector<16x128xbf16>, vector<16x128xf32> -> vector<16x128xf32>
    %53 = arith.addf %7, %52 : vector<16x128xf32>
    %54 = vector.shape_cast %53 : vector<16x128xf32> to vector<2x8x128xf32>
    %c0_25 = arith.constant 0 : index
    %c0_26 = arith.constant 0 : index
    %c0_27 = arith.constant 0 : index
    %55 = vector.load %arg8[%c0_25, %c0_26, %c0_27] : memref<2x8x128xf32, #tpu.memory_space<vmem>>, vector<2x8x128xf32>
    tpu.vector_store %arg8[%c0_25, %c0_26, %c0_27], %54 {strides = array<i32>} : memref<2x8x128xf32, #tpu.memory_space<vmem>>, vector<2x8x128xf32>,
    %cst_28 = arith.constant dense<0.000000e+00> : vector<128xf32>
    %56 = vector.multi_reduction <add>, %53, %cst_28 [0] : vector<16x128xf32> to vector<128xf32>
    %57 = vector.shape_cast %56 : vector<128xf32> to vector<1x128xf32>
    %58 = arith.mulf %53, %53 : vector<16x128xf32>
    %cst_29 = arith.constant dense<0.000000e+00> : vector<128xf32>
    %59 = vector.multi_reduction <add>, %58, %cst_29 [0] : vector<16x128xf32> to vector<128xf32>
    %60 = vector.shape_cast %59 : vector<128xf32> to vector<1x128xf32>
    %61 = tpu.concatenate %57, %60 in 0 : vector<1x128xf32>, vector<1x128xf32> -> vector<2x128xf32>
    %c0_30 = arith.constant 0 : index
    %c0_31 = arith.constant 0 : index
    %c0_32 = arith.constant 0 : index
    %62 = vector.load %arg9[%c0_30, %c0_31, %c0_32] : memref<1x2x128xf32, #tpu.memory_space<vmem>>, vector<1x2x128xf32>
    %63 = vector.shape_cast %62 : vector<1x2x128xf32> to vector<2x128xf32>
    %64 = vector.shape_cast %61 : vector<2x128xf32> to vector<1x2x128xf32>
    tpu.vector_store %arg9[%c0_30, %c0_31, %c0_32], %64 {strides = array<i32>} : memref<1x2x128xf32, #tpu.memory_space<vmem>>, vector<1x2x128xf32>,
    return
  }
  func.func @transform_0(%arg0: i32) -> (i32, i32, i32) {
    %c0_i32 = arith.constant 0 : i32
    %c0_i32_0 = arith.constant 0 : i32
    %c0_i32_1 = arith.constant 0 : i32
    return %arg0, %c0_i32, %c0_i32_0 : i32, i32, i32
  }
  func.func @transform_1(%arg0: i32) -> (i32, i32) {
    %c0_i32 = arith.constant 0 : i32
    %c0_i32_0 = arith.constant 0 : i32
    %c0_i32_1 = arith.constant 0 : i32
    return %c0_i32, %c0_i32_0 : i32, i32
  }
  func.func @transform_2(%arg0: i32) -> (i32, i32) {
    %c0_i32 = arith.constant 0 : i32
    %c0_i32_0 = arith.constant 0 : i32
    %c0_i32_1 = arith.constant 0 : i32
    return %c0_i32, %c0_i32_0 : i32, i32
  }
  func.func @transform_3(%arg0: i32) -> (i32, i32) {
    %c0_i32 = arith.constant 0 : i32
    %c0_i32_0 = arith.constant 0 : i32
    %c0_i32_1 = arith.constant 0 : i32
    return %c0_i32, %c0_i32_0 : i32, i32
  }
  func.func @transform_4(%arg0: i32) -> (i32, i32) {
    %c0_i32 = arith.constant 0 : i32
    %c0_i32_0 = arith.constant 0 : i32
    %c0_i32_1 = arith.constant 0 : i32
    return %c0_i32, %c0_i32_0 : i32, i32
  }
  func.func @transform_5(%arg0: i32) -> (i32, i32) {
    %c0_i32 = arith.constant 0 : i32
    %c0_i32_0 = arith.constant 0 : i32
    %c0_i32_1 = arith.constant 0 : i32
    return %c0_i32, %c0_i32_0 : i32, i32
  }
  func.func @transform_6(%arg0: i32) -> (i32, i32) {
    %c0_i32 = arith.constant 0 : i32
    %c0_i32_0 = arith.constant 0 : i32
    %c0_i32_1 = arith.constant 0 : i32
    return %c0_i32, %c0_i32_0 : i32, i32
  }
  func.func @transform_7(%arg0: i32) -> (i32, i32, i32) {
    %c0_i32 = arith.constant 0 : i32
    %c0_i32_0 = arith.constant 0 : i32
    %c0_i32_1 = arith.constant 0 : i32
    return %arg0, %c0_i32, %c0_i32_0 : i32, i32, i32
  }
  func.func @transform_8(%arg0: i32) -> (i32, i32, i32) {
    %c0_i32 = arith.constant 0 : i32
    %c0_i32_0 = arith.constant 0 : i32
    %c0_i32_1 = arith.constant 0 : i32
    return %arg0, %c0_i32, %c0_i32_0 : i32, i32, i32
  }
}

</mosaic_0001>

<llo_original>
// kernel: encoder_forward.9
$region0: #{encoder_forward.9}
  #allocation0 [shape = 'u32[]', space=smem, size = 0x4, offset = 0x4, fixed_abs, tag = 'smem constant byte address 0x4 - core index']
  #allocation1 [shape = 'u32[144,128]{1,0:T(1,128)}', space=vmem, size = 0x12000, scoped, tag = 'internal scratch']
  %s0 = inlined_call_operand.vmem [shape: f32[32,128], index: 0, kind: input, shape index: {}]
  %s1 = inlined_call_operand.vmem [shape: f32[1,128], index: 1, kind: input, shape index: {}]
  %s2 = inlined_call_operand.vmem [shape: f32[1,128], index: 2, kind: input, shape index: {}]
  %s3 = inlined_call_operand.hbm [shape: f32[32,128], index: 3, kind: output, shape index: {}]
  %s4 = sld [smem:[#allocation0]]
  $region22: #{encoder_forward.9} parent=0
    _
  %s6 = ssub.s32 1, %s4
  %s7 = scalar_select 0, %s6, %s4
  $region1: #{encoder_forward.9} parent=0
    #allocation2 [shape = 'u8[16384]{0}', space=vmem, size = 0x4000, scoped, tag = 'output window, operand 0, single buffered']
    #allocation3 [shape = 's32[1]{0}', space=sflag, size = 0x4, scoped, tag = 'scoped memory for encoder_forward.9']
    %8 = vsyncpa [#allocation3], 0
    // Predicated region
    $region2: #{encoder_forward.9} parent=1 // pred_check
      _
    $region3: #{encoder_forward.9} parent=1 // pred_check_branch
      %10 = sbr.rel (0) target = $region5
    $region4: #{encoder_forward.9} parent=1 // pred_region
      _
    $region5: #{encoder_forward.9} parent=1 // pred_fallthru
      _
    // Predicated region
    $region6: #{encoder_forward.9} parent=1 // pred_check
      _
    $region7: #{encoder_forward.9} parent=1 // pred_check_branch
      %12 = sbr.rel (0) target = $region9
    $region8: #{encoder_forward.9} parent=1 // pred_region
      _
    $region9: #{encoder_forward.9} parent=1 // pred_fallthru
      _
    // Predicated region
    $region10: #{encoder_forward.9} parent=1 // pred_check
      _
    $region11: #{encoder_forward.9} parent=1 // pred_check_branch
      %14 = sbr.rel (0) target = $region13
    $region12: #{encoder_forward.9} parent=1 // pred_region
      _
    $region13: #{encoder_forward.9} parent=1 // pred_fallthru
      _
    %v15 = vld [vmem:[%s0] sm:$0xff]
    %v16 = vld [vmem:[%s0 + $0x8] sm:$0xff]
    %v17 = vld [vmem:[%s0 + $0x10] sm:$0xff]
    %v18 = vld [vmem:[%s0 + $0x18] sm:$0xff]
    %v19 = vld [vmem:[%s1] sm:$0x1]
    %v21 = vlaneseq
    %v22 = vshrl.u32 %v21, 7
    %v23 = vsub.s32 0, %v22
    %v24 = vrot.slane %v19, %v23
    %v26 = vmul.f32 %v15, %v24
    %v27 = vmul.f32 %v16, %v24
    %v28 = vmul.f32 %v17, %v24
    %v29 = vmul.f32 %v18, %v24
    %v30 = vld [vmem:[%s2] sm:$0x1]
    %v32 = vlaneseq
    %v33 = vshrl.u32 %v32, 7
    %v34 = vsub.s32 0, %v33
    %v35 = vrot.slane %v30, %v34
    %v37 = vadd.f32 %v26, %v35
    %v38 = vadd.f32 %v27, %v35
    %v39 = vadd.f32 %v28, %v35
    %v40 = vadd.f32 %v29, %v35
    %41 = vst [vmem:[#allocation2] sm:$0xff] %v37
    %42 = vst [vmem:[#allocation2 + $0x8] sm:$0xff] %v38
    %43 = vst [vmem:[#allocation2 + $0x10] sm:$0xff] %v39
    %44 = vst [vmem:[#allocation2 + $0x18] sm:$0xff] %v40
    // Predicated region
    $region14: #{encoder_forward.9} parent=1 // pred_check
      _
    $region15: #{encoder_forward.9} parent=1 // pred_check_branch
      %46 = sbr.rel (0) target = $region17
    $region16: #{encoder_forward.9} parent=1 // pred_region
      %s48 = ssub.s32 512, 512
      %49 = vsyncadd [#allocation3], %s48
      %s50 = sshll.u32 [#allocation2], 4
      %s51 = int_to_ptr.vmem [resolvable:$true] %s50
      %56 = dma.vmem_to_hbm [thread:$0]  %s51, 512, %s3, [#allocation3], 128, 128, 8
    $region17: #{encoder_forward.9} parent=1 // pred_fallthru
      _
    // Predicated region
    $region18: #{encoder_forward.9} parent=1 // pred_check
      _
    $region19: #{encoder_forward.9} parent=1 // pred_check_branch
      %58 = sbr.rel (0) target = $region21
    $region20: #{encoder_forward.9} parent=1 // pred_region
      %59 = dma.done [#allocation3], 512
    $region21: #{encoder_forward.9} parent=1 // pred_fallthru
      _
    %60 = vsyncpa [#allocation3], 1

// kernel: encoder_forward.6
$region0: #{encoder_forward.6}
  #allocation0 [shape = 'u32[]', space=smem, size = 0x4, offset = 0x4, fixed_abs, tag = 'smem constant byte address 0x4 - core index']
  #allocation1 [shape = 'u32[144,128]{1,0:T(1,128)}', space=vmem, size = 0x12000, scoped, tag = 'internal scratch']
  %s0 = inlined_call_operand.vmem [shape: f32[32,128], index: 0, kind: input, shape index: {}]
  %s1 = inlined_call_operand.vmem [shape: f32[1,128], index: 1, kind: input, shape index: {}]
  %s2 = inlined_call_operand.vmem [shape: f32[1,128], index: 2, kind: input, shape index: {}]
  %s3 = inlined_call_operand.vmem [shape: bf16[128,128], index: 3, kind: input, shape index: {}]
  %s4 = inlined_call_operand.vmem [shape: f32[1,128], index: 4, kind: input, shape index: {}]
  %s5 = inlined_call_operand.vmem [shape: bf16[128,128], index: 5, kind: input, shape index: {}]
  %s6 = inlined_call_operand.vmem [shape: f32[1,128], index: 6, kind: input, shape index: {}]
  %s7 = inlined_call_operand.vmem [shape: f32[32,128], index: 7, kind: output, shape index: {0}]
  %s8 = inlined_call_operand.vmem [shape: f32[1,2,128], index: 8, kind: output, shape index: {1}]
  %9 = xla_tuple %s7, %s8
  %s10 = sld [smem:[#allocation0]]
  $region46: #{encoder_forward.6} parent=0
    _
  %s12 = ssub.s32 1, %s10
  %s13 = scalar_select 0, %s12, %s10
  // Predicated region
  $region2: #{encoder_forward.6} parent=0 // pred_check
    _
  $region3: #{encoder_forward.6} parent=0 // pred_check_branch
    %15 = sbr.rel (0) target = $region5
  $region4: #{encoder_forward.6} parent=0 // pred_region
    _
  $region5: #{encoder_forward.6} parent=0 // pred_fallthru
    _
  // Predicated region
  $region6: #{encoder_forward.6} parent=0 // pred_check
    _
  $region7: #{encoder_forward.6} parent=0 // pred_check_branch
    %17 = sbr.rel (0) target = $region9
  $region8: #{encoder_forward.6} parent=0 // pred_region
    _
  $region9: #{encoder_forward.6} parent=0 // pred_fallthru
    _
  // Predicated region
  $region10: #{encoder_forward.6} parent=0 // pred_check
    _
  $region11: #{encoder_forward.6} parent=0 // pred_check_branch
    %19 = sbr.rel (0) target = $region13
  $region12: #{encoder_forward.6} parent=0 // pred_region
    _
  $region13: #{encoder_forward.6} parent=0 // pred_fallthru
    _
  // Predicated region
  $region14: #{encoder_forward.6} parent=0 // pred_check
    _
  $region15: #{encoder_forward.6} parent=0 // pred_check_branch
    %21 = sbr.rel (0) target = $region17
  $region16: #{encoder_forward.6} parent=0 // pred_region
    _
  $region17: #{encoder_forward.6} parent=0 // pred_fallthru
    _
  // Predicated region
  $region18: #{encoder_forward.6} parent=0 // pred_check
    _
  $region19: #{encoder_forward.6} parent=0 // pred_check_branch
    %23 = sbr.rel (0) target = $region21
  $region20: #{encoder_forward.6} parent=0 // pred_region
    _
  $region21: #{encoder_forward.6} parent=0 // pred_fallthru
    _
  // Predicated region
  $region22: #{encoder_forward.6} parent=0 // pred_check
    _
  $region23: #{encoder_forward.6} parent=0 // pred_check_branch
    %25 = sbr.rel (0) target = $region25
  $region24: #{encoder_forward.6} parent=0 // pred_region
    _
  $region25: #{encoder_forward.6} parent=0 // pred_fallthru
    _
  // Predicated region
  $region26: #{encoder_forward.6} parent=0 // pred_check
    _
  $region27: #{encoder_forward.6} parent=0 // pred_check_branch
    %27 = sbr.rel (0) target = $region29
  $region28: #{encoder_forward.6} parent=0 // pred_region
    _
  $region29: #{encoder_forward.6} parent=0 // pred_fallthru
    _
  %v29 = vld [vmem:[%s0] sm:$0xff]
  %v30 = vld [vmem:[%s0 + $0x8] sm:$0xff]
  %v31 = vld [vmem:[%s0 + $0x10] sm:$0xff]
  %v32 = vld [vmem:[%s0 + $0x18] sm:$0xff]
  %v33 = vld [vmem:[%s1] sm:$0x1]
  %v35 = vlaneseq
  %v36 = vshrl.u32 %v35, 7
  %v37 = vsub.s32 0, %v36
  %v38 = vrot.slane %v33, %v37
  %v40 = vmul.f32 %v29, %v38
  %v41 = vmul.f32 %v30, %v38
  %v42 = vmul.f32 %v31, %v38
  %v43 = vmul.f32 %v32, %v38
  %v44 = vld [vmem:[%s2] sm:$0x1]
  %v46 = vlaneseq
  %v47 = vshrl.u32 %v46, 7
  %v48 = vsub.s32 0, %v47
  %v49 = vrot.slane %v44, %v48
  %v51 = vadd.f32 %v40, %v49
  %v52 = vadd.f32 %v41, %v49
  %v53 = vadd.f32 %v42, %v49
  %v54 = vadd.f32 %v43, %v49
  %v55 = vpack.c.bf16 %v52, %v51
  %v56 = vpack.c.bf16 %v54, %v53
  %v57 = vld [vmem:[%s3] sm:$0xf]
  %v58 = vld [vmem:[%s3 + $0x4] sm:$0xf]
  %v59 = vld [vmem:[%s3 + $0x8] sm:$0xf]
  %v60 = vld [vmem:[%s3 + $0xc] sm:$0xf]
  %v61 = vld [vmem:[%s3 + $0x10] sm:$0xf]
  %v62 = vld [vmem:[%s3 + $0x14] sm:$0xf]
  %v63 = vld [vmem:[%s3 + $0x18] sm:$0xf]
  %v64 = vld [vmem:[%s3 + $0x1c] sm:$0xf]
  %v65 = vld [vmem:[%s3 + $0x20] sm:$0xf]
  %v66 = vld [vmem:[%s3 + $0x24] sm:$0xf]
  %v67 = vld [vmem:[%s3 + $0x28] sm:$0xf]
  %v68 = vld [vmem:[%s3 + $0x2c] sm:$0xf]
  %v69 = vld [vmem:[%s3 + $0x30] sm:$0xf]
  %v70 = vld [vmem:[%s3 + $0x34] sm:$0xf]
  %v71 = vld [vmem:[%s3 + $0x38] sm:$0xf]
  %v72 = vld [vmem:[%s3 + $0x3c] sm:$0xf]
  %v73 = vld [vmem:[%s4] sm:$0x1]
  %v75 = vlaneseq
  %v76 = vshrl.u32 %v75, 7
  %v77 = vsub.s32 0, %v76
  %v78 = vrot.slane %v73, %v77
  %v96 = vunpack.c.l.b16 %v57
  %v97 = vunpack.c.l.b16 %v58
  %v98 = vunpack.c.l.b16 %v59
  %v99 = vunpack.c.l.b16 %v60
  %v100 = vunpack.c.l.b16 %v61
  %v101 = vunpack.c.l.b16 %v62
  %v102 = vunpack.c.l.b16 %v63
  %v103 = vunpack.c.l.b16 %v64
  %v104 = vunpack.c.l.b16 %v65
  %v105 = vunpack.c.l.b16 %v66
  %v106 = vunpack.c.l.b16 %v67
  %v107 = vunpack.c.l.b16 %v68
  %v108 = vunpack.c.l.b16 %v69
  %v109 = vunpack.c.l.b16 %v70
  %v110 = vunpack.c.l.b16 %v71
  %v111 = vunpack.c.l.b16 %v72
  %v112 = vpack.c.b16 %v97, %v96
  %v113 = vpack.c.b16 %v99, %v98
  %v114 = vpack.c.b16 %v101, %v100
  %v115 = vpack.c.b16 %v103, %v102
  %v116 = vpack.c.b16 %v105, %v104
  %v117 = vpack.c.b16 %v107, %v106
  %v118 = vpack.c.b16 %v109, %v108
  %v119 = vpack.c.b16 %v111, %v110
  %128 = vmatprep.subr.bf16.mxu0 0
  %129 = vmatpush1.bf16.msra.mxu0 %v112
  %130 = vmatprep.subr.bf16.mxu0 0
  %131 = vmatpush1.bf16.msra.mxu0 %v113
  %132 = vmatprep.subr.bf16.mxu0 0
  %133 = vmatpush1.bf16.msra.mxu0 %v114
  %134 = vmatprep.subr.bf16.mxu0 0
  %135 = vmatpush1.bf16.msra.mxu0 %v115
  %136 = vmatprep.subr.bf16.mxu0 0
  %137 = vmatpush1.bf16.msra.mxu0 %v116
  %138 = vmatprep.subr.bf16.mxu0 0
  %139 = vmatpush1.bf16.msra.mxu0 %v117
  %140 = vmatprep.subr.bf16.mxu0 0
  %141 = vmatpush1.bf16.msra.mxu0 %v118
  %142 = vmatprep.subr.bf16.mxu0 0
  %143 = vmatpush1.bf16.msra.mxu0 %v119
  %144 = vmatprep.subr.bf16.mxu0 0
  %145 = vmatpush1.bf16.msra.mxu0 0
  %146 = vmatprep.subr.bf16.mxu0 0
  %147 = vmatpush1.bf16.msra.mxu0 0
  %148 = vmatprep.subr.bf16.mxu0 0
  %149 = vmatpush1.bf16.msra.mxu0 0
  %150 = vmatprep.subr.bf16.mxu0 0
  %151 = vmatpush1.bf16.msra.mxu0 0
  %152 = vmatprep.subr.bf16.mxu0 0
  %153 = vmatpush1.bf16.msra.mxu0 0
  %154 = vmatprep.subr.bf16.mxu0 0
  %155 = vmatpush1.bf16.msra.mxu0 0
  %156 = vmatprep.subr.bf16.mxu0 0
  %157 = vmatpush1.bf16.msra.mxu0 0
  %158 = vmatprep.subr.bf16.mxu0 0
  %159 = vmatpush1.bf16.msra.mxu0 0
  %160 = vmatprep.mubr.bf16.mxu0 0
  %161 = vmatmul.mubr.bf16.gmra.mrb[0].mxu0 %v55
  %v162 = vpop.f32.mrb[0].mxu0
  %v163 = vadd.f32 %v78, %v162
  %v164 = vpop.f32.mrb[0].mxu0
  %v165 = vpop.f32.mrb[0].mxu0
  %v166 = vadd.f32 %v78, %v165
  %v167 = vpop.f32.mrb[0].mxu0
  %168 = vmatprep.mubr.bf16.mxu0 0
  %169 = vmatmul.mubr.bf16.gmra.mrb[0].mxu0 %v56
  %v170 = vpop.f32.mrb[0].mxu0
  %v171 = vadd.f32 %v78, %v170
  %v172 = vpop.f32.mrb[0].mxu0
  %v173 = vpop.f32.mrb[0].mxu0
  %v174 = vadd.f32 %v78, %v173
  %v175 = vpop.f32.mrb[0].mxu0
  %176 = vdwg.mxu0
  %v177 = vmax.f32 %v163, 0.0
  %v178 = vmax.f32 %v166, 0.0
  %v179 = vmax.f32 %v171, 0.0
  %v180 = vmax.f32 %v174, 0.0
  %v181 = vpack.c.bf16 %v178, %v177
  %v182 = vpack.c.bf16 %v180, %v179
  %v183 = vld [vmem:[%s5] sm:$0xf]
  %v184 = vld [vmem:[%s5 + $0x4] sm:$0xf]
  %v185 = vld [vmem:[%s5 + $0x8] sm:$0xf]
  %v186 = vld [vmem:[%s5 + $0xc] sm:$0xf]
  %v187 = vld [vmem:[%s5 + $0x10] sm:$0xf]
  %v188 = vld [vmem:[%s5 + $0x14] sm:$0xf]
  %v189 = vld [vmem:[%s5 + $0x18] sm:$0xf]
  %v190 = vld [vmem:[%s5 + $0x1c] sm:$0xf]
  %v191 = vld [vmem:[%s5 + $0x20] sm:$0xf]
  %v192 = vld [vmem:[%s5 + $0x24] sm:$0xf]
  %v193 = vld [vmem:[%s5 + $0x28] sm:$0xf]
  %v194 = vld [vmem:[%s5 + $0x2c] sm:$0xf]
  %v195 = vld [vmem:[%s5 + $0x30] sm:$0xf]
  %v196 = vld [vmem:[%s5 + $0x34] sm:$0xf]
  %v197 = vld [vmem:[%s5 + $0x38] sm:$0xf]
  %v198 = vld [vmem:[%s5 + $0x3c] sm:$0xf]
  %v215 = vunpack.c.l.b16 %v183
  %v216 = vunpack.c.l.b16 %v184
  %v217 = vunpack.c.l.b16 %v185
  %v218 = vunpack.c.l.b16 %v186
  %v219 = vunpack.c.l.b16 %v187
  %v220 = vunpack.c.l.b16 %v188
  %v221 = vunpack.c.l.b16 %v189
  %v222 = vunpack.c.l.b16 %v190
  %v223 = vunpack.c.l.b16 %v191
  %v224 = vunpack.c.l.b16 %v192
  %v225 = vunpack.c.l.b16 %v193
  %v226 = vunpack.c.l.b16 %v194
  %v227 = vunpack.c.l.b16 %v195
  %v228 = vunpack.c.l.b16 %v196
  %v229 = vunpack.c.l.b16 %v197
  %v230 = vunpack.c.l.b16 %v198
  %v231 = vpack.c.b16 %v216, %v215
  %v232 = vpack.c.b16 %v218, %v217
  %v233 = vpack.c.b16 %v220, %v219
  %v234 = vpack.c.b16 %v222, %v221
  %v235 = vpack.c.b16 %v224, %v223
  %v236 = vpack.c.b16 %v226, %v225
  %v237 = vpack.c.b16 %v228, %v227
  %v238 = vpack.c.b16 %v230, %v229
  %247 = vmatprep.subr.bf16.mxu0 0
  %248 = vmatpush1.bf16.msra.mxu0 %v231
  %249 = vmatprep.subr.bf16.mxu0 0
  %250 = vmatpush1.bf16.msra.mxu0 %v232
  %251 = vmatprep.subr.bf16.mxu0 0
  %252 = vmatpush1.bf16.msra.mxu0 %v233
  %253 = vmatprep.subr.bf16.mxu0 0
  %254 = vmatpush1.bf16.msra.mxu0 %v234
  %255 = vmatprep.subr.bf16.mxu0 0
  %256 = vmatpush1.bf16.msra.mxu0 %v235
  %257 = vmatprep.subr.bf16.mxu0 0
  %258 = vmatpush1.bf16.msra.mxu0 %v236
  %259 = vmatprep.subr.bf16.mxu0 0
  %260 = vmatpush1.bf16.msra.mxu0 %v237
  %261 = vmatprep.subr.bf16.mxu0 0
  %262 = vmatpush1.bf16.msra.mxu0 %v238
  %263 = vmatprep.subr.bf16.mxu0 0
  %264 = vmatpush1.bf16.msra.mxu0 0
  %265 = vmatprep.subr.bf16.mxu0 0
  %266 = vmatpush1.bf16.msra.mxu0 0
  %267 = vmatprep.subr.bf16.mxu0 0
  %268 = vmatpush1.bf16.msra.mxu0 0
  %269 = vmatprep.subr.bf16.mxu0 0
  %270 = vmatpush1.bf16.msra.mxu0 0
  %271 = vmatprep.subr.bf16.mxu0 0
  %272 = vmatpush1.bf16.msra.mxu0 0
  %273 = vmatprep.subr.bf16.mxu0 0
  %274 = vmatpush1.bf16.msra.mxu0 0
  %275 = vmatprep.subr.bf16.mxu0 0
  %276 = vmatpush1.bf16.msra.mxu0 0
  %277 = vmatprep.subr.bf16.mxu0 0
  %278 = vmatpush1.bf16.msra.mxu0 0
  %279 = vmatprep.mubr.bf16.mxu0 0
  %280 = vmatmul.mubr.bf16.gmra.mrb[0].mxu0 %v181
  %v281 = vpop.f32.mrb[0].mxu0
  %v282 = vadd.f32 0.0, %v281
  %v283 = vpop.f32.mrb[0].mxu0
  %v284 = vpop.f32.mrb[0].mxu0
  %v285 = vadd.f32 0.0, %v284
  %v286 = vpop.f32.mrb[0].mxu0
  %287 = vmatprep.mubr.bf16.mxu0 0
  %288 = vmatmul.mubr.bf16.gmra.mrb[0].mxu0 %v182
  %v289 = vpop.f32.mrb[0].mxu0
  %v290 = vadd.f32 0.0, %v289
  %v291 = vpop.f32.mrb[0].mxu0
  %v292 = vpop.f32.mrb[0].mxu0
  %v293 = vadd.f32 0.0, %v292
  %v294 = vpop.f32.mrb[0].mxu0
  %295 = vdwg.mxu0
  %v296 = vadd.f32 %v51, %v282
  %v297 = vadd.f32 %v52, %v285
  %v298 = vadd.f32 %v53, %v290
  %v299 = vadd.f32 %v54, %v293
  %v300 = vld [vmem:[%s6] sm:$0x1]
  %v302 = vlaneseq
  %v303 = vshrl.u32 %v302, 7
  %v304 = vsub.s32 0, %v303
  %v305 = vrot.slane %v300, %v304
  %v307 = vadd.f32 %v296, %v305
  %v308 = vadd.f32 %v297, %v305
  %v309 = vadd.f32 %v298, %v305
  %v310 = vadd.f32 %v299, %v305
  %311 = vst [vmem:[%s7] sm:$0xff] %v307
  %312 = vst [vmem:[%s7 + $0x8] sm:$0xff] %v308
  %313 = vst [vmem:[%s7 + $0x10] sm:$0xff] %v309
  %314 = vst [vmem:[%s7 + $0x18] sm:$0xff] %v310
  %v315 = vadd.f32 %v307, %v308
  %v316 = vadd.f32 %v315, %v309
  %v317 = vadd.f32 %v316, %v310
  %v318 = vrot.slane %v317, 4
  %v319 = vadd.f32 %v317, %v318
  %v320 = vrot.slane %v319, 2
  %v321 = vadd.f32 %v319, %v320
  %v322 = vrot.slane %v321, 1
  %v323 = vadd.f32 %v321, %v322
  %v324 = vmul.f32 %v307, %v307
  %v325 = vmul.f32 %v308, %v308
  %v326 = vmul.f32 %v309, %v309
  %v327 = vmul.f32 %v310, %v310
  %v328 = vadd.f32 %v324, %v325
  %v329 = vadd.f32 %v328, %v326
  %v330 = vadd.f32 %v329, %v327
  %v331 = vrot.slane %v330, 4
  %v332 = vadd.f32 %v330, %v331
  %v333 = vrot.slane %v332, 2
  %v334 = vadd.f32 %v332, %v333
  %v335 = vrot.slane %v334, 1
  %v336 = vadd.f32 %v334, %v335
  %vm337 = vcmask 1040384
  %v338 = vsel %vm337, %v323, %v336
  %339 = vst [vmem:[%s8] sm:$0x3] %v338
  // Predicated region
  $region30: #{encoder_forward.6} parent=0 // pred_check
    _
  $region31: #{encoder_forward.6} parent=0 // pred_check_branch
    %341 = sbr.rel (0) target = $region33
  $region32: #{encoder_forward.6} parent=0 // pred_region
    _
  $region33: #{encoder_forward.6} parent=0 // pred_fallthru
    _
  // Predicated region
  $region34: #{encoder_forward.6} parent=0 // pred_check
    _
  $region35: #{encoder_forward.6} parent=0 // pred_check_branch
    %343 = sbr.rel (0) target = $region37
  $region36: #{encoder_forward.6} parent=0 // pred_region
    _
  $region37: #{encoder_forward.6} parent=0 // pred_fallthru
    _
  // Predicated region
  $region38: #{encoder_forward.6} parent=0 // pred_check
    _
  $region39: #{encoder_forward.6} parent=0 // pred_check_branch
    %345 = sbr.rel (0) target = $region41
  $region40: #{encoder_forward.6} parent=0 // pred_region
    _
  $region41: #{encoder_forward.6} parent=0 // pred_fallthru
    _
  // Predicated region
  $region42: #{encoder_forward.6} parent=0 // pred_check
    _
  $region43: #{encoder_forward.6} parent=0 // pred_check_branch
    %347 = sbr.rel (0) target = $region45
  $region44: #{encoder_forward.6} parent=0 // pred_region
    _
  $region45: #{encoder_forward.6} parent=0 // pred_fallthru
    _

// kernel: encoder_forward.5
$region0: #{encoder_forward.5}
  #allocation0 [shape = 'u32[]', space=smem, size = 0x4, offset = 0x4, fixed_abs, tag = 'smem constant byte address 0x4 - core index']
  #allocation1 [shape = 'u32[144,128]{1,0:T(1,128)}', space=vmem, size = 0x12000, scoped, tag = 'internal scratch']
  %s0 = inlined_call_operand.vmem [shape: f32[4,8,4], index: 0, kind: input, shape index: {}]
  %s1 = inlined_call_operand.vmem [shape: s8[4,8,8], index: 1, kind: input, shape index: {}]
  %s2 = inlined_call_operand.vmem [shape: f32[4,128], index: 2, kind: input, shape index: {}]
  %s3 = inlined_call_operand.vmem [shape: f32[1,128], index: 3, kind: input, shape index: {}]
  %s4 = inlined_call_operand.vmem [shape: bf16[128,16], index: 4, kind: input, shape index: {}]
  %s5 = inlined_call_operand.vmem [shape: bf16[128,16], index: 5, kind: input, shape index: {}]
  %s6 = inlined_call_operand.vmem [shape: bf16[128,16], index: 6, kind: input, shape index: {}]
  %s7 = inlined_call_operand.vmem [shape: bf16[16,128], index: 7, kind: input, shape index: {}]
  %s8 = inlined_call_operand.vmem [shape: f32[4,8,128], index: 8, kind: output, shape index: {0}]
  %s9 = inlined_call_operand.vmem [shape: f32[2,2,128], index: 9, kind: output, shape index: {1}]
  %10 = xla_tuple %s8, %s9
  %s11 = sld [smem:[#allocation0]]
  $region73: #{encoder_forward.5} parent=0
    _
  %s13 = ssub.s32 1, %s11
  %s14 = scalar_select 0, %s13, %s11
  loop: start=0, step=1, limit=4
  $region2: #{encoder_forward.5} parent=0 // loop_pre_header
    _
  $region3: #{encoder_forward.5} parent=0 // loop_header
    %s16 = sphi 0, %s20
    %p17 = scmp.ge.s32.totalorder %s16, 4
    %s26 = sphi 0, %s28
    %s29 = sphi 0, %s26
    %s30 = sphi 0, %s29
    %s46 = sphi 0, %s30
    %s52 = sphi 0, %s54
    %s55 = sphi 0, %s52
    %s56 = sphi 0, %s55
    %s72 = sphi 0, %s56
    %s76 = sphi 0, %s76
    %s78 = sphi 0, %s76
    %s79 = sphi 0, %s78
    %s93 = sphi 0, %s79
    %s97 = sphi 0, %s97
    %s99 = sphi 0, %s97
    %s100 = sphi 0, %s99
    %s114 = sphi 0, %s100
    %s118 = sphi 0, %s118
    %s120 = sphi 0, %s118
    %s121 = sphi 0, %s120
    %s135 = sphi 0, %s121
    %s139 = sphi 0, %s139
    %s141 = sphi 0, %s139
    %s142 = sphi 0, %s141
    %s156 = sphi 0, %s142
    %s160 = sphi 0, %s160
    %s162 = sphi 0, %s160
    %s163 = sphi 0, %s162
    %s177 = sphi 0, %s163
    %s181 = sphi 0, %s181
    %s183 = sphi 0, %s181
    %s184 = sphi 0, %s183
    %s198 = sphi 0, %s184
    %s204 = sphi 0, %s206
    %s207 = sphi 0, %s204
    %s208 = sphi 0, %s207
    %s224 = sphi 0, %s208
    %s230 = sphi 0, %s232
    %s233 = sphi 0, %s230
    %s234 = sphi 0, %s233
    %s250 = sphi 0, %s234
  $region4: #{encoder_forward.5} parent=0 // loop_header_branch
    %19 = sbr.rel (%p17) target = $region8
  $region5: #{encoder_forward.5} parent=0 // loop_body
    %s21 = ssub.s32 %s16, 1
    %s22 = ssub.s32 %s16, 2
    %s23 = sadd.s32 %s16, 1
    %s24 = ssub.s32 %s16, %s23
    %p25 = scmp.eq.s32.totalorder %s24, 0
    %s27 = sadd.s32 %s26, 1
    %s28 = scalar_select %p25, %s26, %s27
    %p31 = pneg %p25
    %p32 = scmp.eq.s32.totalorder %s16, 1
    %p33 = por %p31, %p32
    %p34 = scmp.ne.s32.totalorder %s26, %s29
    %p35 = scmp.eq.s32.totalorder %s16, 0
    %p36 = por %p34, %p35
    %p37 = scmp.ne.s32.totalorder %s26, %s29
    %p38 = scmp.eq.s32.totalorder %s21, 1
    %p39 = por %p37, %p38
    %p40 = scmp.ne.s32.totalorder %s29, %s30
    %p41 = scmp.eq.s32.totalorder %s21, 0
    %p42 = por %p40, %p41
    %p43 = scmp.ne.s32.totalorder %s29, %s30
    %p44 = scmp.eq.s32.totalorder %s22, 1
    %p45 = por %p43, %p44
    %p47 = scmp.ne.s32.totalorder %s30, %s46
    %p48 = scmp.eq.s32.totalorder %s22, 0
    %p49 = por %p47, %p48
    %s50 = ssub.s32 %s16, %s23
    %p51 = scmp.eq.s32.totalorder %s50, 0
    %s53 = sadd.s32 %s52, 1
    %s54 = scalar_select %p51, %s52, %s53
    %p57 = pneg %p51
    %p58 = scmp.eq.s32.totalorder %s16, 1
    %p59 = por %p57, %p58
    %p60 = scmp.ne.s32.totalorder %s52, %s55
    %p61 = scmp.eq.s32.totalorder %s16, 0
    %p62 = por %p60, %p61
    %p63 = scmp.ne.s32.totalorder %s52, %s55
    %p64 = scmp.eq.s32.totalorder %s21, 1
    %p65 = por %p63, %p64
    %p66 = scmp.ne.s32.totalorder %s55, %s56
    %p67 = scmp.eq.s32.totalorder %s21, 0
    %p68 = por %p66, %p67
    %p69 = scmp.ne.s32.totalorder %s55, %s56
    %p70 = scmp.eq.s32.totalorder %s22, 1
    %p71 = por %p69, %p70
    %p73 = scmp.ne.s32.totalorder %s56, %s72
    %p74 = scmp.eq.s32.totalorder %s22, 0
    %p75 = por %p73, %p74
    %s77 = sadd.s32 %s76, 1
    %p80 = scmp.eq.s32.totalorder %s16, 1
    %p81 = scmp.ne.s32.totalorder %s76, %s78
    %p82 = scmp.eq.s32.totalorder %s16, 0
    %p83 = por %p81, %p82
    %p84 = scmp.ne.s32.totalorder %s76, %s78
    %p85 = scmp.eq.s32.totalorder %s21, 1
    %p86 = por %p84, %p85
    %p87 = scmp.ne.s32.totalorder %s78, %s79
    %p88 = scmp.eq.s32.totalorder %s21, 0
    %p89 = por %p87, %p88
    %p90 = scmp.ne.s32.totalorder %s78, %s79
    %p91 = scmp.eq.s32.totalorder %s22, 1
    %p92 = por %p90, %p91
    %p94 = scmp.ne.s32.totalorder %s79, %s93
    %p95 = scmp.eq.s32.totalorder %s22, 0
    %p96 = por %p94, %p95
    %s98 = sadd.s32 %s97, 1
    %p101 = scmp.eq.s32.totalorder %s16, 1
    %p102 = scmp.ne.s32.totalorder %s97, %s99
    %p103 = scmp.eq.s32.totalorder %s16, 0
    %p104 = por %p102, %p103
    %p105 = scmp.ne.s32.totalorder %s97, %s99
    %p106 = scmp.eq.s32.totalorder %s21, 1
    %p107 = por %p105, %p106
    %p108 = scmp.ne.s32.totalorder %s99, %s100
    %p109 = scmp.eq.s32.totalorder %s21, 0
    %p110 = por %p108, %p109
    %p111 = scmp.ne.s32.totalorder %s99, %s100
    %p112 = scmp.eq.s32.totalorder %s22, 1
    %p113 = por %p111, %p112
    %p115 = scmp.ne.s32.totalorder %s100, %s114
    %p116 = scmp.eq.s32.totalorder %s22, 0
    %p117 = por %p115, %p116
    %s119 = sadd.s32 %s118, 1
    %p122 = scmp.eq.s32.totalorder %s16, 1
    %p123 = scmp.ne.s32.totalorder %s118, %s120
    %p124 = scmp.eq.s32.totalorder %s16, 0
    %p125 = por %p123, %p124
    %p126 = scmp.ne.s32.totalorder %s118, %s120
    %p127 = scmp.eq.s32.totalorder %s21, 1
    %p128 = por %p126, %p127
    %p129 = scmp.ne.s32.totalorder %s120, %s121
    %p130 = scmp.eq.s32.totalorder %s21, 0
    %p131 = por %p129, %p130
    %p132 = scmp.ne.s32.totalorder %s120, %s121
    %p133 = scmp.eq.s32.totalorder %s22, 1
    %p134 = por %p132, %p133
    %p136 = scmp.ne.s32.totalorder %s121, %s135
    %p137 = scmp.eq.s32.totalorder %s22, 0
    %p138 = por %p136, %p137
    %s140 = sadd.s32 %s139, 1
    %p143 = scmp.eq.s32.totalorder %s16, 1
    %p144 = scmp.ne.s32.totalorder %s139, %s141
    %p145 = scmp.eq.s32.totalorder %s16, 0
    %p146 = por %p144, %p145
    %p147 = scmp.ne.s32.totalorder %s139, %s141
    %p148 = scmp.eq.s32.totalorder %s21, 1
    %p149 = por %p147, %p148
    %p150 = scmp.ne.s32.totalorder %s141, %s142
    %p151 = scmp.eq.s32.totalorder %s21, 0
    %p152 = por %p150, %p151
    %p153 = scmp.ne.s32.totalorder %s141, %s142
    %p154 = scmp.eq.s32.totalorder %s22, 1
    %p155 = por %p153, %p154
    %p157 = scmp.ne.s32.totalorder %s142, %s156
    %p158 = scmp.eq.s32.totalorder %s22, 0
    %p159 = por %p157, %p158
    %s161 = sadd.s32 %s160, 1
    %p164 = scmp.eq.s32.totalorder %s16, 1
    %p165 = scmp.ne.s32.totalorder %s160, %s162
    %p166 = scmp.eq.s32.totalorder %s16, 0
    %p167 = por %p165, %p166
    %p168 = scmp.ne.s32.totalorder %s160, %s162
    %p169 = scmp.eq.s32.totalorder %s21, 1
    %p170 = por %p168, %p169
    %p171 = scmp.ne.s32.totalorder %s162, %s163
    %p172 = scmp.eq.s32.totalorder %s21, 0
    %p173 = por %p171, %p172
    %p174 = scmp.ne.s32.totalorder %s162, %s163
    %p175 = scmp.eq.s32.totalorder %s22, 1
    %p176 = por %p174, %p175
    %p178 = scmp.ne.s32.totalorder %s163, %s177
    %p179 = scmp.eq.s32.totalorder %s22, 0
    %p180 = por %p178, %p179
    %s182 = sadd.s32 %s181, 1
    %p185 = scmp.eq.s32.totalorder %s16, 1
    %p186 = scmp.ne.s32.totalorder %s181, %s183
    %p187 = scmp.eq.s32.totalorder %s16, 0
    %p188 = por %p186, %p187
    %p189 = scmp.ne.s32.totalorder %s181, %s183
    %p190 = scmp.eq.s32.totalorder %s21, 1
    %p191 = por %p189, %p190
    %p192 = scmp.ne.s32.totalorder %s183, %s184
    %p193 = scmp.eq.s32.totalorder %s21, 0
    %p194 = por %p192, %p193
    %p195 = scmp.ne.s32.totalorder %s183, %s184
    %p196 = scmp.eq.s32.totalorder %s22, 1
    %p197 = por %p195, %p196
    %p199 = scmp.ne.s32.totalorder %s184, %s198
    %p200 = scmp.eq.s32.totalorder %s22, 0
    %p201 = por %p199, %p200
    %s202 = ssub.s32 %s16, %s23
    %p203 = scmp.eq.s32.totalorder %s202, 0
    %s205 = sadd.s32 %s204, 1
    %s206 = scalar_select %p203, %s204, %s205
    %p209 = pneg %p203
    %p210 = scmp.eq.s32.totalorder %s16, 1
    %p211 = por %p209, %p210
    %p212 = scmp.ne.s32.totalorder %s204, %s207
    %p213 = scmp.eq.s32.totalorder %s16, 0
    %p214 = por %p212, %p213
    %p215 = scmp.ne.s32.totalorder %s204, %s207
    %p216 = scmp.eq.s32.totalorder %s21, 1
    %p217 = por %p215, %p216
    %p218 = scmp.ne.s32.totalorder %s207, %s208
    %p219 = scmp.eq.s32.totalorder %s21, 0
    %p220 = por %p218, %p219
    %p221 = scmp.ne.s32.totalorder %s207, %s208
    %p222 = scmp.eq.s32.totalorder %s22, 1
    %p223 = por %p221, %p222
    %p225 = scmp.ne.s32.totalorder %s208, %s224
    %p226 = scmp.eq.s32.totalorder %s22, 0
    %p227 = por %p225, %p226
    %s228 = ssub.s32 %s16, %s23
    %p229 = scmp.eq.s32.totalorder %s228, 0
    %s231 = sadd.s32 %s230, 1
    %s232 = scalar_select %p229, %s230, %s231
    %p235 = pneg %p229
    %p236 = scmp.eq.s32.totalorder %s16, 1
    %p237 = por %p235, %p236
    %p238 = scmp.ne.s32.totalorder %s230, %s233
    %p239 = scmp.eq.s32.totalorder %s16, 0
    %p240 = por %p238, %p239
    %p241 = scmp.ne.s32.totalorder %s230, %s233
    %p242 = scmp.eq.s32.totalorder %s21, 1
    %p243 = por %p241, %p242
    %p244 = scmp.ne.s32.totalorder %s233, %s234
    %p245 = scmp.eq.s32.totalorder %s21, 0
    %p246 = por %p244, %p245
    %p247 = scmp.ne.s32.totalorder %s233, %s234
    %p248 = scmp.eq.s32.totalorder %s22, 1
    %p249 = por %p247, %p248
    %p251 = scmp.ne.s32.totalorder %s234, %s250
    %p252 = scmp.eq.s32.totalorder %s22, 0
    %p253 = por %p251, %p252
    %p254 = scmp.le.s32.totalorder 1, %s16
    %p255 = scmp.lt.s32.totalorder %s16, 3
    %p256 = pnand %p254, %p255
    %p257 = pneg %p256
    // Predicated region
    $region9: #{encoder_forward.5} parent=5 // pred_check
      _
    $region10: #{encoder_forward.5} parent=5 // pred_check_branch
      %259 = sbr.rel (%p256) target = $region12
    $region11: #{encoder_forward.5} parent=5 // pred_region
      %s260 = ssub.s32 %s16, 1
      // Predicated region
      $region13: #{encoder_forward.5} parent=11 // pred_check
        %p261 = pneg %p89
      $region14: #{encoder_forward.5} parent=11 // pred_check_branch
        %263 = sbr.rel (%p261) target = $region16
      $region15: #{encoder_forward.5} parent=11 // pred_region
        _
      $region16: #{encoder_forward.5} parent=11 // pred_fallthru
        _
      // Predicated region
      $region17: #{encoder_forward.5} parent=11 // pred_check
        %p264 = pneg %p110
      $region18: #{encoder_forward.5} parent=11 // pred_check_branch
        %266 = sbr.rel (%p264) target = $region20
      $region19: #{encoder_forward.5} parent=11 // pred_region
        _
      $region20: #{encoder_forward.5} parent=11 // pred_fallthru
        _
      // Predicated region
      $region21: #{encoder_forward.5} parent=11 // pred_check
        %p267 = pneg %p131
      $region22: #{encoder_forward.5} parent=11 // pred_check_branch
        %269 = sbr.rel (%p267) target = $region24
      $region23: #{encoder_forward.5} parent=11 // pred_region
        _
      $region24: #{encoder_forward.5} parent=11 // pred_fallthru
        _
      // Predicated region
      $region25: #{encoder_forward.5} parent=11 // pred_check
        %p270 = pneg %p152
      $region26: #{encoder_forward.5} parent=11 // pred_check_branch
        %272 = sbr.rel (%p270) target = $region28
      $region27: #{encoder_forward.5} parent=11 // pred_region
        _
      $region28: #{encoder_forward.5} parent=11 // pred_fallthru
        _
      // Predicated region
      $region29: #{encoder_forward.5} parent=11 // pred_check
        %p273 = pneg %p173
      $region30: #{encoder_forward.5} parent=11 // pred_check_branch
        %275 = sbr.rel (%p273) target = $region32
      $region31: #{encoder_forward.5} parent=11 // pred_region
        _
      $region32: #{encoder_forward.5} parent=11 // pred_fallthru
        _
      // Predicated region
      $region33: #{encoder_forward.5} parent=11 // pred_check
        %p276 = pneg %p194
      $region34: #{encoder_forward.5} parent=11 // pred_check_branch
        %278 = sbr.rel (%p276) target = $region36
      $region35: #{encoder_forward.5} parent=11 // pred_region
        _
      $region36: #{encoder_forward.5} parent=11 // pred_fallthru
        _
    $region12: #{encoder_forward.5} parent=5 // pred_fallthru
      _
    %p279 = scmp.lt.s32.totalorder %s16, 2
    // Predicated region
    $region37: #{encoder_forward.5} parent=5 // pred_check
      %p280 = pneg %p279
    $region38: #{encoder_forward.5} parent=5 // pred_check_branch
      %282 = sbr.rel (%p280) target = $region40
    $region39: #{encoder_forward.5} parent=5 // pred_region
      // Predicated region
      $region41: #{encoder_forward.5} parent=39 // pred_check
        %p283 = pneg %p36
      $region42: #{encoder_forward.5} parent=39 // pred_check_branch
        %285 = sbr.rel (%p283) target = $region44
      $region43: #{encoder_forward.5} parent=39 // pred_region
        %s286 = smul.u32 2, %s16
        %p287 = scmp.lt.s32.totalorder %s286, 3
        %s288 = scalar_select %p287, %s286, 3
        %s289 = smul.addr %s288, 8
        %s290 = scalar_lea.vmem %s0, %s289
        %s291 = smul.u32 2, %s16
      $region44: #{encoder_forward.5} parent=39 // pred_fallthru
        _
      // Predicated region
      $region45: #{encoder_forward.5} parent=39 // pred_check
        %p292 = pneg %p62
      $region46: #{encoder_forward.5} parent=39 // pred_check_branch
        %294 = sbr.rel (%p292) target = $region48
      $region47: #{encoder_forward.5} parent=39 // pred_region
        %s295 = smul.u32 2, %s16
        %p296 = scmp.lt.s32.totalorder %s295, 3
        %s297 = scalar_select %p296, %s295, 3
        %s298 = smul.addr %s297, 2
        %s299 = scalar_lea.vmem %s1, %s298
        %s300 = smul.u32 2, %s16
      $region48: #{encoder_forward.5} parent=39 // pred_fallthru
        _
    $region40: #{encoder_forward.5} parent=5 // pred_fallthru
      _
    %p301 = scmp.le.s32.totalorder 1, %s16
    %p302 = scmp.lt.s32.totalorder %s16, 3
    %p303 = pnand %p301, %p302
    %p304 = pneg %p303
    // Predicated region
    $region49: #{encoder_forward.5} parent=5 // pred_check
      _
    $region50: #{encoder_forward.5} parent=5 // pred_check_branch
      %306 = sbr.rel (%p303) target = $region52
    $region51: #{encoder_forward.5} parent=5 // pred_region
      %s307 = ssub.s32 %s16, 1
      %s308 = smul.u32 2, %s21
      %p309 = scmp.lt.s32.totalorder %s308, 3
      %s310 = scalar_select %p309, %s308, 3
      %s311 = smul.addr %s310, 8
      %s312 = scalar_lea.vmem %s0, %s311
      %p313 = pneg %p42
      %p314 = pneg %p39
      %s315 = smul.u32 2, %s21
      %p316 = scmp.lt.s32.totalorder %s315, 3
      %s317 = scalar_select %p316, %s315, 3
      %s318 = smul.addr %s317, 2
      %s319 = scalar_lea.vmem %s1, %s318
      %p320 = pneg %p68
      %p321 = pneg %p65
      %p322 = pneg %p89
      %p323 = pneg %p86
      %p324 = pneg %p110
      %p325 = pneg %p107
      %p326 = pneg %p131
      %p327 = pneg %p128
      %p328 = pneg %p152
      %p329 = pneg %p149
      %p330 = pneg %p173
      %p331 = pneg %p170
      %p332 = pneg %p194
      %p333 = pneg %p191
      %p334 = pneg %p220
      %p335 = pneg %p217
      %s336 = smul.u32 2, %s21
      %p337 = scmp.lt.s32.totalorder %s336, 3
      %s338 = scalar_select %p337, %s336, 3
      %s339 = smul.addr %s338, 8
      %s340 = scalar_lea.vmem %s8, %s339
      %p341 = pneg %p246
      %p342 = pneg %p243
      %p343 = scmp.lt.s32.totalorder %s21, 1
      %s344 = scalar_select %p343, %s21, 1
      %s345 = smul.addr %s344, 2
      %s346 = scalar_lea.vmem %s9, %s345
      %s347 = smul.u32 2, %s21
      %p348 = scmp.lt.s32.totalorder %s347, 3
      %s349 = scalar_select %p348, %s347, 3
      %s350 = smul.addr %s349, 8
      %s351 = scalar_lea.vmem %s0, %s350
      %s352 = smul.u32 2, %s21
      %s353 = smul.u32 2, %s21
      %p354 = scmp.lt.s32.totalorder %s353, 3
      %s355 = scalar_select %p354, %s353, 3
      %s356 = smul.addr %s355, 2
      %s357 = scalar_lea.vmem %s1, %s356
      %s358 = smul.u32 2, %s21
      %s359 = smul.u32 2, %s21
      %p360 = scmp.lt.s32.totalorder %s359, 3
      %s361 = scalar_select %p360, %s359, 3
      %s362 = smul.addr %s361, 8
      %s363 = scalar_lea.vmem %s8, %s362
      %s364 = smul.u32 2, %s21
      %p365 = scmp.lt.s32.totalorder %s21, 1
      %s366 = scalar_select %p365, %s21, 1
      %s367 = smul.addr %s366, 2
      %s368 = scalar_lea.vmem %s9, %s367
      %v372 = vld [vmem:[%s351] sm:$0xff]
      %v373 = vld [vmem:[%s351 + $0x8] sm:$0xff]
      %v374 = vld [vmem:[%s2] sm:$0xf]
      %v375 = vld [vmem:[%s3] sm:$0x1]
      %v377 = vlaneseq
      %v378 = vshrl.u32 %v377, 7
      %v379 = vsub.s32 0, %v378
      %v380 = vrot.slane %v375, %v379
      %vm382 = vcmask 31744
      %v384 = vsel %vm382, %v372, 0
      %v387 = vsel %vm382, %v373, 0
      %vm389 = vcmask 1043456
      %v391 = vsel %vm389, %v374, 0
      %393 = vmatprep.subr.mxu0 0.0
      %394 = vmatpush1.msra.mxu0 %v391
      %395 = vmatprep.subr.mxu0 0.0
      %396 = vmatpush1.msra.mxu0 0.0
      %397 = vmatprep.subr.mxu0 0.0
      %398 = vmatpush1.msra.mxu0 0.0
      %399 = vmatprep.subr.mxu0 0.0
      %400 = vmatpush1.msra.mxu0 0.0
      %401 = vmatprep.subr.mxu0 0.0
      %402 = vmatpush1.msra.mxu0 0.0
      %403 = vmatprep.subr.mxu0 0.0
      %404 = vmatpush1.msra.mxu0 0.0
      %405 = vmatprep.subr.mxu0 0.0
      %406 = vmatpush1.msra.mxu0 0.0
      %407 = vmatprep.subr.mxu0 0.0
      %408 = vmatpush1.msra.mxu0 0.0
      %409 = vmatprep.subr.mxu0 0.0
      %410 = vmatpush1.msra.mxu0 0.0
      %411 = vmatprep.subr.mxu0 0.0
      %412 = vmatpush1.msra.mxu0 0.0
      %413 = vmatprep.subr.mxu0 0.0
      %414 = vmatpush1.msra.mxu0 0.0
      %415 = vmatprep.subr.mxu0 0.0
      %416 = vmatpush1.msra.mxu0 0.0
      %417 = vmatprep.subr.mxu0 0.0
      %418 = vmatpush1.msra.mxu0 0.0
      %419 = vmatprep.subr.mxu0 0.0
      %420 = vmatpush1.msra.mxu0 0.0
      %421 = vmatprep.subr.mxu0 0.0
      %422 = vmatpush1.msra.mxu0 0.0
      %423 = vmatprep.subr.mxu0 0.0
      %424 = vmatpush1.msra.mxu0 0.0
      %425 = vmatprep.subr.mxu0 0.0
      %426 = vmatpush1.msra.mxu0 0.0
      %427 = vmatprep.subr.mxu0 0.0
      %428 = vmatpush1.msra.mxu0 0.0
      %429 = vmatprep.subr.mxu0 0.0
      %430 = vmatpush1.msra.mxu0 0.0
      %431 = vmatprep.subr.mxu0 0.0
      %432 = vmatpush1.msra.mxu0 0.0
      %433 = vmatprep.subr.mxu0 0.0
      %434 = vmatpush1.msra.mxu0 0.0
      %435 = vmatprep.subr.mxu0 0.0
      %436 = vmatpush1.msra.mxu0 0.0
      %437 = vmatprep.subr.mxu0 0.0
      %438 = vmatpush1.msra.mxu0 0.0
      %439 = vmatprep.subr.mxu0 0.0
      %440 = vmatpush1.msra.mxu0 0.0
      %441 = vmatprep.subr.mxu0 0.0
      %442 = vmatpush1.msra.mxu0 0.0
      %443 = vmatprep.subr.mxu0 0.0
      %444 = vmatpush1.msra.mxu0 0.0
      %445 = vmatprep.subr.mxu0 0.0
      %446 = vmatpush1.msra.mxu0 0.0
      %447 = vmatprep.subr.mxu0 0.0
      %448 = vmatpush1.msra.mxu0 0.0
      %449 = vmatprep.subr.mxu0 0.0
      %450 = vmatpush1.msra.mxu0 0.0
      %451 = vmatprep.subr.mxu0 0.0
      %452 = vmatpush1.msra.mxu0 0.0
      %453 = vmatprep.subr.mxu0 0.0
      %454 = vmatpush1.msra.mxu0 0.0
      %455 = vmatprep.subr.mxu0 0.0
      %456 = vmatpush1.msra.mxu0 0.0
      %457 = vmatprep.mubr.f32.mxu0 0.0
      %458 = vmatmul.mubr.f32.gmra.mrb[0].mxu0 %v384
      %v459 = vpop.f32.mrb[0].mxu0
      %v460 = vadd.f32 %v380, %v459
      %v461 = vpop.f32.mrb[0].mxu0
      %462 = vmatprep.mubr.f32.mxu0 0.0
      %463 = vmatmul.mubr.f32.gmra.mrb[0].mxu0 %v387
      %v464 = vpop.f32.mrb[0].mxu0
      %v465 = vadd.f32 %v380, %v464
      %v466 = vpop.f32.mrb[0].mxu0
      %467 = vdwg.mxu0
      %v468 = vld [vmem:[%s357] sm:$0x3]
      %v469 = vld [vmem:[%s357 + $0x2] sm:$0x3]
      %vm470 = vnez %v468
      %vm471 = vnez %v469
      %v472 = vld [vmem:[%s4] sm:$0xf]
      %v473 = vld [vmem:[%s4 + $0x4] sm:$0xf]
      %v474 = vld [vmem:[%s4 + $0x8] sm:$0xf]
      %v475 = vld [vmem:[%s4 + $0xc] sm:$0xf]
      %v476 = vld [vmem:[%s4 + $0x10] sm:$0xf]
      %v477 = vld [vmem:[%s4 + $0x14] sm:$0xf]
      %v478 = vld [vmem:[%s4 + $0x18] sm:$0xf]
      %v479 = vld [vmem:[%s4 + $0x1c] sm:$0xf]
      %v480 = vld [vmem:[%s4 + $0x20] sm:$0xf]
      %v481 = vld [vmem:[%s4 + $0x24] sm:$0xf]
      %v482 = vld [vmem:[%s4 + $0x28] sm:$0xf]
      %v483 = vld [vmem:[%s4 + $0x2c] sm:$0xf]
      %v484 = vld [vmem:[%s4 + $0x30] sm:$0xf]
      %v485 = vld [vmem:[%s4 + $0x34] sm:$0xf]
      %v486 = vld [vmem:[%s4 + $0x38] sm:$0xf]
      %v487 = vld [vmem:[%s4 + $0x3c] sm:$0xf]
      %v488 = vld [vmem:[%s5] sm:$0xf]
      %v489 = vld [vmem:[%s5 + $0x4] sm:$0xf]
      %v490 = vld [vmem:[%s5 + $0x8] sm:$0xf]
      %v491 = vld [vmem:[%s5 + $0xc] sm:$0xf]
      %v492 = vld [vmem:[%s5 + $0x10] sm:$0xf]
      %v493 = vld [vmem:[%s5 + $0x14] sm:$0xf]
      %v494 = vld [vmem:[%s5 + $0x18] sm:$0xf]
      %v495 = vld [vmem:[%s5 + $0x1c] sm:$0xf]
      %v496 = vld [vmem:[%s5 + $0x20] sm:$0xf]
      %v497 = vld [vmem:[%s5 + $0x24] sm:$0xf]
      %v498 = vld [vmem:[%s5 + $0x28] sm:$0xf]
      %v499 = vld [vmem:[%s5 + $0x2c] sm:$0xf]
      %v500 = vld [vmem:[%s5 + $0x30] sm:$0xf]
      %v501 = vld [vmem:[%s5 + $0x34] sm:$0xf]
      %v502 = vld [vmem:[%s5 + $0x38] sm:$0xf]
      %v503 = vld [vmem:[%s5 + $0x3c] sm:$0xf]
      %v504 = vld [vmem:[%s6] sm:$0xf]
      %v505 = vld [vmem:[%s6 + $0x4] sm:$0xf]
      %v506 = vld [vmem:[%s6 + $0x8] sm:$0xf]
      %v507 = vld [vmem:[%s6 + $0xc] sm:$0xf]
      %v508 = vld [vmem:[%s6 + $0x10] sm:$0xf]
      %v509 = vld [vmem:[%s6 + $0x14] sm:$0xf]
      %v510 = vld [vmem:[%s6 + $0x18] sm:$0xf]
      %v511 = vld [vmem:[%s6 + $0x1c] sm:$0xf]
      %v512 = vld [vmem:[%s6 + $0x20] sm:$0xf]
      %v513 = vld [vmem:[%s6 + $0x24] sm:$0xf]
      %v514 = vld [vmem:[%s6 + $0x28] sm:$0xf]
      %v515 = vld [vmem:[%s6 + $0x2c] sm:$0xf]
      %v516 = vld [vmem:[%s6 + $0x30] sm:$0xf]
      %v517 = vld [vmem:[%s6 + $0x34] sm:$0xf]
      %v518 = vld [vmem:[%s6 + $0x38] sm:$0xf]
      %v519 = vld [vmem:[%s6 + $0x3c] sm:$0xf]
      %v520 = vld [vmem:[%s7] sm:$0xf]
      %v521 = vld [vmem:[%s7 + $0x4] sm:$0xf]
      %v522 = vpack.c.bf16 %v465, %v460
      %v539 = vunpack.c.l.b16 %v472
      %v540 = vunpack.c.l.b16 %v473
      %v541 = vunpack.c.l.b16 %v474
      %v542 = vunpack.c.l.b16 %v475
      %v543 = vunpack.c.l.b16 %v476
      %v544 = vunpack.c.l.b16 %v477
      %v545 = vunpack.c.l.b16 %v478
      %v546 = vunpack.c.l.b16 %v479
      %v547 = vunpack.c.l.b16 %v480
      %v548 = vunpack.c.l.b16 %v481
      %v549 = vunpack.c.l.b16 %v482
      %v550 = vunpack.c.l.b16 %v483
      %v551 = vunpack.c.l.b16 %v484
      %v552 = vunpack.c.l.b16 %v485
      %v553 = vunpack.c.l.b16 %v486
      %v554 = vunpack.c.l.b16 %v487
      %v555 = vpack.c.b16 %v540, %v539
      %v556 = vpack.c.b16 %v542, %v541
      %v557 = vpack.c.b16 %v544, %v543
      %v558 = vpack.c.b16 %v546, %v545
      %v559 = vpack.c.b16 %v548, %v547
      %v560 = vpack.c.b16 %v550, %v549
      %v561 = vpack.c.b16 %v552, %v551
      %v562 = vpack.c.b16 %v554, %v553
      %571 = vmatprep.subr.bf16.mxu0 0
      %572 = vmatpush1.bf16.msra.mxu0 %v555
      %573 = vmatprep.subr.bf16.mxu0 0
      %574 = vmatpush1.bf16.msra.mxu0 %v556
      %575 = vmatprep.subr.bf16.mxu0 0
      %576 = vmatpush1.bf16.msra.mxu0 %v557
      %577 = vmatprep.subr.bf16.mxu0 0
      %578 = vmatpush1.bf16.msra.mxu0 %v558
      %579 = vmatprep.subr.bf16.mxu0 0
      %580 = vmatpush1.bf16.msra.mxu0 %v559
      %581 = vmatprep.subr.bf16.mxu0 0
      %582 = vmatpush1.bf16.msra.mxu0 %v560
      %583 = vmatprep.subr.bf16.mxu0 0
      %584 = vmatpush1.bf16.msra.mxu0 %v561
      %585 = vmatprep.subr.bf16.mxu0 0
      %586 = vmatpush1.bf16.msra.mxu0 %v562
      %587 = vmatprep.subr.bf16.mxu0 0
      %588 = vmatpush1.bf16.msra.mxu0 0
      %589 = vmatprep.subr.bf16.mxu0 0
      %590 = vmatpush1.bf16.msra.mxu0 0
      %591 = vmatprep.subr.bf16.mxu0 0
      %592 = vmatpush1.bf16.msra.mxu0 0
      %593 = vmatprep.subr.bf16.mxu0 0
      %594 = vmatpush1.bf16.msra.mxu0 0
      %595 = vmatprep.subr.bf16.mxu0 0
      %596 = vmatpush1.bf16.msra.mxu0 0
      %597 = vmatprep.subr.bf16.mxu0 0
      %598 = vmatpush1.bf16.msra.mxu0 0
      %599 = vmatprep.subr.bf16.mxu0 0
      %600 = vmatpush1.bf16.msra.mxu0 0
      %601 = vmatprep.subr.bf16.mxu0 0
      %602 = vmatpush1.bf16.msra.mxu0 0
      %603 = vmatprep.mubr.bf16.mxu0 0
      %604 = vmatmul.mubr.bf16.gmra.mrb[0].mxu0 %v522
      %v605 = vpop.f32.mrb[0].mxu0
      %v606 = vadd.f32 0.0, %v605
      %v607 = vpop.f32.mrb[0].mxu0
      %v608 = vpop.f32.mrb[0].mxu0
      %v609 = vadd.f32 0.0, %v608
      %v610 = vpop.f32.mrb[0].mxu0
      %611 = vdwg.mxu0
      %v628 = vunpack.c.l.b16 %v488
      %v629 = vunpack.c.l.b16 %v489
      %v630 = vunpack.c.l.b16 %v490
      %v631 = vunpack.c.l.b16 %v491
      %v632 = vunpack.c.l.b16 %v492
      %v633 = vunpack.c.l.b16 %v493
      %v634 = vunpack.c.l.b16 %v494
      %v635 = vunpack.c.l.b16 %v495
      %v636 = vunpack.c.l.b16 %v496
      %v637 = vunpack.c.l.b16 %v497
      %v638 = vunpack.c.l.b16 %v498
      %v639 = vunpack.c.l.b16 %v499
      %v640 = vunpack.c.l.b16 %v500
      %v641 = vunpack.c.l.b16 %v501
      %v642 = vunpack.c.l.b16 %v502
      %v643 = vunpack.c.l.b16 %v503
      %v644 = vpack.c.b16 %v629, %v628
      %v645 = vpack.c.b16 %v631, %v630
      %v646 = vpack.c.b16 %v633, %v632
      %v647 = vpack.c.b16 %v635, %v634
      %v648 = vpack.c.b16 %v637, %v636
      %v649 = vpack.c.b16 %v639, %v638
      %v650 = vpack.c.b16 %v641, %v640
      %v651 = vpack.c.b16 %v643, %v642
      %660 = vmatprep.subr.bf16.mxu0 0
      %661 = vmatpush1.bf16.msra.mxu0 %v644
      %662 = vmatprep.subr.bf16.mxu0 0
      %663 = vmatpush1.bf16.msra.mxu0 %v645
      %664 = vmatprep.subr.bf16.mxu0 0
      %665 = vmatpush1.bf16.msra.mxu0 %v646
      %666 = vmatprep.subr.bf16.mxu0 0
      %667 = vmatpush1.bf16.msra.mxu0 %v647
      %668 = vmatprep.subr.bf16.mxu0 0
      %669 = vmatpush1.bf16.msra.mxu0 %v648
      %670 = vmatprep.subr.bf16.mxu0 0
      %671 = vmatpush1.bf16.msra.mxu0 %v649
      %672 = vmatprep.subr.bf16.mxu0 0
      %673 = vmatpush1.bf16.msra.mxu0 %v650
      %674 = vmatprep.subr.bf16.mxu0 0
      %675 = vmatpush1.bf16.msra.mxu0 %v651
      %676 = vmatprep.subr.bf16.mxu0 0
      %677 = vmatpush1.bf16.msra.mxu0 0
      %678 = vmatprep.subr.bf16.mxu0 0
      %679 = vmatpush1.bf16.msra.mxu0 0
      %680 = vmatprep.subr.bf16.mxu0 0
      %681 = vmatpush1.bf16.msra.mxu0 0
      %682 = vmatprep.subr.bf16.mxu0 0
      %683 = vmatpush1.bf16.msra.mxu0 0
      %684 = vmatprep.subr.bf16.mxu0 0
      %685 = vmatpush1.bf16.msra.mxu0 0
      %686 = vmatprep.subr.bf16.mxu0 0
      %687 = vmatpush1.bf16.msra.mxu0 0
      %688 = vmatprep.subr.bf16.mxu0 0
      %689 = vmatpush1.bf16.msra.mxu0 0
      %690 = vmatprep.subr.bf16.mxu0 0
      %691 = vmatpush1.bf16.msra.mxu0 0
      %692 = vmatprep.mubr.bf16.mxu0 0
      %693 = vmatmul.mubr.bf16.gmra.mrb[0].mxu0 %v522
      %v694 = vpop.f32.mrb[0].mxu0
      %v695 = vadd.f32 0.0, %v694
      %v696 = vpop.f32.mrb[0].mxu0
      %v697 = vpop.f32.mrb[0].mxu0
      %v698 = vadd.f32 0.0, %v697
      %v699 = vpop.f32.mrb[0].mxu0
      %700 = vdwg.mxu0
      %v717 = vunpack.c.l.b16 %v504
      %v718 = vunpack.c.l.b16 %v505
      %v719 = vunpack.c.l.b16 %v506
      %v720 = vunpack.c.l.b16 %v507
      %v721 = vunpack.c.l.b16 %v508
      %v722 = vunpack.c.l.b16 %v509
      %v723 = vunpack.c.l.b16 %v510
      %v724 = vunpack.c.l.b16 %v511
      %v725 = vunpack.c.l.b16 %v512
      %v726 = vunpack.c.l.b16 %v513
      %v727 = vunpack.c.l.b16 %v514
      %v728 = vunpack.c.l.b16 %v515
      %v729 = vunpack.c.l.b16 %v516
      %v730 = vunpack.c.l.b16 %v517
      %v731 = vunpack.c.l.b16 %v518
      %v732 = vunpack.c.l.b16 %v519
      %v733 = vpack.c.b16 %v718, %v717
      %v734 = vpack.c.b16 %v720, %v719
      %v735 = vpack.c.b16 %v722, %v721
      %v736 = vpack.c.b16 %v724, %v723
      %v737 = vpack.c.b16 %v726, %v725
      %v738 = vpack.c.b16 %v728, %v727
      %v739 = vpack.c.b16 %v730, %v729
      %v740 = vpack.c.b16 %v732, %v731
      %749 = vmatprep.subr.bf16.mxu0 0
      %750 = vmatpush1.bf16.msra.mxu0 %v733
      %751 = vmatprep.subr.bf16.mxu0 0
      %752 = vmatpush1.bf16.msra.mxu0 %v734
      %753 = vmatprep.subr.bf16.mxu0 0
      %754 = vmatpush1.bf16.msra.mxu0 %v735
      %755 = vmatprep.subr.bf16.mxu0 0
      %756 = vmatpush1.bf16.msra.mxu0 %v736
      %757 = vmatprep.subr.bf16.mxu0 0
      %758 = vmatpush1.bf16.msra.mxu0 %v737
      %759 = vmatprep.subr.bf16.mxu0 0
      %760 = vmatpush1.bf16.msra.mxu0 %v738
      %761 = vmatprep.subr.bf16.mxu0 0
      %762 = vmatpush1.bf16.msra.mxu0 %v739
      %763 = vmatprep.subr.bf16.mxu0 0
      %764 = vmatpush1.bf16.msra.mxu0 %v740
      %765 = vmatprep.subr.bf16.mxu0 0
      %766 = vmatpush1.bf16.msra.mxu0 0
      %767 = vmatprep.subr.bf16.mxu0 0
      %768 = vmatpush1.bf16.msra.mxu0 0
      %769 = vmatprep.subr.bf16.mxu0 0
      %770 = vmatpush1.bf16.msra.mxu0 0
      %771 = vmatprep.subr.bf16.mxu0 0
      %772 = vmatpush1.bf16.msra.mxu0 0
      %773 = vmatprep.subr.bf16.mxu0 0
      %774 = vmatpush1.bf16.msra.mxu0 0
      %775 = vmatprep.subr.bf16.mxu0 0
      %776 = vmatpush1.bf16.msra.mxu0 0
      %777 = vmatprep.subr.bf16.mxu0 0
      %778 = vmatpush1.bf16.msra.mxu0 0
      %779 = vmatprep.subr.bf16.mxu0 0
      %780 = vmatpush1.bf16.msra.mxu0 0
      %781 = vmatprep.mubr.bf16.mxu0 0
      %782 = vmatmul.mubr.bf16.gmra.mrb[0].mxu0 %v522
      %v783 = vpop.f32.mrb[0].mxu0
      %v784 = vadd.f32 0.0, %v783
      %v785 = vpop.f32.mrb[0].mxu0
      %v786 = vpop.f32.mrb[0].mxu0
      %v787 = vadd.f32 0.0, %v786
      %v788 = vpop.f32.mrb[0].mxu0
      %789 = vdwg.mxu0
      %vm790 = vcmask 64512
      %v792 = vsel %vm790, %v606, 0
      %v795 = vsel %vm790, %v695, 0
      %797 = vmatprep.subr.mxu0 0.0
      %798 = vmatpush1.xpose.msra.mxu0 %v795
      %799 = vmatprep.subr.mxu0 0.0
      %800 = vmatpush1.xpose.msra.mxu0 0.0
      %801 = vmatprep.subr.mxu0 0.0
      %802 = vmatpush1.xpose.msra.mxu0 0.0
      %803 = vmatprep.subr.mxu0 0.0
      %804 = vmatpush1.xpose.msra.mxu0 0.0
      %805 = vmatprep.subr.mxu0 0.0
      %806 = vmatpush1.xpose.msra.mxu0 0.0
      %807 = vmatprep.subr.mxu0 0.0
      %808 = vmatpush1.xpose.msra.mxu0 0.0
      %809 = vmatprep.subr.mxu0 0.0
      %810 = vmatpush1.xpose.msra.mxu0 0.0
      %811 = vmatprep.subr.mxu0 0.0
      %812 = vmatpush1.xpose.msra.mxu0 0.0
      %813 = vmatprep.subr.mxu0 0.0
      %814 = vmatpush1.xpose.msra.mxu0 0.0
      %815 = vmatprep.subr.mxu0 0.0
      %816 = vmatpush1.xpose.msra.mxu0 0.0
      %817 = vmatprep.subr.mxu0 0.0
      %818 = vmatpush1.xpose.msra.mxu0 0.0
      %819 = vmatprep.subr.mxu0 0.0
      %820 = vmatpush1.xpose.msra.mxu0 0.0
      %821 = vmatprep.subr.mxu0 0.0
      %822 = vmatpush1.xpose.msra.mxu0 0.0
      %823 = vmatprep.subr.mxu0 0.0
      %824 = vmatpush1.xpose.msra.mxu0 0.0
      %825 = vmatprep.subr.mxu0 0.0
      %826 = vmatpush1.xpose.msra.mxu0 0.0
      %827 = vmatprep.subr.mxu0 0.0
      %828 = vmatpush1.xpose.msra.mxu0 0.0
      %829 = vmatprep.subr.mxu0 0.0
      %830 = vmatpush1.xpose.msra.mxu0 0.0
      %831 = vmatprep.subr.mxu0 0.0
      %832 = vmatpush1.xpose.msra.mxu0 0.0
      %833 = vmatprep.subr.mxu0 0.0
      %834 = vmatpush1.xpose.msra.mxu0 0.0
      %835 = vmatprep.subr.mxu0 0.0
      %836 = vmatpush1.xpose.msra.mxu0 0.0
      %837 = vmatprep.subr.mxu0 0.0
      %838 = vmatpush1.xpose.msra.mxu0 0.0
      %839 = vmatprep.subr.mxu0 0.0
      %840 = vmatpush1.xpose.msra.mxu0 0.0
      %841 = vmatprep.subr.mxu0 0.0
      %842 = vmatpush1.xpose.msra.mxu0 0.0
      %843 = vmatprep.subr.mxu0 0.0
      %844 = vmatpush1.xpose.msra.mxu0 0.0
      %845 = vmatprep.subr.mxu0 0.0
      %846 = vmatpush1.xpose.msra.mxu0 0.0
      %847 = vmatprep.subr.mxu0 0.0
      %848 = vmatpush1.xpose.msra.mxu0 0.0
      %849 = vmatprep.subr.mxu0 0.0
      %850 = vmatpush1.xpose.msra.mxu0 0.0
      %851 = vmatprep.subr.mxu0 0.0
      %852 = vmatpush1.xpose.msra.mxu0 0.0
      %853 = vmatprep.subr.mxu0 0.0
      %854 = vmatpush1.xpose.msra.mxu0 0.0
      %855 = vmatprep.subr.mxu0 0.0
      %856 = vmatpush1.xpose.msra.mxu0 0.0
      %857 = vmatprep.subr.mxu0 0.0
      %858 = vmatpush1.xpose.msra.mxu0 0.0
      %859 = vmatprep.subr.mxu0 0.0
      %860 = vmatpush1.xpose.msra.mxu0 0.0
      %861 = vmatprep.mubr.f32.mxu0 0.0
      %862 = vmatmul.mubr.f32.gmra.mrb[0].mxu0 %v792
      %v863 = vpop.f32.mrb[0].mxu0
      %v864 = vadd.f32 0.0, %v863
      %v865 = vpop.f32.mrb[0].mxu0
      %866 = vdwg.mxu0
      %v868 = vsel %vm790, %v609, 0
      %v871 = vsel %vm790, %v698, 0
      %873 = vmatprep.subr.mxu0 0.0
      %874 = vmatpush1.xpose.msra.mxu0 %v871
      %875 = vmatprep.subr.mxu0 0.0
      %876 = vmatpush1.xpose.msra.mxu0 0.0
      %877 = vmatprep.subr.mxu0 0.0
      %878 = vmatpush1.xpose.msra.mxu0 0.0
      %879 = vmatprep.subr.mxu0 0.0
      %880 = vmatpush1.xpose.msra.mxu0 0.0
      %881 = vmatprep.subr.mxu0 0.0
      %882 = vmatpush1.xpose.msra.mxu0 0.0
      %883 = vmatprep.subr.mxu0 0.0
      %884 = vmatpush1.xpose.msra.mxu0 0.0
      %885 = vmatprep.subr.mxu0 0.0
      %886 = vmatpush1.xpose.msra.mxu0 0.0
      %887 = vmatprep.subr.mxu0 0.0
      %888 = vmatpush1.xpose.msra.mxu0 0.0
      %889 = vmatprep.subr.mxu0 0.0
      %890 = vmatpush1.xpose.msra.mxu0 0.0
      %891 = vmatprep.subr.mxu0 0.0
      %892 = vmatpush1.xpose.msra.mxu0 0.0
      %893 = vmatprep.subr.mxu0 0.0
      %894 = vmatpush1.xpose.msra.mxu0 0.0
      %895 = vmatprep.subr.mxu0 0.0
      %896 = vmatpush1.xpose.msra.mxu0 0.0
      %897 = vmatprep.subr.mxu0 0.0
      %898 = vmatpush1.xpose.msra.mxu0 0.0
      %899 = vmatprep.subr.mxu0 0.0
      %900 = vmatpush1.xpose.msra.mxu0 0.0
      %901 = vmatprep.subr.mxu0 0.0
      %902 = vmatpush1.xpose.msra.mxu0 0.0
      %903 = vmatprep.subr.mxu0 0.0
      %904 = vmatpush1.xpose.msra.mxu0 0.0
      %905 = vmatprep.subr.mxu0 0.0
      %906 = vmatpush1.xpose.msra.mxu0 0.0
      %907 = vmatprep.subr.mxu0 0.0
      %908 = vmatpush1.xpose.msra.mxu0 0.0
      %909 = vmatprep.subr.mxu0 0.0
      %910 = vmatpush1.xpose.msra.mxu0 0.0
      %911 = vmatprep.subr.mxu0 0.0
      %912 = vmatpush1.xpose.msra.mxu0 0.0
      %913 = vmatprep.subr.mxu0 0.0
      %914 = vmatpush1.xpose.msra.mxu0 0.0
      %915 = vmatprep.subr.mxu0 0.0
      %916 = vmatpush1.xpose.msra.mxu0 0.0
      %917 = vmatprep.subr.mxu0 0.0
      %918 = vmatpush1.xpose.msra.mxu0 0.0
      %919 = vmatprep.subr.mxu0 0.0
      %920 = vmatpush1.xpose.msra.mxu0 0.0
      %921 = vmatprep.subr.mxu0 0.0
      %922 = vmatpush1.xpose.msra.mxu0 0.0
      %923 = vmatprep.subr.mxu0 0.0
      %924 = vmatpush1.xpose.msra.mxu0 0.0
      %925 = vmatprep.subr.mxu0 0.0
      %926 = vmatpush1.xpose.msra.mxu0 0.0
      %927 = vmatprep.subr.mxu0 0.0
      %928 = vmatpush1.xpose.msra.mxu0 0.0
      %929 = vmatprep.subr.mxu0 0.0
      %930 = vmatpush1.xpose.msra.mxu0 0.0
      %931 = vmatprep.subr.mxu0 0.0
      %932 = vmatpush1.xpose.msra.mxu0 0.0
      %933 = vmatprep.subr.mxu0 0.0
      %934 = vmatpush1.xpose.msra.mxu0 0.0
      %935 = vmatprep.subr.mxu0 0.0
      %936 = vmatpush1.xpose.msra.mxu0 0.0
      %937 = vmatprep.mubr.f32.mxu0 0.0
      %938 = vmatmul.mubr.f32.gmra.mrb[0].mxu0 %v868
      %v939 = vpop.f32.mrb[0].mxu0
      %v940 = vadd.f32 0.0, %v939
      %v941 = vpop.f32.mrb[0].mxu0
      %942 = vdwg.mxu0
      %v943 = vsel %vm470, 16843009, 0
      %v944 = vsel %vm471, 16843009, 0
      %v945 = vunpack.c.0.s8 %v943
      %v946 = vunpack.c.0.s8 %v944
      %vm947 = vcmp.ne.s32.totalorder %v945, 0
      %vm948 = vcmp.ne.s32.totalorder %v946, 0
      %v949 = vsel %vm947, -1e+09, %v864
      %v950 = vsel %vm948, -1e+09, %v940
      %v951 = vsel %vm790, %v949, -inf
      %952 = vmax.xlane.f32.xlu0 %v951
      %v953 = vpop.xlane.xlu0 %952
      %v954 = vsel %vm790, %v950, -inf
      %955 = vmax.xlane.f32.xlu0 %v954
      %v956 = vpop.xlane.xlu0 %955
      %v957 = vsub.f32 %v949, %v953
      %v958 = vsub.f32 %v950, %v956
      %v959 = vmul.f32 %v957, 1.442695
      %v960 = vpow.pop %v959
      %v961 = vmul.f32 %v958, 1.442695
      %v962 = vpow.pop %v961
      %v963 = vsel %vm790, %v960, 0.0
      %964 = vadd.xlane.f32.xlu0 %v963
      %v965 = vpop.xlane.xlu0 %964
      %v966 = vsel %vm790, %v962, 0.0
      %967 = vadd.xlane.f32.xlu0 %v966
      %v968 = vpop.xlane.xlu0 %967
      %v969 = vrcp.pop %v965
      %v970 = vrcp.pop %v968
      %v971 = vmul.f32 %v960, %v969
      %v972 = vmul.f32 %v962, %v970
      %v974 = vsel %vm790, %v971, 0
      %976 = vmatprep.subr.mxu0 0.0
      %977 = vmatpush1.msra.mxu0 %v784
      %978 = vmatprep.subr.mxu0 0.0
      %979 = vmatpush1.msra.mxu0 0.0
      %980 = vmatprep.subr.mxu0 0.0
      %981 = vmatpush1.msra.mxu0 0.0
      %982 = vmatprep.subr.mxu0 0.0
      %983 = vmatpush1.msra.mxu0 0.0
      %984 = vmatprep.subr.mxu0 0.0
      %985 = vmatpush1.msra.mxu0 0.0
      %986 = vmatprep.subr.mxu0 0.0
      %987 = vmatpush1.msra.mxu0 0.0
      %988 = vmatprep.subr.mxu0 0.0
      %989 = vmatpush1.msra.mxu0 0.0
      %990 = vmatprep.subr.mxu0 0.0
      %991 = vmatpush1.msra.mxu0 0.0
      %992 = vmatprep.subr.mxu0 0.0
      %993 = vmatpush1.msra.mxu0 0.0
      %994 = vmatprep.subr.mxu0 0.0
      %995 = vmatpush1.msra.mxu0 0.0
      %996 = vmatprep.subr.mxu0 0.0
      %997 = vmatpush1.msra.mxu0 0.0
      %998 = vmatprep.subr.mxu0 0.0
      %999 = vmatpush1.msra.mxu0 0.0
      %1000 = vmatprep.subr.mxu0 0.0
      %1001 = vmatpush1.msra.mxu0 0.0
      %1002 = vmatprep.subr.mxu0 0.0
      %1003 = vmatpush1.msra.mxu0 0.0
      %1004 = vmatprep.subr.mxu0 0.0
      %1005 = vmatpush1.msra.mxu0 0.0
      %1006 = vmatprep.subr.mxu0 0.0
      %1007 = vmatpush1.msra.mxu0 0.0
      %1008 = vmatprep.subr.mxu0 0.0
      %1009 = vmatpush1.msra.mxu0 0.0
      %1010 = vmatprep.subr.mxu0 0.0
      %1011 = vmatpush1.msra.mxu0 0.0
      %1012 = vmatprep.subr.mxu0 0.0
      %1013 = vmatpush1.msra.mxu0 0.0
      %1014 = vmatprep.subr.mxu0 0.0
      %1015 = vmatpush1.msra.mxu0 0.0
      %1016 = vmatprep.subr.mxu0 0.0
      %1017 = vmatpush1.msra.mxu0 0.0
      %1018 = vmatprep.subr.mxu0 0.0
      %1019 = vmatpush1.msra.mxu0 0.0
      %1020 = vmatprep.subr.mxu0 0.0
      %1021 = vmatpush1.msra.mxu0 0.0
      %1022 = vmatprep.subr.mxu0 0.0
      %1023 = vmatpush1.msra.mxu0 0.0
      %1024 = vmatprep.subr.mxu0 0.0
      %1025 = vmatpush1.msra.mxu0 0.0
      %1026 = vmatprep.subr.mxu0 0.0
      %1027 = vmatpush1.msra.mxu0 0.0
      %1028 = vmatprep.subr.mxu0 0.0
      %1029 = vmatpush1.msra.mxu0 0.0
      %1030 = vmatprep.subr.mxu0 0.0
      %1031 = vmatpush1.msra.mxu0 0.0
      %1032 = vmatprep.subr.mxu0 0.0
      %1033 = vmatpush1.msra.mxu0 0.0
      %1034 = vmatprep.subr.mxu0 0.0
      %1035 = vmatpush1.msra.mxu0 0.0
      %1036 = vmatprep.subr.mxu0 0.0
      %1037 = vmatpush1.msra.mxu0 0.0
      %1038 = vmatprep.subr.mxu0 0.0
      %1039 = vmatpush1.msra.mxu0 0.0
      %1040 = vmatprep.mubr.f32.mxu0 0.0
      %1041 = vmatmul.mubr.f32.gmra.mrb[0].mxu0 %v974
      %v1042 = vpop.f32.mrb[0].mxu0
      %v1043 = vadd.f32 0.0, %v1042
      %v1044 = vpop.f32.mrb[0].mxu0
      %1045 = vdwg.mxu0
      %v1047 = vsel %vm790, %v972, 0
      %1049 = vmatprep.subr.mxu0 0.0
      %1050 = vmatpush1.msra.mxu0 %v787
      %1051 = vmatprep.subr.mxu0 0.0
      %1052 = vmatpush1.msra.mxu0 0.0
      %1053 = vmatprep.subr.mxu0 0.0
      %1054 = vmatpush1.msra.mxu0 0.0
      %1055 = vmatprep.subr.mxu0 0.0
      %1056 = vmatpush1.msra.mxu0 0.0
      %1057 = vmatprep.subr.mxu0 0.0
      %1058 = vmatpush1.msra.mxu0 0.0
      %1059 = vmatprep.subr.mxu0 0.0
      %1060 = vmatpush1.msra.mxu0 0.0
      %1061 = vmatprep.subr.mxu0 0.0
      %1062 = vmatpush1.msra.mxu0 0.0
      %1063 = vmatprep.subr.mxu0 0.0
      %1064 = vmatpush1.msra.mxu0 0.0
      %1065 = vmatprep.subr.mxu0 0.0
      %1066 = vmatpush1.msra.mxu0 0.0
      %1067 = vmatprep.subr.mxu0 0.0
      %1068 = vmatpush1.msra.mxu0 0.0
      %1069 = vmatprep.subr.mxu0 0.0
      %1070 = vmatpush1.msra.mxu0 0.0
      %1071 = vmatprep.subr.mxu0 0.0
      %1072 = vmatpush1.msra.mxu0 0.0
      %1073 = vmatprep.subr.mxu0 0.0
      %1074 = vmatpush1.msra.mxu0 0.0
      %1075 = vmatprep.subr.mxu0 0.0
      %1076 = vmatpush1.msra.mxu0 0.0
      %1077 = vmatprep.subr.mxu0 0.0
      %1078 = vmatpush1.msra.mxu0 0.0
      %1079 = vmatprep.subr.mxu0 0.0
      %1080 = vmatpush1.msra.mxu0 0.0
      %1081 = vmatprep.subr.mxu0 0.0
      %1082 = vmatpush1.msra.mxu0 0.0
      %1083 = vmatprep.subr.mxu0 0.0
      %1084 = vmatpush1.msra.mxu0 0.0
      %1085 = vmatprep.subr.mxu0 0.0
      %1086 = vmatpush1.msra.mxu0 0.0
      %1087 = vmatprep.subr.mxu0 0.0
      %1088 = vmatpush1.msra.mxu0 0.0
      %1089 = vmatprep.subr.mxu0 0.0
      %1090 = vmatpush1.msra.mxu0 0.0
      %1091 = vmatprep.subr.mxu0 0.0
      %1092 = vmatpush1.msra.mxu0 0.0
      %1093 = vmatprep.subr.mxu0 0.0
      %1094 = vmatpush1.msra.mxu0 0.0
      %1095 = vmatprep.subr.mxu0 0.0
      %1096 = vmatpush1.msra.mxu0 0.0
      %1097 = vmatprep.subr.mxu0 0.0
      %1098 = vmatpush1.msra.mxu0 0.0
      %1099 = vmatprep.subr.mxu0 0.0
      %1100 = vmatpush1.msra.mxu0 0.0
      %1101 = vmatprep.subr.mxu0 0.0
      %1102 = vmatpush1.msra.mxu0 0.0
      %1103 = vmatprep.subr.mxu0 0.0
      %1104 = vmatpush1.msra.mxu0 0.0
      %1105 = vmatprep.subr.mxu0 0.0
      %1106 = vmatpush1.msra.mxu0 0.0
      %1107 = vmatprep.subr.mxu0 0.0
      %1108 = vmatpush1.msra.mxu0 0.0
      %1109 = vmatprep.subr.mxu0 0.0
      %1110 = vmatpush1.msra.mxu0 0.0
      %1111 = vmatprep.subr.mxu0 0.0
      %1112 = vmatpush1.msra.mxu0 0.0
      %1113 = vmatprep.mubr.f32.mxu0 0.0
      %1114 = vmatmul.mubr.f32.gmra.mrb[0].mxu0 %v1047
      %v1115 = vpop.f32.mrb[0].mxu0
      %v1116 = vadd.f32 0.0, %v1115
      %v1117 = vpop.f32.mrb[0].mxu0
      %1118 = vdwg.mxu0
      %1119 = vrot.lane.b32.xlu0 %v606, 120
      %v1120 = vpop.permute.xlu0 %1119
      %1121 = vrot.lane.b32.xlu0 %v695, 120
      %v1122 = vpop.permute.xlu0 %1121
      %v1123 = vsel %vm790, %v1120, 0
      %v1125 = vsel %vm790, %v1122, 0
      %1127 = vmatprep.subr.mxu0 0.0
      %1128 = vmatpush1.xpose.msra.mxu0 %v1125
      %1129 = vmatprep.subr.mxu0 0.0
      %1130 = vmatpush1.xpose.msra.mxu0 0.0
      %1131 = vmatprep.subr.mxu0 0.0
      %1132 = vmatpush1.xpose.msra.mxu0 0.0
      %1133 = vmatprep.subr.mxu0 0.0
      %1134 = vmatpush1.xpose.msra.mxu0 0.0
      %1135 = vmatprep.subr.mxu0 0.0
      %1136 = vmatpush1.xpose.msra.mxu0 0.0
      %1137 = vmatprep.subr.mxu0 0.0
      %1138 = vmatpush1.xpose.msra.mxu0 0.0
      %1139 = vmatprep.subr.mxu0 0.0
      %1140 = vmatpush1.xpose.msra.mxu0 0.0
      %1141 = vmatprep.subr.mxu0 0.0
      %1142 = vmatpush1.xpose.msra.mxu0 0.0
      %1143 = vmatprep.subr.mxu0 0.0
      %1144 = vmatpush1.xpose.msra.mxu0 0.0
      %1145 = vmatprep.subr.mxu0 0.0
      %1146 = vmatpush1.xpose.msra.mxu0 0.0
      %1147 = vmatprep.subr.mxu0 0.0
      %1148 = vmatpush1.xpose.msra.mxu0 0.0
      %1149 = vmatprep.subr.mxu0 0.0
      %1150 = vmatpush1.xpose.msra.mxu0 0.0
      %1151 = vmatprep.subr.mxu0 0.0
      %1152 = vmatpush1.xpose.msra.mxu0 0.0
      %1153 = vmatprep.subr.mxu0 0.0
      %1154 = vmatpush1.xpose.msra.mxu0 0.0
      %1155 = vmatprep.subr.mxu0 0.0
      %1156 = vmatpush1.xpose.msra.mxu0 0.0
      %1157 = vmatprep.subr.mxu0 0.0
      %1158 = vmatpush1.xpose.msra.mxu0 0.0
      %1159 = vmatprep.subr.mxu0 0.0
      %1160 = vmatpush1.xpose.msra.mxu0 0.0
      %1161 = vmatprep.subr.mxu0 0.0
      %1162 = vmatpush1.xpose.msra.mxu0 0.0
      %1163 = vmatprep.subr.mxu0 0.0
      %1164 = vmatpush1.xpose.msra.mxu0 0.0
      %1165 = vmatprep.subr.mxu0 0.0
      %1166 = vmatpush1.xpose.msra.mxu0 0.0
      %1167 = vmatprep.subr.mxu0 0.0
      %1168 = vmatpush1.xpose.msra.mxu0 0.0
      %1169 = vmatprep.subr.mxu0 0.0
      %1170 = vmatpush1.xpose.msra.mxu0 0.0
      %1171 = vmatprep.subr.mxu0 0.0
      %1172 = vmatpush1.xpose.msra.mxu0 0.0
      %1173 = vmatprep.subr.mxu0 0.0
      %1174 = vmatpush1.xpose.msra.mxu0 0.0
      %1175 = vmatprep.subr.mxu0 0.0
      %1176 = vmatpush1.xpose.msra.mxu0 0.0
      %1177 = vmatprep.subr.mxu0 0.0
      %1178 = vmatpush1.xpose.msra.mxu0 0.0
      %1179 = vmatprep.subr.mxu0 0.0
      %1180 = vmatpush1.xpose.msra.mxu0 0.0
      %1181 = vmatprep.subr.mxu0 0.0
      %1182 = vmatpush1.xpose.msra.mxu0 0.0
      %1183 = vmatprep.subr.mxu0 0.0
      %1184 = vmatpush1.xpose.msra.mxu0 0.0
      %1185 = vmatprep.subr.mxu0 0.0
      %1186 = vmatpush1.xpose.msra.mxu0 0.0
      %1187 = vmatprep.subr.mxu0 0.0
      %1188 = vmatpush1.xpose.msra.mxu0 0.0
      %1189 = vmatprep.subr.mxu0 0.0
      %1190 = vmatpush1.xpose.msra.mxu0 0.0
      %1191 = vmatprep.mubr.f32.mxu0 0.0
      %1192 = vmatmul.mubr.f32.gmra.mrb[0].mxu0 %v1123
      %v1193 = vpop.f32.mrb[0].mxu0
      %v1194 = vadd.f32 0.0, %v1193
      %v1195 = vpop.f32.mrb[0].mxu0
      %1196 = vdwg.mxu0
      %1197 = vrot.lane.b32.xlu0 %v609, 120
      %v1198 = vpop.permute.xlu0 %1197
      %1199 = vrot.lane.b32.xlu0 %v698, 120
      %v1200 = vpop.permute.xlu0 %1199
      %v1201 = vsel %vm790, %v1198, 0
      %v1203 = vsel %vm790, %v1200, 0
      %1205 = vmatprep.subr.mxu0 0.0
      %1206 = vmatpush1.xpose.msra.mxu0 %v1203
      %1207 = vmatprep.subr.mxu0 0.0
      %1208 = vmatpush1.xpose.msra.mxu0 0.0
      %1209 = vmatprep.subr.mxu0 0.0
      %1210 = vmatpush1.xpose.msra.mxu0 0.0
      %1211 = vmatprep.subr.mxu0 0.0
      %1212 = vmatpush1.xpose.msra.mxu0 0.0
      %1213 = vmatprep.subr.mxu0 0.0
      %1214 = vmatpush1.xpose.msra.mxu0 0.0
      %1215 = vmatprep.subr.mxu0 0.0
      %1216 = vmatpush1.xpose.msra.mxu0 0.0
      %1217 = vmatprep.subr.mxu0 0.0
      %1218 = vmatpush1.xpose.msra.mxu0 0.0
      %1219 = vmatprep.subr.mxu0 0.0
      %1220 = vmatpush1.xpose.msra.mxu0 0.0
      %1221 = vmatprep.subr.mxu0 0.0
      %1222 = vmatpush1.xpose.msra.mxu0 0.0
      %1223 = vmatprep.subr.mxu0 0.0
      %1224 = vmatpush1.xpose.msra.mxu0 0.0
      %1225 = vmatprep.subr.mxu0 0.0
      %1226 = vmatpush1.xpose.msra.mxu0 0.0
      %1227 = vmatprep.subr.mxu0 0.0
      %1228 = vmatpush1.xpose.msra.mxu0 0.0
      %1229 = vmatprep.subr.mxu0 0.0
      %1230 = vmatpush1.xpose.msra.mxu0 0.0
      %1231 = vmatprep.subr.mxu0 0.0
      %1232 = vmatpush1.xpose.msra.mxu0 0.0
      %1233 = vmatprep.subr.mxu0 0.0
      %1234 = vmatpush1.xpose.msra.mxu0 0.0
      %1235 = vmatprep.subr.mxu0 0.0
      %1236 = vmatpush1.xpose.msra.mxu0 0.0
      %1237 = vmatprep.subr.mxu0 0.0
      %1238 = vmatpush1.xpose.msra.mxu0 0.0
      %1239 = vmatprep.subr.mxu0 0.0
      %1240 = vmatpush1.xpose.msra.mxu0 0.0
      %1241 = vmatprep.subr.mxu0 0.0
      %1242 = vmatpush1.xpose.msra.mxu0 0.0
      %1243 = vmatprep.subr.mxu0 0.0
      %1244 = vmatpush1.xpose.msra.mxu0 0.0
      %1245 = vmatprep.subr.mxu0 0.0
      %1246 = vmatpush1.xpose.msra.mxu0 0.0
      %1247 = vmatprep.subr.mxu0 0.0
      %1248 = vmatpush1.xpose.msra.mxu0 0.0
      %1249 = vmatprep.subr.mxu0 0.0
      %1250 = vmatpush1.xpose.msra.mxu0 0.0
      %1251 = vmatprep.subr.mxu0 0.0
      %1252 = vmatpush1.xpose.msra.mxu0 0.0
      %1253 = vmatprep.subr.mxu0 0.0
      %1254 = vmatpush1.xpose.msra.mxu0 0.0
      %1255 = vmatprep.subr.mxu0 0.0
      %1256 = vmatpush1.xpose.msra.mxu0 0.0
      %1257 = vmatprep.subr.mxu0 0.0
      %1258 = vmatpush1.xpose.msra.mxu0 0.0
      %1259 = vmatprep.subr.mxu0 0.0
      %1260 = vmatpush1.xpose.msra.mxu0 0.0
      %1261 = vmatprep.subr.mxu0 0.0
      %1262 = vmatpush1.xpose.msra.mxu0 0.0
      %1263 = vmatprep.subr.mxu0 0.0
      %1264 = vmatpush1.xpose.msra.mxu0 0.0
      %1265 = vmatprep.subr.mxu0 0.0
      %1266 = vmatpush1.xpose.msra.mxu0 0.0
      %1267 = vmatprep.subr.mxu0 0.0
      %1268 = vmatpush1.xpose.msra.mxu0 0.0
      %1269 = vmatprep.mubr.f32.mxu0 0.0
      %1270 = vmatmul.mubr.f32.gmra.mrb[0].mxu0 %v1201
      %v1271 = vpop.f32.mrb[0].mxu0
      %v1272 = vadd.f32 0.0, %v1271
      %v1273 = vpop.f32.mrb[0].mxu0
      %1274 = vdwg.mxu0
      %v1275 = vsel %vm947, -1e+09, %v1194
      %v1276 = vsel %vm948, -1e+09, %v1272
      %v1277 = vsel %vm790, %v1275, -inf
      %1278 = vmax.xlane.f32.xlu0 %v1277
      %v1279 = vpop.xlane.xlu0 %1278
      %v1280 = vsel %vm790, %v1276, -inf
      %1281 = vmax.xlane.f32.xlu0 %v1280
      %v1282 = vpop.xlane.xlu0 %1281
      %v1283 = vsub.f32 %v1275, %v1279
      %v1284 = vsub.f32 %v1276, %v1282
      %v1285 = vmul.f32 %v1283, 1.442695
      %v1286 = vpow.pop %v1285
      %v1287 = vmul.f32 %v1284, 1.442695
      %v1288 = vpow.pop %v1287
      %v1289 = vsel %vm790, %v1286, 0.0
      %1290 = vadd.xlane.f32.xlu0 %v1289
      %v1291 = vpop.xlane.xlu0 %1290
      %v1292 = vsel %vm790, %v1288, 0.0
      %1293 = vadd.xlane.f32.xlu0 %v1292
      %v1294 = vpop.xlane.xlu0 %1293
      %v1295 = vrcp.pop %v1291
      %v1296 = vrcp.pop %v1294
      %v1297 = vmul.f32 %v1286, %v1295
      %v1298 = vmul.f32 %v1288, %v1296
      %1300 = vrot.lane.b32.xlu0 %v784, 120
      %v1301 = vpop.permute.xlu0 %1300
      %v1304 = vsel %vm790, %v1297, 0
      %1306 = vmatprep.subr.mxu0 0.0
      %1307 = vmatpush1.msra.mxu0 %v1301
      %1308 = vmatprep.subr.mxu0 0.0
      %1309 = vmatpush1.msra.mxu0 0.0
      %1310 = vmatprep.subr.mxu0 0.0
      %1311 = vmatpush1.msra.mxu0 0.0
      %1312 = vmatprep.subr.mxu0 0.0
      %1313 = vmatpush1.msra.mxu0 0.0
      %1314 = vmatprep.subr.mxu0 0.0
      %1315 = vmatpush1.msra.mxu0 0.0
      %1316 = vmatprep.subr.mxu0 0.0
      %1317 = vmatpush1.msra.mxu0 0.0
      %1318 = vmatprep.subr.mxu0 0.0
      %1319 = vmatpush1.msra.mxu0 0.0
      %1320 = vmatprep.subr.mxu0 0.0
      %1321 = vmatpush1.msra.mxu0 0.0
      %1322 = vmatprep.subr.mxu0 0.0
      %1323 = vmatpush1.msra.mxu0 0.0
      %1324 = vmatprep.subr.mxu0 0.0
      %1325 = vmatpush1.msra.mxu0 0.0
      %1326 = vmatprep.subr.mxu0 0.0
      %1327 = vmatpush1.msra.mxu0 0.0
      %1328 = vmatprep.subr.mxu0 0.0
      %1329 = vmatpush1.msra.mxu0 0.0
      %1330 = vmatprep.subr.mxu0 0.0
      %1331 = vmatpush1.msra.mxu0 0.0
      %1332 = vmatprep.subr.mxu0 0.0
      %1333 = vmatpush1.msra.mxu0 0.0
      %1334 = vmatprep.subr.mxu0 0.0
      %1335 = vmatpush1.msra.mxu0 0.0
      %1336 = vmatprep.subr.mxu0 0.0
      %1337 = vmatpush1.msra.mxu0 0.0
      %1338 = vmatprep.subr.mxu0 0.0
      %1339 = vmatpush1.msra.mxu0 0.0
      %1340 = vmatprep.subr.mxu0 0.0
      %1341 = vmatpush1.msra.mxu0 0.0
      %1342 = vmatprep.subr.mxu0 0.0
      %1343 = vmatpush1.msra.mxu0 0.0
      %1344 = vmatprep.subr.mxu0 0.0
      %1345 = vmatpush1.msra.mxu0 0.0
      %1346 = vmatprep.subr.mxu0 0.0
      %1347 = vmatpush1.msra.mxu0 0.0
      %1348 = vmatprep.subr.mxu0 0.0
      %1349 = vmatpush1.msra.mxu0 0.0
      %1350 = vmatprep.subr.mxu0 0.0
      %1351 = vmatpush1.msra.mxu0 0.0
      %1352 = vmatprep.subr.mxu0 0.0
      %1353 = vmatpush1.msra.mxu0 0.0
      %1354 = vmatprep.subr.mxu0 0.0
      %1355 = vmatpush1.msra.mxu0 0.0
      %1356 = vmatprep.subr.mxu0 0.0
      %1357 = vmatpush1.msra.mxu0 0.0
      %1358 = vmatprep.subr.mxu0 0.0
      %1359 = vmatpush1.msra.mxu0 0.0
      %1360 = vmatprep.subr.mxu0 0.0
      %1361 = vmatpush1.msra.mxu0 0.0
      %1362 = vmatprep.subr.mxu0 0.0
      %1363 = vmatpush1.msra.mxu0 0.0
      %1364 = vmatprep.subr.mxu0 0.0
      %1365 = vmatpush1.msra.mxu0 0.0
      %1366 = vmatprep.subr.mxu0 0.0
      %1367 = vmatpush1.msra.mxu0 0.0
      %1368 = vmatprep.subr.mxu0 0.0
      %1369 = vmatpush1.msra.mxu0 0.0
      %1370 = vmatprep.mubr.f32.mxu0 0.0
      %1371 = vmatmul.mubr.f32.gmra.mrb[0].mxu0 %v1304
      %v1372 = vpop.f32.mrb[0].mxu0
      %v1373 = vadd.f32 0.0, %v1372
      %v1374 = vpop.f32.mrb[0].mxu0
      %1375 = vdwg.mxu0
      %1377 = vrot.lane.b32.xlu0 %v787, 120
      %v1378 = vpop.permute.xlu0 %1377
      %v1381 = vsel %vm790, %v1298, 0
      %1383 = vmatprep.subr.mxu0 0.0
      %1384 = vmatpush1.msra.mxu0 %v1378
      %1385 = vmatprep.subr.mxu0 0.0
      %1386 = vmatpush1.msra.mxu0 0.0
      %1387 = vmatprep.subr.mxu0 0.0
      %1388 = vmatpush1.msra.mxu0 0.0
      %1389 = vmatprep.subr.mxu0 0.0
      %1390 = vmatpush1.msra.mxu0 0.0
      %1391 = vmatprep.subr.mxu0 0.0
      %1392 = vmatpush1.msra.mxu0 0.0
      %1393 = vmatprep.subr.mxu0 0.0
      %1394 = vmatpush1.msra.mxu0 0.0
      %1395 = vmatprep.subr.mxu0 0.0
      %1396 = vmatpush1.msra.mxu0 0.0
      %1397 = vmatprep.subr.mxu0 0.0
      %1398 = vmatpush1.msra.mxu0 0.0
      %1399 = vmatprep.subr.mxu0 0.0
      %1400 = vmatpush1.msra.mxu0 0.0
      %1401 = vmatprep.subr.mxu0 0.0
      %1402 = vmatpush1.msra.mxu0 0.0
      %1403 = vmatprep.subr.mxu0 0.0
      %1404 = vmatpush1.msra.mxu0 0.0
      %1405 = vmatprep.subr.mxu0 0.0
      %1406 = vmatpush1.msra.mxu0 0.0
      %1407 = vmatprep.subr.mxu0 0.0
      %1408 = vmatpush1.msra.mxu0 0.0
      %1409 = vmatprep.subr.mxu0 0.0
      %1410 = vmatpush1.msra.mxu0 0.0
      %1411 = vmatprep.subr.mxu0 0.0
      %1412 = vmatpush1.msra.mxu0 0.0
      %1413 = vmatprep.subr.mxu0 0.0
      %1414 = vmatpush1.msra.mxu0 0.0
      %1415 = vmatprep.subr.mxu0 0.0
      %1416 = vmatpush1.msra.mxu0 0.0
      %1417 = vmatprep.subr.mxu0 0.0
      %1418 = vmatpush1.msra.mxu0 0.0
      %1419 = vmatprep.subr.mxu0 0.0
      %1420 = vmatpush1.msra.mxu0 0.0
      %1421 = vmatprep.subr.mxu0 0.0
      %1422 = vmatpush1.msra.mxu0 0.0
      %1423 = vmatprep.subr.mxu0 0.0
      %1424 = vmatpush1.msra.mxu0 0.0
      %1425 = vmatprep.subr.mxu0 0.0
      %1426 = vmatpush1.msra.mxu0 0.0
      %1427 = vmatprep.subr.mxu0 0.0
      %1428 = vmatpush1.msra.mxu0 0.0
      %1429 = vmatprep.subr.mxu0 0.0
      %1430 = vmatpush1.msra.mxu0 0.0
      %1431 = vmatprep.subr.mxu0 0.0
      %1432 = vmatpush1.msra.mxu0 0.0
      %1433 = vmatprep.subr.mxu0 0.0
      %1434 = vmatpush1.msra.mxu0 0.0
      %1435 = vmatprep.subr.mxu0 0.0
      %1436 = vmatpush1.msra.mxu0 0.0
      %1437 = vmatprep.subr.mxu0 0.0
      %1438 = vmatpush1.msra.mxu0 0.0
      %1439 = vmatprep.subr.mxu0 0.0
      %1440 = vmatpush1.msra.mxu0 0.0
      %1441 = vmatprep.subr.mxu0 0.0
      %1442 = vmatpush1.msra.mxu0 0.0
      %1443 = vmatprep.subr.mxu0 0.0
      %1444 = vmatpush1.msra.mxu0 0.0
      %1445 = vmatprep.subr.mxu0 0.0
      %1446 = vmatpush1.msra.mxu0 0.0
      %1447 = vmatprep.mubr.f32.mxu0 0.0
      %1448 = vmatmul.mubr.f32.gmra.mrb[0].mxu0 %v1381
      %v1449 = vpop.f32.mrb[0].mxu0
      %v1450 = vadd.f32 0.0, %v1449
      %v1451 = vpop.f32.mrb[0].mxu0
      %1452 = vdwg.mxu0
      %1455 = vrot.lane.b32.xlu0 %v1373, 8
      %v1456 = vpop.permute.xlu0 %1455
      %1457 = vrot.lane.b32.xlu0 %v1450, 8
      %v1458 = vpop.permute.xlu0 %1457
      %v1461 = vsel %vm790, %v1043, %v1456
      %v1462 = vsel %vm790, %v1116, %v1458
      %v1463 = vpack.c.bf16 %v1462, %v1461
      %v1466 = vunpack.c.l.b16 %v520
      %v1467 = vunpack.c.l.b16 %v521
      %v1468 = vpack.c.b16 %v1467, %v1466
      %vm1470 = vcmask 130048
      %v1472 = vsel %vm1470, %v1463, 0
      %1474 = vmatprep.subr.bf16.mxu0 0
      %1475 = vmatpush1.bf16.msra.mxu0 %v1468
      %1476 = vmatprep.subr.bf16.mxu0 0
      %1477 = vmatpush1.bf16.msra.mxu0 0
      %1478 = vmatprep.subr.bf16.mxu0 0
      %1479 = vmatpush1.bf16.msra.mxu0 0
      %1480 = vmatprep.subr.bf16.mxu0 0
      %1481 = vmatpush1.bf16.msra.mxu0 0
      %1482 = vmatprep.subr.bf16.mxu0 0
      %1483 = vmatpush1.bf16.msra.mxu0 0
      %1484 = vmatprep.subr.bf16.mxu0 0
      %1485 = vmatpush1.bf16.msra.mxu0 0
      %1486 = vmatprep.subr.bf16.mxu0 0
      %1487 = vmatpush1.bf16.msra.mxu0 0
      %1488 = vmatprep.subr.bf16.mxu0 0
      %1489 = vmatpush1.bf16.msra.mxu0 0
      %1490 = vmatprep.subr.bf16.mxu0 0
      %1491 = vmatpush1.bf16.msra.mxu0 0
      %1492 = vmatprep.subr.bf16.mxu0 0
      %1493 = vmatpush1.bf16.msra.mxu0 0
      %1494 = vmatprep.subr.bf16.mxu0 0
      %1495 = vmatpush1.bf16.msra.mxu0 0
      %1496 = vmatprep.subr.bf16.mxu0 0
      %1497 = vmatpush1.bf16.msra.mxu0 0
      %1498 = vmatprep.subr.bf16.mxu0 0
      %1499 = vmatpush1.bf16.msra.mxu0 0
      %1500 = vmatprep.subr.bf16.mxu0 0
      %1501 = vmatpush1.bf16.msra.mxu0 0
      %1502 = vmatprep.subr.bf16.mxu0 0
      %1503 = vmatpush1.bf16.msra.mxu0 0
      %1504 = vmatprep.subr.bf16.mxu0 0
      %1505 = vmatpush1.bf16.msra.mxu0 0
      %1506 = vmatprep.mubr.bf16.mxu0 0
      %1507 = vmatmul.mubr.bf16.gmra.mrb[0].mxu0 %v1472
      %v1508 = vpop.f32.mrb[0].mxu0
      %v1509 = vadd.f32 0.0, %v1508
      %v1510 = vpop.f32.mrb[0].mxu0
      %v1511 = vpop.f32.mrb[0].mxu0
      %v1512 = vadd.f32 0.0, %v1511
      %v1513 = vpop.f32.mrb[0].mxu0
      %1514 = vdwg.mxu0
      %v1515 = vadd.f32 %v460, %v1509
      %v1516 = vadd.f32 %v465, %v1512
      %1517 = vst [vmem:[%s363] sm:$0xff] %v1515
      %1518 = vst [vmem:[%s363 + $0x8] sm:$0xff] %v1516
      %v1519 = vadd.f32 %v1515, %v1516
      %v1520 = vrot.slane %v1519, 4
      %v1521 = vadd.f32 %v1519, %v1520
      %v1522 = vrot.slane %v1521, 2
      %v1523 = vadd.f32 %v1521, %v1522
      %v1524 = vrot.slane %v1523, 1
      %v1525 = vadd.f32 %v1523, %v1524
      %v1526 = vmul.f32 %v1515, %v1515
      %v1527 = vmul.f32 %v1516, %v1516
      %v1528 = vadd.f32 %v1526, %v1527
      %v1529 = vrot.slane %v1528, 4
      %v1530 = vadd.f32 %v1528, %v1529
      %v1531 = vrot.slane %v1530, 2
      %v1532 = vadd.f32 %v1530, %v1531
      %v1533 = vrot.slane %v1532, 1
      %v1534 = vadd.f32 %v1532, %v1533
      %vm1535 = vcmask 1040384
      %v1536 = vsel %vm1535, %v1525, %v1534
      %1537 = vst [vmem:[%s368] sm:$0x3] %v1536
      %s1538 = smul.u32 2, %s21
      %p1539 = scmp.lt.s32.totalorder %s1538, 3
      %s1540 = scalar_select %p1539, %s1538, 3
      %s1541 = smul.addr %s1540, 8
      %s1542 = scalar_lea.vmem %s8, %s1541
      %p1543 = scmp.lt.s32.totalorder %s21, 1
      %s1544 = scalar_select %p1543, %s21, 1
      %s1545 = smul.addr %s1544, 2
      %s1546 = scalar_lea.vmem %s9, %s1545
      // Predicated region
      $region53: #{encoder_forward.5} parent=51 // pred_check
        %p1547 = pneg %p217
      $region54: #{encoder_forward.5} parent=51 // pred_check_branch
        %1549 = sbr.rel (%p1547) target = $region56
      $region55: #{encoder_forward.5} parent=51 // pred_region
        %s1550 = smul.u32 2, %s21
      $region56: #{encoder_forward.5} parent=51 // pred_fallthru
        _
      // Predicated region
      $region57: #{encoder_forward.5} parent=51 // pred_check
        %p1551 = pneg %p243
      $region58: #{encoder_forward.5} parent=51 // pred_check_branch
        %1553 = sbr.rel (%p1551) target = $region60
      $region59: #{encoder_forward.5} parent=51 // pred_region
        _
      $region60: #{encoder_forward.5} parent=51 // pred_fallthru
        _
    $region52: #{encoder_forward.5} parent=5 // pred_fallthru
      _
    %p1554 = scmp.le.s32.totalorder 2, %s16
    // Predicated region
    $region61: #{encoder_forward.5} parent=5 // pred_check
      %p1555 = pneg %p1554
    $region62: #{encoder_forward.5} parent=5 // pred_check_branch
      %1557 = sbr.rel (%p1555) target = $region64
    $region63: #{encoder_forward.5} parent=5 // pred_region
      %s1558 = ssub.s32 %s16, 2
      // Predicated region
      $region65: #{encoder_forward.5} parent=63 // pred_check
        %p1559 = pneg %p223
      $region66: #{encoder_forward.5} parent=63 // pred_check_branch
        %1561 = sbr.rel (%p1559) target = $region68
      $region67: #{encoder_forward.5} parent=63 // pred_region
        %s1562 = smul.u32 2, %s22
        %p1563 = scmp.lt.s32.totalorder %s1562, 3
        %s1564 = scalar_select %p1563, %s1562, 3
        %s1565 = smul.addr %s1564, 8
        %s1566 = scalar_lea.vmem %s8, %s1565
      $region68: #{encoder_forward.5} parent=63 // pred_fallthru
        _
      // Predicated region
      $region69: #{encoder_forward.5} parent=63 // pred_check
        %p1567 = pneg %p249
      $region70: #{encoder_forward.5} parent=63 // pred_check_branch
        %1569 = sbr.rel (%p1567) target = $region72
      $region71: #{encoder_forward.5} parent=63 // pred_region
        %p1570 = scmp.lt.s32.totalorder %s22, 1
        %s1571 = scalar_select %p1570, %s22, 1
        %s1572 = smul.addr %s1571, 2
        %s1573 = scalar_lea.vmem %s9, %s1572
      $region72: #{encoder_forward.5} parent=63 // pred_fallthru
        _
    $region64: #{encoder_forward.5} parent=5 // pred_fallthru
      _
  $region6: #{encoder_forward.5} parent=0 // loop_footer
    %s20 = sadd.s32 1, %s16
  $region7: #{encoder_forward.5} parent=0 // loop_footer_branch
    %15 = sbr.rel target = $region3
  $region8: #{encoder_forward.5} parent=0 // loop_exit
    _

// kernel: encoder_forward.7
$region0: #{encoder_forward.7}
  #allocation0 [shape = 'u32[]', space=smem, size = 0x4, offset = 0x4, fixed_abs, tag = 'smem constant byte address 0x4 - core index']
  #allocation1 [shape = 'u32[144,128]{1,0:T(1,128)}', space=vmem, size = 0x12000, scoped, tag = 'internal scratch']
  %s0 = inlined_call_operand.vmem [shape: f32[4,8,128], index: 0, kind: input, shape index: {}]
  %s1 = inlined_call_operand.vmem [shape: f32[1,128], index: 1, kind: input, shape index: {}]
  %s2 = inlined_call_operand.vmem [shape: f32[1,128], index: 2, kind: input, shape index: {}]
  %s3 = inlined_call_operand.vmem [shape: bf16[128,16], index: 3, kind: input, shape index: {}]
  %s4 = inlined_call_operand.vmem [shape: bf16[128,16], index: 4, kind: input, shape index: {}]
  %s5 = inlined_call_operand.vmem [shape: bf16[128,16], index: 5, kind: input, shape index: {}]
  %s6 = inlined_call_operand.vmem [shape: bf16[16,128], index: 6, kind: input, shape index: {}]
  %s7 = inlined_call_operand.vmem [shape: f32[4,8,128], index: 7, kind: output, shape index: {0}]
  %s8 = inlined_call_operand.vmem [shape: f32[2,2,128], index: 8, kind: output, shape index: {1}]
  %9 = xla_tuple %s7, %s8
  %s10 = sld [smem:[#allocation0]]
  $region69: #{encoder_forward.7} parent=0
    _
  %s12 = ssub.s32 1, %s10
  %s13 = scalar_select 0, %s12, %s10
  loop: start=0, step=1, limit=4
  $region2: #{encoder_forward.7} parent=0 // loop_pre_header
    _
  $region3: #{encoder_forward.7} parent=0 // loop_header
    %s15 = sphi 0, %s19
    %p16 = scmp.ge.s32.totalorder %s15, 4
    %s25 = sphi 0, %s27
    %s28 = sphi 0, %s25
    %s29 = sphi 0, %s28
    %s45 = sphi 0, %s29
    %s49 = sphi 0, %s49
    %s51 = sphi 0, %s49
    %s52 = sphi 0, %s51
    %s66 = sphi 0, %s52
    %s70 = sphi 0, %s70
    %s72 = sphi 0, %s70
    %s73 = sphi 0, %s72
    %s87 = sphi 0, %s73
    %s91 = sphi 0, %s91
    %s93 = sphi 0, %s91
    %s94 = sphi 0, %s93
    %s108 = sphi 0, %s94
    %s112 = sphi 0, %s112
    %s114 = sphi 0, %s112
    %s115 = sphi 0, %s114
    %s129 = sphi 0, %s115
    %s133 = sphi 0, %s133
    %s135 = sphi 0, %s133
    %s136 = sphi 0, %s135
    %s150 = sphi 0, %s136
    %s154 = sphi 0, %s154
    %s156 = sphi 0, %s154
    %s157 = sphi 0, %s156
    %s171 = sphi 0, %s157
    %s177 = sphi 0, %s179
    %s180 = sphi 0, %s177
    %s181 = sphi 0, %s180
    %s197 = sphi 0, %s181
    %s203 = sphi 0, %s205
    %s206 = sphi 0, %s203
    %s207 = sphi 0, %s206
    %s223 = sphi 0, %s207
  $region4: #{encoder_forward.7} parent=0 // loop_header_branch
    %18 = sbr.rel (%p16) target = $region8
  $region5: #{encoder_forward.7} parent=0 // loop_body
    %s20 = ssub.s32 %s15, 1
    %s21 = ssub.s32 %s15, 2
    %s22 = sadd.s32 %s15, 1
    %s23 = ssub.s32 %s15, %s22
    %p24 = scmp.eq.s32.totalorder %s23, 0
    %s26 = sadd.s32 %s25, 1
    %s27 = scalar_select %p24, %s25, %s26
    %p30 = pneg %p24
    %p31 = scmp.eq.s32.totalorder %s15, 1
    %p32 = por %p30, %p31
    %p33 = scmp.ne.s32.totalorder %s25, %s28
    %p34 = scmp.eq.s32.totalorder %s15, 0
    %p35 = por %p33, %p34
    %p36 = scmp.ne.s32.totalorder %s25, %s28
    %p37 = scmp.eq.s32.totalorder %s20, 1
    %p38 = por %p36, %p37
    %p39 = scmp.ne.s32.totalorder %s28, %s29
    %p40 = scmp.eq.s32.totalorder %s20, 0
    %p41 = por %p39, %p40
    %p42 = scmp.ne.s32.totalorder %s28, %s29
    %p43 = scmp.eq.s32.totalorder %s21, 1
    %p44 = por %p42, %p43
    %p46 = scmp.ne.s32.totalorder %s29, %s45
    %p47 = scmp.eq.s32.totalorder %s21, 0
    %p48 = por %p46, %p47
    %s50 = sadd.s32 %s49, 1
    %p53 = scmp.eq.s32.totalorder %s15, 1
    %p54 = scmp.ne.s32.totalorder %s49, %s51
    %p55 = scmp.eq.s32.totalorder %s15, 0
    %p56 = por %p54, %p55
    %p57 = scmp.ne.s32.totalorder %s49, %s51
    %p58 = scmp.eq.s32.totalorder %s20, 1
    %p59 = por %p57, %p58
    %p60 = scmp.ne.s32.totalorder %s51, %s52
    %p61 = scmp.eq.s32.totalorder %s20, 0
    %p62 = por %p60, %p61
    %p63 = scmp.ne.s32.totalorder %s51, %s52
    %p64 = scmp.eq.s32.totalorder %s21, 1
    %p65 = por %p63, %p64
    %p67 = scmp.ne.s32.totalorder %s52, %s66
    %p68 = scmp.eq.s32.totalorder %s21, 0
    %p69 = por %p67, %p68
    %s71 = sadd.s32 %s70, 1
    %p74 = scmp.eq.s32.totalorder %s15, 1
    %p75 = scmp.ne.s32.totalorder %s70, %s72
    %p76 = scmp.eq.s32.totalorder %s15, 0
    %p77 = por %p75, %p76
    %p78 = scmp.ne.s32.totalorder %s70, %s72
    %p79 = scmp.eq.s32.totalorder %s20, 1
    %p80 = por %p78, %p79
    %p81 = scmp.ne.s32.totalorder %s72, %s73
    %p82 = scmp.eq.s32.totalorder %s20, 0
    %p83 = por %p81, %p82
    %p84 = scmp.ne.s32.totalorder %s72, %s73
    %p85 = scmp.eq.s32.totalorder %s21, 1
    %p86 = por %p84, %p85
    %p88 = scmp.ne.s32.totalorder %s73, %s87
    %p89 = scmp.eq.s32.totalorder %s21, 0
    %p90 = por %p88, %p89
    %s92 = sadd.s32 %s91, 1
    %p95 = scmp.eq.s32.totalorder %s15, 1
    %p96 = scmp.ne.s32.totalorder %s91, %s93
    %p97 = scmp.eq.s32.totalorder %s15, 0
    %p98 = por %p96, %p97
    %p99 = scmp.ne.s32.totalorder %s91, %s93
    %p100 = scmp.eq.s32.totalorder %s20, 1
    %p101 = por %p99, %p100
    %p102 = scmp.ne.s32.totalorder %s93, %s94
    %p103 = scmp.eq.s32.totalorder %s20, 0
    %p104 = por %p102, %p103
    %p105 = scmp.ne.s32.totalorder %s93, %s94
    %p106 = scmp.eq.s32.totalorder %s21, 1
    %p107 = por %p105, %p106
    %p109 = scmp.ne.s32.totalorder %s94, %s108
    %p110 = scmp.eq.s32.totalorder %s21, 0
    %p111 = por %p109, %p110
    %s113 = sadd.s32 %s112, 1
    %p116 = scmp.eq.s32.totalorder %s15, 1
    %p117 = scmp.ne.s32.totalorder %s112, %s114
    %p118 = scmp.eq.s32.totalorder %s15, 0
    %p119 = por %p117, %p118
    %p120 = scmp.ne.s32.totalorder %s112, %s114
    %p121 = scmp.eq.s32.totalorder %s20, 1
    %p122 = por %p120, %p121
    %p123 = scmp.ne.s32.totalorder %s114, %s115
    %p124 = scmp.eq.s32.totalorder %s20, 0
    %p125 = por %p123, %p124
    %p126 = scmp.ne.s32.totalorder %s114, %s115
    %p127 = scmp.eq.s32.totalorder %s21, 1
    %p128 = por %p126, %p127
    %p130 = scmp.ne.s32.totalorder %s115, %s129
    %p131 = scmp.eq.s32.totalorder %s21, 0
    %p132 = por %p130, %p131
    %s134 = sadd.s32 %s133, 1
    %p137 = scmp.eq.s32.totalorder %s15, 1
    %p138 = scmp.ne.s32.totalorder %s133, %s135
    %p139 = scmp.eq.s32.totalorder %s15, 0
    %p140 = por %p138, %p139
    %p141 = scmp.ne.s32.totalorder %s133, %s135
    %p142 = scmp.eq.s32.totalorder %s20, 1
    %p143 = por %p141, %p142
    %p144 = scmp.ne.s32.totalorder %s135, %s136
    %p145 = scmp.eq.s32.totalorder %s20, 0
    %p146 = por %p144, %p145
    %p147 = scmp.ne.s32.totalorder %s135, %s136
    %p148 = scmp.eq.s32.totalorder %s21, 1
    %p149 = por %p147, %p148
    %p151 = scmp.ne.s32.totalorder %s136, %s150
    %p152 = scmp.eq.s32.totalorder %s21, 0
    %p153 = por %p151, %p152
    %s155 = sadd.s32 %s154, 1
    %p158 = scmp.eq.s32.totalorder %s15, 1
    %p159 = scmp.ne.s32.totalorder %s154, %s156
    %p160 = scmp.eq.s32.totalorder %s15, 0
    %p161 = por %p159, %p160
    %p162 = scmp.ne.s32.totalorder %s154, %s156
    %p163 = scmp.eq.s32.totalorder %s20, 1
    %p164 = por %p162, %p163
    %p165 = scmp.ne.s32.totalorder %s156, %s157
    %p166 = scmp.eq.s32.totalorder %s20, 0
    %p167 = por %p165, %p166
    %p168 = scmp.ne.s32.totalorder %s156, %s157
    %p169 = scmp.eq.s32.totalorder %s21, 1
    %p170 = por %p168, %p169
    %p172 = scmp.ne.s32.totalorder %s157, %s171
    %p173 = scmp.eq.s32.totalorder %s21, 0
    %p174 = por %p172, %p173
    %s175 = ssub.s32 %s15, %s22
    %p176 = scmp.eq.s32.totalorder %s175, 0
    %s178 = sadd.s32 %s177, 1
    %s179 = scalar_select %p176, %s177, %s178
    %p182 = pneg %p176
    %p183 = scmp.eq.s32.totalorder %s15, 1
    %p184 = por %p182, %p183
    %p185 = scmp.ne.s32.totalorder %s177, %s180
    %p186 = scmp.eq.s32.totalorder %s15, 0
    %p187 = por %p185, %p186
    %p188 = scmp.ne.s32.totalorder %s177, %s180
    %p189 = scmp.eq.s32.totalorder %s20, 1
    %p190 = por %p188, %p189
    %p191 = scmp.ne.s32.totalorder %s180, %s181
    %p192 = scmp.eq.s32.totalorder %s20, 0
    %p193 = por %p191, %p192
    %p194 = scmp.ne.s32.totalorder %s180, %s181
    %p195 = scmp.eq.s32.totalorder %s21, 1
    %p196 = por %p194, %p195
    %p198 = scmp.ne.s32.totalorder %s181, %s197
    %p199 = scmp.eq.s32.totalorder %s21, 0
    %p200 = por %p198, %p199
    %s201 = ssub.s32 %s15, %s22
    %p202 = scmp.eq.s32.totalorder %s201, 0
    %s204 = sadd.s32 %s203, 1
    %s205 = scalar_select %p202, %s203, %s204
    %p208 = pneg %p202
    %p209 = scmp.eq.s32.totalorder %s15, 1
    %p210 = por %p208, %p209
    %p211 = scmp.ne.s32.totalorder %s203, %s206
    %p212 = scmp.eq.s32.totalorder %s15, 0
    %p213 = por %p211, %p212
    %p214 = scmp.ne.s32.totalorder %s203, %s206
    %p215 = scmp.eq.s32.totalorder %s20, 1
    %p216 = por %p214, %p215
    %p217 = scmp.ne.s32.totalorder %s206, %s207
    %p218 = scmp.eq.s32.totalorder %s20, 0
    %p219 = por %p217, %p218
    %p220 = scmp.ne.s32.totalorder %s206, %s207
    %p221 = scmp.eq.s32.totalorder %s21, 1
    %p222 = por %p220, %p221
    %p224 = scmp.ne.s32.totalorder %s207, %s223
    %p225 = scmp.eq.s32.totalorder %s21, 0
    %p226 = por %p224, %p225
    %p227 = scmp.le.s32.totalorder 1, %s15
    %p228 = scmp.lt.s32.totalorder %s15, 3
    %p229 = pnand %p227, %p228
    %p230 = pneg %p229
    // Predicated region
    $region9: #{encoder_forward.7} parent=5 // pred_check
      _
    $region10: #{encoder_forward.7} parent=5 // pred_check_branch
      %232 = sbr.rel (%p229) target = $region12
    $region11: #{encoder_forward.7} parent=5 // pred_region
      %s233 = ssub.s32 %s15, 1
      // Predicated region
      $region13: #{encoder_forward.7} parent=11 // pred_check
        %p234 = pneg %p62
      $region14: #{encoder_forward.7} parent=11 // pred_check_branch
        %236 = sbr.rel (%p234) target = $region16
      $region15: #{encoder_forward.7} parent=11 // pred_region
        _
      $region16: #{encoder_forward.7} parent=11 // pred_fallthru
        _
      // Predicated region
      $region17: #{encoder_forward.7} parent=11 // pred_check
        %p237 = pneg %p83
      $region18: #{encoder_forward.7} parent=11 // pred_check_branch
        %239 = sbr.rel (%p237) target = $region20
      $region19: #{encoder_forward.7} parent=11 // pred_region
        _
      $region20: #{encoder_forward.7} parent=11 // pred_fallthru
        _
      // Predicated region
      $region21: #{encoder_forward.7} parent=11 // pred_check
        %p240 = pneg %p104
      $region22: #{encoder_forward.7} parent=11 // pred_check_branch
        %242 = sbr.rel (%p240) target = $region24
      $region23: #{encoder_forward.7} parent=11 // pred_region
        _
      $region24: #{encoder_forward.7} parent=11 // pred_fallthru
        _
      // Predicated region
      $region25: #{encoder_forward.7} parent=11 // pred_check
        %p243 = pneg %p125
      $region26: #{encoder_forward.7} parent=11 // pred_check_branch
        %245 = sbr.rel (%p243) target = $region28
      $region27: #{encoder_forward.7} parent=11 // pred_region
        _
      $region28: #{encoder_forward.7} parent=11 // pred_fallthru
        _
      // Predicated region
      $region29: #{encoder_forward.7} parent=11 // pred_check
        %p246 = pneg %p146
      $region30: #{encoder_forward.7} parent=11 // pred_check_branch
        %248 = sbr.rel (%p246) target = $region32
      $region31: #{encoder_forward.7} parent=11 // pred_region
        _
      $region32: #{encoder_forward.7} parent=11 // pred_fallthru
        _
      // Predicated region
      $region33: #{encoder_forward.7} parent=11 // pred_check
        %p249 = pneg %p167
      $region34: #{encoder_forward.7} parent=11 // pred_check_branch
        %251 = sbr.rel (%p249) target = $region36
      $region35: #{encoder_forward.7} parent=11 // pred_region
        _
      $region36: #{encoder_forward.7} parent=11 // pred_fallthru
        _
    $region12: #{encoder_forward.7} parent=5 // pred_fallthru
      _
    %p252 = scmp.lt.s32.totalorder %s15, 2
    // Predicated region
    $region37: #{encoder_forward.7} parent=5 // pred_check
      %p253 = pneg %p252
    $region38: #{encoder_forward.7} parent=5 // pred_check_branch
      %255 = sbr.rel (%p253) target = $region40
    $region39: #{encoder_forward.7} parent=5 // pred_region
      // Predicated region
      $region41: #{encoder_forward.7} parent=39 // pred_check
        %p256 = pneg %p35
      $region42: #{encoder_forward.7} parent=39 // pred_check_branch
        %258 = sbr.rel (%p256) target = $region44
      $region43: #{encoder_forward.7} parent=39 // pred_region
        %s259 = smul.u32 2, %s15
        %p260 = scmp.lt.s32.totalorder %s259, 3
        %s261 = scalar_select %p260, %s259, 3
        %s262 = smul.addr %s261, 8
        %s263 = scalar_lea.vmem %s0, %s262
        %s264 = smul.u32 2, %s15
      $region44: #{encoder_forward.7} parent=39 // pred_fallthru
        _
    $region40: #{encoder_forward.7} parent=5 // pred_fallthru
      _
    %p265 = scmp.le.s32.totalorder 1, %s15
    %p266 = scmp.lt.s32.totalorder %s15, 3
    %p267 = pnand %p265, %p266
    %p268 = pneg %p267
    // Predicated region
    $region45: #{encoder_forward.7} parent=5 // pred_check
      _
    $region46: #{encoder_forward.7} parent=5 // pred_check_branch
      %270 = sbr.rel (%p267) target = $region48
    $region47: #{encoder_forward.7} parent=5 // pred_region
      %s271 = ssub.s32 %s15, 1
      %s272 = smul.u32 2, %s20
      %p273 = scmp.lt.s32.totalorder %s272, 3
      %s274 = scalar_select %p273, %s272, 3
      %s275 = smul.addr %s274, 8
      %s276 = scalar_lea.vmem %s0, %s275
      %p277 = pneg %p41
      %p278 = pneg %p38
      %p279 = pneg %p62
      %p280 = pneg %p59
      %p281 = pneg %p83
      %p282 = pneg %p80
      %p283 = pneg %p104
      %p284 = pneg %p101
      %p285 = pneg %p125
      %p286 = pneg %p122
      %p287 = pneg %p146
      %p288 = pneg %p143
      %p289 = pneg %p167
      %p290 = pneg %p164
      %p291 = pneg %p193
      %p292 = pneg %p190
      %s293 = smul.u32 2, %s20
      %p294 = scmp.lt.s32.totalorder %s293, 3
      %s295 = scalar_select %p294, %s293, 3
      %s296 = smul.addr %s295, 8
      %s297 = scalar_lea.vmem %s7, %s296
      %p298 = pneg %p219
      %p299 = pneg %p216
      %p300 = scmp.lt.s32.totalorder %s20, 1
      %s301 = scalar_select %p300, %s20, 1
      %s302 = smul.addr %s301, 2
      %s303 = scalar_lea.vmem %s8, %s302
      %s304 = smul.u32 2, %s20
      %p305 = scmp.lt.s32.totalorder %s304, 3
      %s306 = scalar_select %p305, %s304, 3
      %s307 = smul.addr %s306, 8
      %s308 = scalar_lea.vmem %s0, %s307
      %s309 = smul.u32 2, %s20
      %s310 = smul.u32 2, %s20
      %p311 = scmp.lt.s32.totalorder %s310, 3
      %s312 = scalar_select %p311, %s310, 3
      %s313 = smul.addr %s312, 8
      %s314 = scalar_lea.vmem %s7, %s313
      %s315 = smul.u32 2, %s20
      %p316 = scmp.lt.s32.totalorder %s20, 1
      %s317 = scalar_select %p316, %s20, 1
      %s318 = smul.addr %s317, 2
      %s319 = scalar_lea.vmem %s8, %s318
      %v321 = vld [vmem:[%s308] sm:$0xff]
      %v322 = vld [vmem:[%s308 + $0x8] sm:$0xff]
      %v323 = vld [vmem:[%s1] sm:$0x1]
      %v325 = vlaneseq
      %v326 = vshrl.u32 %v325, 7
      %v327 = vsub.s32 0, %v326
      %v328 = vrot.slane %v323, %v327
      %v330 = vmul.f32 %v321, %v328
      %v331 = vmul.f32 %v322, %v328
      %v332 = vld [vmem:[%s2] sm:$0x1]
      %v334 = vlaneseq
      %v335 = vshrl.u32 %v334, 7
      %v336 = vsub.s32 0, %v335
      %v337 = vrot.slane %v332, %v336
      %v339 = vadd.f32 %v330, %v337
      %v340 = vadd.f32 %v331, %v337
      %v341 = vld [vmem:[%s3] sm:$0xf]
      %v342 = vld [vmem:[%s3 + $0x4] sm:$0xf]
      %v343 = vld [vmem:[%s3 + $0x8] sm:$0xf]
      %v344 = vld [vmem:[%s3 + $0xc] sm:$0xf]
      %v345 = vld [vmem:[%s3 + $0x10] sm:$0xf]
      %v346 = vld [vmem:[%s3 + $0x14] sm:$0xf]
      %v347 = vld [vmem:[%s3 + $0x18] sm:$0xf]
      %v348 = vld [vmem:[%s3 + $0x1c] sm:$0xf]
      %v349 = vld [vmem:[%s3 + $0x20] sm:$0xf]
      %v350 = vld [vmem:[%s3 + $0x24] sm:$0xf]
      %v351 = vld [vmem:[%s3 + $0x28] sm:$0xf]
      %v352 = vld [vmem:[%s3 + $0x2c] sm:$0xf]
      %v353 = vld [vmem:[%s3 + $0x30] sm:$0xf]
      %v354 = vld [vmem:[%s3 + $0x34] sm:$0xf]
      %v355 = vld [vmem:[%s3 + $0x38] sm:$0xf]
      %v356 = vld [vmem:[%s3 + $0x3c] sm:$0xf]
      %v357 = vld [vmem:[%s4] sm:$0xf]
      %v358 = vld [vmem:[%s4 + $0x4] sm:$0xf]
      %v359 = vld [vmem:[%s4 + $0x8] sm:$0xf]
      %v360 = vld [vmem:[%s4 + $0xc] sm:$0xf]
      %v361 = vld [vmem:[%s4 + $0x10] sm:$0xf]
      %v362 = vld [vmem:[%s4 + $0x14] sm:$0xf]
      %v363 = vld [vmem:[%s4 + $0x18] sm:$0xf]
      %v364 = vld [vmem:[%s4 + $0x1c] sm:$0xf]
      %v365 = vld [vmem:[%s4 + $0x20] sm:$0xf]
      %v366 = vld [vmem:[%s4 + $0x24] sm:$0xf]
      %v367 = vld [vmem:[%s4 + $0x28] sm:$0xf]
      %v368 = vld [vmem:[%s4 + $0x2c] sm:$0xf]
      %v369 = vld [vmem:[%s4 + $0x30] sm:$0xf]
      %v370 = vld [vmem:[%s4 + $0x34] sm:$0xf]
      %v371 = vld [vmem:[%s4 + $0x38] sm:$0xf]
      %v372 = vld [vmem:[%s4 + $0x3c] sm:$0xf]
      %v373 = vld [vmem:[%s5] sm:$0xf]
      %v374 = vld [vmem:[%s5 + $0x4] sm:$0xf]
      %v375 = vld [vmem:[%s5 + $0x8] sm:$0xf]
      %v376 = vld [vmem:[%s5 + $0xc] sm:$0xf]
      %v377 = vld [vmem:[%s5 + $0x10] sm:$0xf]
      %v378 = vld [vmem:[%s5 + $0x14] sm:$0xf]
      %v379 = vld [vmem:[%s5 + $0x18] sm:$0xf]
      %v380 = vld [vmem:[%s5 + $0x1c] sm:$0xf]
      %v381 = vld [vmem:[%s5 + $0x20] sm:$0xf]
      %v382 = vld [vmem:[%s5 + $0x24] sm:$0xf]
      %v383 = vld [vmem:[%s5 + $0x28] sm:$0xf]
      %v384 = vld [vmem:[%s5 + $0x2c] sm:$0xf]
      %v385 = vld [vmem:[%s5 + $0x30] sm:$0xf]
      %v386 = vld [vmem:[%s5 + $0x34] sm:$0xf]
      %v387 = vld [vmem:[%s5 + $0x38] sm:$0xf]
      %v388 = vld [vmem:[%s5 + $0x3c] sm:$0xf]
      %v389 = vld [vmem:[%s6] sm:$0xf]
      %v390 = vld [vmem:[%s6 + $0x4] sm:$0xf]
      %v391 = vpack.c.bf16 %v340, %v339
      %v408 = vunpack.c.l.b16 %v341
      %v409 = vunpack.c.l.b16 %v342
      %v410 = vunpack.c.l.b16 %v343
      %v411 = vunpack.c.l.b16 %v344
      %v412 = vunpack.c.l.b16 %v345
      %v413 = vunpack.c.l.b16 %v346
      %v414 = vunpack.c.l.b16 %v347
      %v415 = vunpack.c.l.b16 %v348
      %v416 = vunpack.c.l.b16 %v349
      %v417 = vunpack.c.l.b16 %v350
      %v418 = vunpack.c.l.b16 %v351
      %v419 = vunpack.c.l.b16 %v352
      %v420 = vunpack.c.l.b16 %v353
      %v421 = vunpack.c.l.b16 %v354
      %v422 = vunpack.c.l.b16 %v355
      %v423 = vunpack.c.l.b16 %v356
      %v424 = vpack.c.b16 %v409, %v408
      %v425 = vpack.c.b16 %v411, %v410
      %v426 = vpack.c.b16 %v413, %v412
      %v427 = vpack.c.b16 %v415, %v414
      %v428 = vpack.c.b16 %v417, %v416
      %v429 = vpack.c.b16 %v419, %v418
      %v430 = vpack.c.b16 %v421, %v420
      %v431 = vpack.c.b16 %v423, %v422
      %440 = vmatprep.subr.bf16.mxu0 0
      %441 = vmatpush1.bf16.msra.mxu0 %v424
      %442 = vmatprep.subr.bf16.mxu0 0
      %443 = vmatpush1.bf16.msra.mxu0 %v425
      %444 = vmatprep.subr.bf16.mxu0 0
      %445 = vmatpush1.bf16.msra.mxu0 %v426
      %446 = vmatprep.subr.bf16.mxu0 0
      %447 = vmatpush1.bf16.msra.mxu0 %v427
      %448 = vmatprep.subr.bf16.mxu0 0
      %449 = vmatpush1.bf16.msra.mxu0 %v428
      %450 = vmatprep.subr.bf16.mxu0 0
      %451 = vmatpush1.bf16.msra.mxu0 %v429
      %452 = vmatprep.subr.bf16.mxu0 0
      %453 = vmatpush1.bf16.msra.mxu0 %v430
      %454 = vmatprep.subr.bf16.mxu0 0
      %455 = vmatpush1.bf16.msra.mxu0 %v431
      %456 = vmatprep.subr.bf16.mxu0 0
      %457 = vmatpush1.bf16.msra.mxu0 0
      %458 = vmatprep.subr.bf16.mxu0 0
      %459 = vmatpush1.bf16.msra.mxu0 0
      %460 = vmatprep.subr.bf16.mxu0 0
      %461 = vmatpush1.bf16.msra.mxu0 0
      %462 = vmatprep.subr.bf16.mxu0 0
      %463 = vmatpush1.bf16.msra.mxu0 0
      %464 = vmatprep.subr.bf16.mxu0 0
      %465 = vmatpush1.bf16.msra.mxu0 0
      %466 = vmatprep.subr.bf16.mxu0 0
      %467 = vmatpush1.bf16.msra.mxu0 0
      %468 = vmatprep.subr.bf16.mxu0 0
      %469 = vmatpush1.bf16.msra.mxu0 0
      %470 = vmatprep.subr.bf16.mxu0 0
      %471 = vmatpush1.bf16.msra.mxu0 0
      %472 = vmatprep.mubr.bf16.mxu0 0
      %473 = vmatmul.mubr.bf16.gmra.mrb[0].mxu0 %v391
      %v474 = vpop.f32.mrb[0].mxu0
      %v475 = vadd.f32 0.0, %v474
      %v476 = vpop.f32.mrb[0].mxu0
      %v477 = vpop.f32.mrb[0].mxu0
      %v478 = vadd.f32 0.0, %v477
      %v479 = vpop.f32.mrb[0].mxu0
      %480 = vdwg.mxu0
      %v497 = vunpack.c.l.b16 %v357
      %v498 = vunpack.c.l.b16 %v358
      %v499 = vunpack.c.l.b16 %v359
      %v500 = vunpack.c.l.b16 %v360
      %v501 = vunpack.c.l.b16 %v361
      %v502 = vunpack.c.l.b16 %v362
      %v503 = vunpack.c.l.b16 %v363
      %v504 = vunpack.c.l.b16 %v364
      %v505 = vunpack.c.l.b16 %v365
      %v506 = vunpack.c.l.b16 %v366
      %v507 = vunpack.c.l.b16 %v367
      %v508 = vunpack.c.l.b16 %v368
      %v509 = vunpack.c.l.b16 %v369
      %v510 = vunpack.c.l.b16 %v370
      %v511 = vunpack.c.l.b16 %v371
      %v512 = vunpack.c.l.b16 %v372
      %v513 = vpack.c.b16 %v498, %v497
      %v514 = vpack.c.b16 %v500, %v499
      %v515 = vpack.c.b16 %v502, %v501
      %v516 = vpack.c.b16 %v504, %v503
      %v517 = vpack.c.b16 %v506, %v505
      %v518 = vpack.c.b16 %v508, %v507
      %v519 = vpack.c.b16 %v510, %v509
      %v520 = vpack.c.b16 %v512, %v511
      %529 = vmatprep.subr.bf16.mxu0 0
      %530 = vmatpush1.bf16.msra.mxu0 %v513
      %531 = vmatprep.subr.bf16.mxu0 0
      %532 = vmatpush1.bf16.msra.mxu0 %v514
      %533 = vmatprep.subr.bf16.mxu0 0
      %534 = vmatpush1.bf16.msra.mxu0 %v515
      %535 = vmatprep.subr.bf16.mxu0 0
      %536 = vmatpush1.bf16.msra.mxu0 %v516
      %537 = vmatprep.subr.bf16.mxu0 0
      %538 = vmatpush1.bf16.msra.mxu0 %v517
      %539 = vmatprep.subr.bf16.mxu0 0
      %540 = vmatpush1.bf16.msra.mxu0 %v518
      %541 = vmatprep.subr.bf16.mxu0 0
      %542 = vmatpush1.bf16.msra.mxu0 %v519
      %543 = vmatprep.subr.bf16.mxu0 0
      %544 = vmatpush1.bf16.msra.mxu0 %v520
      %545 = vmatprep.subr.bf16.mxu0 0
      %546 = vmatpush1.bf16.msra.mxu0 0
      %547 = vmatprep.subr.bf16.mxu0 0
      %548 = vmatpush1.bf16.msra.mxu0 0
      %549 = vmatprep.subr.bf16.mxu0 0
      %550 = vmatpush1.bf16.msra.mxu0 0
      %551 = vmatprep.subr.bf16.mxu0 0
      %552 = vmatpush1.bf16.msra.mxu0 0
      %553 = vmatprep.subr.bf16.mxu0 0
      %554 = vmatpush1.bf16.msra.mxu0 0
      %555 = vmatprep.subr.bf16.mxu0 0
      %556 = vmatpush1.bf16.msra.mxu0 0
      %557 = vmatprep.subr.bf16.mxu0 0
      %558 = vmatpush1.bf16.msra.mxu0 0
      %559 = vmatprep.subr.bf16.mxu0 0
      %560 = vmatpush1.bf16.msra.mxu0 0
      %561 = vmatprep.mubr.bf16.mxu0 0
      %562 = vmatmul.mubr.bf16.gmra.mrb[0].mxu0 %v391
      %v563 = vpop.f32.mrb[0].mxu0
      %v564 = vadd.f32 0.0, %v563
      %v565 = vpop.f32.mrb[0].mxu0
      %v566 = vpop.f32.mrb[0].mxu0
      %v567 = vadd.f32 0.0, %v566
      %v568 = vpop.f32.mrb[0].mxu0
      %569 = vdwg.mxu0
      %v586 = vunpack.c.l.b16 %v373
      %v587 = vunpack.c.l.b16 %v374
      %v588 = vunpack.c.l.b16 %v375
      %v589 = vunpack.c.l.b16 %v376
      %v590 = vunpack.c.l.b16 %v377
      %v591 = vunpack.c.l.b16 %v378
      %v592 = vunpack.c.l.b16 %v379
      %v593 = vunpack.c.l.b16 %v380
      %v594 = vunpack.c.l.b16 %v381
      %v595 = vunpack.c.l.b16 %v382
      %v596 = vunpack.c.l.b16 %v383
      %v597 = vunpack.c.l.b16 %v384
      %v598 = vunpack.c.l.b16 %v385
      %v599 = vunpack.c.l.b16 %v386
      %v600 = vunpack.c.l.b16 %v387
      %v601 = vunpack.c.l.b16 %v388
      %v602 = vpack.c.b16 %v587, %v586
      %v603 = vpack.c.b16 %v589, %v588
      %v604 = vpack.c.b16 %v591, %v590
      %v605 = vpack.c.b16 %v593, %v592
      %v606 = vpack.c.b16 %v595, %v594
      %v607 = vpack.c.b16 %v597, %v596
      %v608 = vpack.c.b16 %v599, %v598
      %v609 = vpack.c.b16 %v601, %v600
      %618 = vmatprep.subr.bf16.mxu0 0
      %619 = vmatpush1.bf16.msra.mxu0 %v602
      %620 = vmatprep.subr.bf16.mxu0 0
      %621 = vmatpush1.bf16.msra.mxu0 %v603
      %622 = vmatprep.subr.bf16.mxu0 0
      %623 = vmatpush1.bf16.msra.mxu0 %v604
      %624 = vmatprep.subr.bf16.mxu0 0
      %625 = vmatpush1.bf16.msra.mxu0 %v605
      %626 = vmatprep.subr.bf16.mxu0 0
      %627 = vmatpush1.bf16.msra.mxu0 %v606
      %628 = vmatprep.subr.bf16.mxu0 0
      %629 = vmatpush1.bf16.msra.mxu0 %v607
      %630 = vmatprep.subr.bf16.mxu0 0
      %631 = vmatpush1.bf16.msra.mxu0 %v608
      %632 = vmatprep.subr.bf16.mxu0 0
      %633 = vmatpush1.bf16.msra.mxu0 %v609
      %634 = vmatprep.subr.bf16.mxu0 0
      %635 = vmatpush1.bf16.msra.mxu0 0
      %636 = vmatprep.subr.bf16.mxu0 0
      %637 = vmatpush1.bf16.msra.mxu0 0
      %638 = vmatprep.subr.bf16.mxu0 0
      %639 = vmatpush1.bf16.msra.mxu0 0
      %640 = vmatprep.subr.bf16.mxu0 0
      %641 = vmatpush1.bf16.msra.mxu0 0
      %642 = vmatprep.subr.bf16.mxu0 0
      %643 = vmatpush1.bf16.msra.mxu0 0
      %644 = vmatprep.subr.bf16.mxu0 0
      %645 = vmatpush1.bf16.msra.mxu0 0
      %646 = vmatprep.subr.bf16.mxu0 0
      %647 = vmatpush1.bf16.msra.mxu0 0
      %648 = vmatprep.subr.bf16.mxu0 0
      %649 = vmatpush1.bf16.msra.mxu0 0
      %650 = vmatprep.mubr.bf16.mxu0 0
      %651 = vmatmul.mubr.bf16.gmra.mrb[0].mxu0 %v391
      %v652 = vpop.f32.mrb[0].mxu0
      %v653 = vadd.f32 0.0, %v652
      %v654 = vpop.f32.mrb[0].mxu0
      %v655 = vpop.f32.mrb[0].mxu0
      %v656 = vadd.f32 0.0, %v655
      %v657 = vpop.f32.mrb[0].mxu0
      %658 = vdwg.mxu0
      %vm659 = vcmask 64512
      %v661 = vsel %vm659, %v475, 0
      %v664 = vsel %vm659, %v564, 0
      %666 = vmatprep.subr.mxu0 0.0
      %667 = vmatpush1.xpose.msra.mxu0 %v664
      %668 = vmatprep.subr.mxu0 0.0
      %669 = vmatpush1.xpose.msra.mxu0 0.0
      %670 = vmatprep.subr.mxu0 0.0
      %671 = vmatpush1.xpose.msra.mxu0 0.0
      %672 = vmatprep.subr.mxu0 0.0
      %673 = vmatpush1.xpose.msra.mxu0 0.0
      %674 = vmatprep.subr.mxu0 0.0
      %675 = vmatpush1.xpose.msra.mxu0 0.0
      %676 = vmatprep.subr.mxu0 0.0
      %677 = vmatpush1.xpose.msra.mxu0 0.0
      %678 = vmatprep.subr.mxu0 0.0
      %679 = vmatpush1.xpose.msra.mxu0 0.0
      %680 = vmatprep.subr.mxu0 0.0
      %681 = vmatpush1.xpose.msra.mxu0 0.0
      %682 = vmatprep.subr.mxu0 0.0
      %683 = vmatpush1.xpose.msra.mxu0 0.0
      %684 = vmatprep.subr.mxu0 0.0
      %685 = vmatpush1.xpose.msra.mxu0 0.0
      %686 = vmatprep.subr.mxu0 0.0
      %687 = vmatpush1.xpose.msra.mxu0 0.0
      %688 = vmatprep.subr.mxu0 0.0
      %689 = vmatpush1.xpose.msra.mxu0 0.0
      %690 = vmatprep.subr.mxu0 0.0
      %691 = vmatpush1.xpose.msra.mxu0 0.0
      %692 = vmatprep.subr.mxu0 0.0
      %693 = vmatpush1.xpose.msra.mxu0 0.0
      %694 = vmatprep.subr.mxu0 0.0
      %695 = vmatpush1.xpose.msra.mxu0 0.0
      %696 = vmatprep.subr.mxu0 0.0
      %697 = vmatpush1.xpose.msra.mxu0 0.0
      %698 = vmatprep.subr.mxu0 0.0
      %699 = vmatpush1.xpose.msra.mxu0 0.0
      %700 = vmatprep.subr.mxu0 0.0
      %701 = vmatpush1.xpose.msra.mxu0 0.0
      %702 = vmatprep.subr.mxu0 0.0
      %703 = vmatpush1.xpose.msra.mxu0 0.0
      %704 = vmatprep.subr.mxu0 0.0
      %705 = vmatpush1.xpose.msra.mxu0 0.0
      %706 = vmatprep.subr.mxu0 0.0
      %707 = vmatpush1.xpose.msra.mxu0 0.0
      %708 = vmatprep.subr.mxu0 0.0
      %709 = vmatpush1.xpose.msra.mxu0 0.0
      %710 = vmatprep.subr.mxu0 0.0
      %711 = vmatpush1.xpose.msra.mxu0 0.0
      %712 = vmatprep.subr.mxu0 0.0
      %713 = vmatpush1.xpose.msra.mxu0 0.0
      %714 = vmatprep.subr.mxu0 0.0
      %715 = vmatpush1.xpose.msra.mxu0 0.0
      %716 = vmatprep.subr.mxu0 0.0
      %717 = vmatpush1.xpose.msra.mxu0 0.0
      %718 = vmatprep.subr.mxu0 0.0
      %719 = vmatpush1.xpose.msra.mxu0 0.0
      %720 = vmatprep.subr.mxu0 0.0
      %721 = vmatpush1.xpose.msra.mxu0 0.0
      %722 = vmatprep.subr.mxu0 0.0
      %723 = vmatpush1.xpose.msra.mxu0 0.0
      %724 = vmatprep.subr.mxu0 0.0
      %725 = vmatpush1.xpose.msra.mxu0 0.0
      %726 = vmatprep.subr.mxu0 0.0
      %727 = vmatpush1.xpose.msra.mxu0 0.0
      %728 = vmatprep.subr.mxu0 0.0
      %729 = vmatpush1.xpose.msra.mxu0 0.0
      %730 = vmatprep.mubr.f32.mxu0 0.0
      %731 = vmatmul.mubr.f32.gmra.mrb[0].mxu0 %v661
      %v732 = vpop.f32.mrb[0].mxu0
      %v733 = vadd.f32 0.0, %v732
      %v734 = vpop.f32.mrb[0].mxu0
      %735 = vdwg.mxu0
      %v737 = vsel %vm659, %v478, 0
      %v740 = vsel %vm659, %v567, 0
      %742 = vmatprep.subr.mxu0 0.0
      %743 = vmatpush1.xpose.msra.mxu0 %v740
      %744 = vmatprep.subr.mxu0 0.0
      %745 = vmatpush1.xpose.msra.mxu0 0.0
      %746 = vmatprep.subr.mxu0 0.0
      %747 = vmatpush1.xpose.msra.mxu0 0.0
      %748 = vmatprep.subr.mxu0 0.0
      %749 = vmatpush1.xpose.msra.mxu0 0.0
      %750 = vmatprep.subr.mxu0 0.0
      %751 = vmatpush1.xpose.msra.mxu0 0.0
      %752 = vmatprep.subr.mxu0 0.0
      %753 = vmatpush1.xpose.msra.mxu0 0.0
      %754 = vmatprep.subr.mxu0 0.0
      %755 = vmatpush1.xpose.msra.mxu0 0.0
      %756 = vmatprep.subr.mxu0 0.0
      %757 = vmatpush1.xpose.msra.mxu0 0.0
      %758 = vmatprep.subr.mxu0 0.0
      %759 = vmatpush1.xpose.msra.mxu0 0.0
      %760 = vmatprep.subr.mxu0 0.0
      %761 = vmatpush1.xpose.msra.mxu0 0.0
      %762 = vmatprep.subr.mxu0 0.0
      %763 = vmatpush1.xpose.msra.mxu0 0.0
      %764 = vmatprep.subr.mxu0 0.0
      %765 = vmatpush1.xpose.msra.mxu0 0.0
      %766 = vmatprep.subr.mxu0 0.0
      %767 = vmatpush1.xpose.msra.mxu0 0.0
      %768 = vmatprep.subr.mxu0 0.0
      %769 = vmatpush1.xpose.msra.mxu0 0.0
      %770 = vmatprep.subr.mxu0 0.0
      %771 = vmatpush1.xpose.msra.mxu0 0.0
      %772 = vmatprep.subr.mxu0 0.0
      %773 = vmatpush1.xpose.msra.mxu0 0.0
      %774 = vmatprep.subr.mxu0 0.0
      %775 = vmatpush1.xpose.msra.mxu0 0.0
      %776 = vmatprep.subr.mxu0 0.0
      %777 = vmatpush1.xpose.msra.mxu0 0.0
      %778 = vmatprep.subr.mxu0 0.0
      %779 = vmatpush1.xpose.msra.mxu0 0.0
      %780 = vmatprep.subr.mxu0 0.0
      %781 = vmatpush1.xpose.msra.mxu0 0.0
      %782 = vmatprep.subr.mxu0 0.0
      %783 = vmatpush1.xpose.msra.mxu0 0.0
      %784 = vmatprep.subr.mxu0 0.0
      %785 = vmatpush1.xpose.msra.mxu0 0.0
      %786 = vmatprep.subr.mxu0 0.0
      %787 = vmatpush1.xpose.msra.mxu0 0.0
      %788 = vmatprep.subr.mxu0 0.0
      %789 = vmatpush1.xpose.msra.mxu0 0.0
      %790 = vmatprep.subr.mxu0 0.0
      %791 = vmatpush1.xpose.msra.mxu0 0.0
      %792 = vmatprep.subr.mxu0 0.0
      %793 = vmatpush1.xpose.msra.mxu0 0.0
      %794 = vmatprep.subr.mxu0 0.0
      %795 = vmatpush1.xpose.msra.mxu0 0.0
      %796 = vmatprep.subr.mxu0 0.0
      %797 = vmatpush1.xpose.msra.mxu0 0.0
      %798 = vmatprep.subr.mxu0 0.0
      %799 = vmatpush1.xpose.msra.mxu0 0.0
      %800 = vmatprep.subr.mxu0 0.0
      %801 = vmatpush1.xpose.msra.mxu0 0.0
      %802 = vmatprep.subr.mxu0 0.0
      %803 = vmatpush1.xpose.msra.mxu0 0.0
      %804 = vmatprep.subr.mxu0 0.0
      %805 = vmatpush1.xpose.msra.mxu0 0.0
      %806 = vmatprep.mubr.f32.mxu0 0.0
      %807 = vmatmul.mubr.f32.gmra.mrb[0].mxu0 %v737
      %v808 = vpop.f32.mrb[0].mxu0
      %v809 = vadd.f32 0.0, %v808
      %v810 = vpop.f32.mrb[0].mxu0
      %811 = vdwg.mxu0
      %v812 = vsel %vm659, %v733, -inf
      %813 = vmax.xlane.f32.xlu0 %v812
      %v814 = vpop.xlane.xlu0 %813
      %v815 = vsel %vm659, %v809, -inf
      %816 = vmax.xlane.f32.xlu0 %v815
      %v817 = vpop.xlane.xlu0 %816
      %v818 = vsub.f32 %v733, %v814
      %v819 = vsub.f32 %v809, %v817
      %v820 = vmul.f32 %v818, 1.442695
      %v821 = vpow.pop %v820
      %v822 = vmul.f32 %v819, 1.442695
      %v823 = vpow.pop %v822
      %v824 = vsel %vm659, %v821, 0.0
      %825 = vadd.xlane.f32.xlu0 %v824
      %v826 = vpop.xlane.xlu0 %825
      %v827 = vsel %vm659, %v823, 0.0
      %828 = vadd.xlane.f32.xlu0 %v827
      %v829 = vpop.xlane.xlu0 %828
      %v830 = vrcp.pop %v826
      %v831 = vrcp.pop %v829
      %v832 = vmul.f32 %v821, %v830
      %v833 = vmul.f32 %v823, %v831
      %v835 = vsel %vm659, %v832, 0
      %837 = vmatprep.subr.mxu0 0.0
      %838 = vmatpush1.msra.mxu0 %v653
      %839 = vmatprep.subr.mxu0 0.0
      %840 = vmatpush1.msra.mxu0 0.0
      %841 = vmatprep.subr.mxu0 0.0
      %842 = vmatpush1.msra.mxu0 0.0
      %843 = vmatprep.subr.mxu0 0.0
      %844 = vmatpush1.msra.mxu0 0.0
      %845 = vmatprep.subr.mxu0 0.0
      %846 = vmatpush1.msra.mxu0 0.0
      %847 = vmatprep.subr.mxu0 0.0
      %848 = vmatpush1.msra.mxu0 0.0
      %849 = vmatprep.subr.mxu0 0.0
      %850 = vmatpush1.msra.mxu0 0.0
      %851 = vmatprep.subr.mxu0 0.0
      %852 = vmatpush1.msra.mxu0 0.0
      %853 = vmatprep.subr.mxu0 0.0
      %854 = vmatpush1.msra.mxu0 0.0
      %855 = vmatprep.subr.mxu0 0.0
      %856 = vmatpush1.msra.mxu0 0.0
      %857 = vmatprep.subr.mxu0 0.0
      %858 = vmatpush1.msra.mxu0 0.0
      %859 = vmatprep.subr.mxu0 0.0
      %860 = vmatpush1.msra.mxu0 0.0
      %861 = vmatprep.subr.mxu0 0.0
      %862 = vmatpush1.msra.mxu0 0.0
      %863 = vmatprep.subr.mxu0 0.0
      %864 = vmatpush1.msra.mxu0 0.0
      %865 = vmatprep.subr.mxu0 0.0
      %866 = vmatpush1.msra.mxu0 0.0
      %867 = vmatprep.subr.mxu0 0.0
      %868 = vmatpush1.msra.mxu0 0.0
      %869 = vmatprep.subr.mxu0 0.0
      %870 = vmatpush1.msra.mxu0 0.0
      %871 = vmatprep.subr.mxu0 0.0
      %872 = vmatpush1.msra.mxu0 0.0
      %873 = vmatprep.subr.mxu0 0.0
      %874 = vmatpush1.msra.mxu0 0.0
      %875 = vmatprep.subr.mxu0 0.0
      %876 = vmatpush1.msra.mxu0 0.0
      %877 = vmatprep.subr.mxu0 0.0
      %878 = vmatpush1.msra.mxu0 0.0
      %879 = vmatprep.subr.mxu0 0.0
      %880 = vmatpush1.msra.mxu0 0.0
      %881 = vmatprep.subr.mxu0 0.0
      %882 = vmatpush1.msra.mxu0 0.0
      %883 = vmatprep.subr.mxu0 0.0
      %884 = vmatpush1.msra.mxu0 0.0
      %885 = vmatprep.subr.mxu0 0.0
      %886 = vmatpush1.msra.mxu0 0.0
      %887 = vmatprep.subr.mxu0 0.0
      %888 = vmatpush1.msra.mxu0 0.0
      %889 = vmatprep.subr.mxu0 0.0
      %890 = vmatpush1.msra.mxu0 0.0
      %891 = vmatprep.subr.mxu0 0.0
      %892 = vmatpush1.msra.mxu0 0.0
      %893 = vmatprep.subr.mxu0 0.0
      %894 = vmatpush1.msra.mxu0 0.0
      %895 = vmatprep.subr.mxu0 0.0
      %896 = vmatpush1.msra.mxu0 0.0
      %897 = vmatprep.subr.mxu0 0.0
      %898 = vmatpush1.msra.mxu0 0.0
      %899 = vmatprep.subr.mxu0 0.0
      %900 = vmatpush1.msra.mxu0 0.0
      %901 = vmatprep.mubr.f32.mxu0 0.0
      %902 = vmatmul.mubr.f32.gmra.mrb[0].mxu0 %v835
      %v903 = vpop.f32.mrb[0].mxu0
      %v904 = vadd.f32 0.0, %v903
      %v905 = vpop.f32.mrb[0].mxu0
      %906 = vdwg.mxu0
      %v908 = vsel %vm659, %v833, 0
      %910 = vmatprep.subr.mxu0 0.0
      %911 = vmatpush1.msra.mxu0 %v656
      %912 = vmatprep.subr.mxu0 0.0
      %913 = vmatpush1.msra.mxu0 0.0
      %914 = vmatprep.subr.mxu0 0.0
      %915 = vmatpush1.msra.mxu0 0.0
      %916 = vmatprep.subr.mxu0 0.0
      %917 = vmatpush1.msra.mxu0 0.0
      %918 = vmatprep.subr.mxu0 0.0
      %919 = vmatpush1.msra.mxu0 0.0
      %920 = vmatprep.subr.mxu0 0.0
      %921 = vmatpush1.msra.mxu0 0.0
      %922 = vmatprep.subr.mxu0 0.0
      %923 = vmatpush1.msra.mxu0 0.0
      %924 = vmatprep.subr.mxu0 0.0
      %925 = vmatpush1.msra.mxu0 0.0
      %926 = vmatprep.subr.mxu0 0.0
      %927 = vmatpush1.msra.mxu0 0.0
      %928 = vmatprep.subr.mxu0 0.0
      %929 = vmatpush1.msra.mxu0 0.0
      %930 = vmatprep.subr.mxu0 0.0
      %931 = vmatpush1.msra.mxu0 0.0
      %932 = vmatprep.subr.mxu0 0.0
      %933 = vmatpush1.msra.mxu0 0.0
      %934 = vmatprep.subr.mxu0 0.0
      %935 = vmatpush1.msra.mxu0 0.0
      %936 = vmatprep.subr.mxu0 0.0
      %937 = vmatpush1.msra.mxu0 0.0
      %938 = vmatprep.subr.mxu0 0.0
      %939 = vmatpush1.msra.mxu0 0.0
      %940 = vmatprep.subr.mxu0 0.0
      %941 = vmatpush1.msra.mxu0 0.0
      %942 = vmatprep.subr.mxu0 0.0
      %943 = vmatpush1.msra.mxu0 0.0
      %944 = vmatprep.subr.mxu0 0.0
      %945 = vmatpush1.msra.mxu0 0.0
      %946 = vmatprep.subr.mxu0 0.0
      %947 = vmatpush1.msra.mxu0 0.0
      %948 = vmatprep.subr.mxu0 0.0
      %949 = vmatpush1.msra.mxu0 0.0
      %950 = vmatprep.subr.mxu0 0.0
      %951 = vmatpush1.msra.mxu0 0.0
      %952 = vmatprep.subr.mxu0 0.0
      %953 = vmatpush1.msra.mxu0 0.0
      %954 = vmatprep.subr.mxu0 0.0
      %955 = vmatpush1.msra.mxu0 0.0
      %956 = vmatprep.subr.mxu0 0.0
      %957 = vmatpush1.msra.mxu0 0.0
      %958 = vmatprep.subr.mxu0 0.0
      %959 = vmatpush1.msra.mxu0 0.0
      %960 = vmatprep.subr.mxu0 0.0
      %961 = vmatpush1.msra.mxu0 0.0
      %962 = vmatprep.subr.mxu0 0.0
      %963 = vmatpush1.msra.mxu0 0.0
      %964 = vmatprep.subr.mxu0 0.0
      %965 = vmatpush1.msra.mxu0 0.0
      %966 = vmatprep.subr.mxu0 0.0
      %967 = vmatpush1.msra.mxu0 0.0
      %968 = vmatprep.subr.mxu0 0.0
      %969 = vmatpush1.msra.mxu0 0.0
      %970 = vmatprep.subr.mxu0 0.0
      %971 = vmatpush1.msra.mxu0 0.0
      %972 = vmatprep.subr.mxu0 0.0
      %973 = vmatpush1.msra.mxu0 0.0
      %974 = vmatprep.mubr.f32.mxu0 0.0
      %975 = vmatmul.mubr.f32.gmra.mrb[0].mxu0 %v908
      %v976 = vpop.f32.mrb[0].mxu0
      %v977 = vadd.f32 0.0, %v976
      %v978 = vpop.f32.mrb[0].mxu0
      %979 = vdwg.mxu0
      %980 = vrot.lane.b32.xlu0 %v475, 120
      %v981 = vpop.permute.xlu0 %980
      %982 = vrot.lane.b32.xlu0 %v564, 120
      %v983 = vpop.permute.xlu0 %982
      %v984 = vsel %vm659, %v981, 0
      %v986 = vsel %vm659, %v983, 0
      %988 = vmatprep.subr.mxu0 0.0
      %989 = vmatpush1.xpose.msra.mxu0 %v986
      %990 = vmatprep.subr.mxu0 0.0
      %991 = vmatpush1.xpose.msra.mxu0 0.0
      %992 = vmatprep.subr.mxu0 0.0
      %993 = vmatpush1.xpose.msra.mxu0 0.0
      %994 = vmatprep.subr.mxu0 0.0
      %995 = vmatpush1.xpose.msra.mxu0 0.0
      %996 = vmatprep.subr.mxu0 0.0
      %997 = vmatpush1.xpose.msra.mxu0 0.0
      %998 = vmatprep.subr.mxu0 0.0
      %999 = vmatpush1.xpose.msra.mxu0 0.0
      %1000 = vmatprep.subr.mxu0 0.0
      %1001 = vmatpush1.xpose.msra.mxu0 0.0
      %1002 = vmatprep.subr.mxu0 0.0
      %1003 = vmatpush1.xpose.msra.mxu0 0.0
      %1004 = vmatprep.subr.mxu0 0.0
      %1005 = vmatpush1.xpose.msra.mxu0 0.0
      %1006 = vmatprep.subr.mxu0 0.0
      %1007 = vmatpush1.xpose.msra.mxu0 0.0
      %1008 = vmatprep.subr.mxu0 0.0
      %1009 = vmatpush1.xpose.msra.mxu0 0.0
      %1010 = vmatprep.subr.mxu0 0.0
      %1011 = vmatpush1.xpose.msra.mxu0 0.0
      %1012 = vmatprep.subr.mxu0 0.0
      %1013 = vmatpush1.xpose.msra.mxu0 0.0
      %1014 = vmatprep.subr.mxu0 0.0
      %1015 = vmatpush1.xpose.msra.mxu0 0.0
      %1016 = vmatprep.subr.mxu0 0.0
      %1017 = vmatpush1.xpose.msra.mxu0 0.0
      %1018 = vmatprep.subr.mxu0 0.0
      %1019 = vmatpush1.xpose.msra.mxu0 0.0
      %1020 = vmatprep.subr.mxu0 0.0
      %1021 = vmatpush1.xpose.msra.mxu0 0.0
      %1022 = vmatprep.subr.mxu0 0.0
      %1023 = vmatpush1.xpose.msra.mxu0 0.0
      %1024 = vmatprep.subr.mxu0 0.0
      %1025 = vmatpush1.xpose.msra.mxu0 0.0
      %1026 = vmatprep.subr.mxu0 0.0
      %1027 = vmatpush1.xpose.msra.mxu0 0.0
      %1028 = vmatprep.subr.mxu0 0.0
      %1029 = vmatpush1.xpose.msra.mxu0 0.0
      %1030 = vmatprep.subr.mxu0 0.0
      %1031 = vmatpush1.xpose.msra.mxu0 0.0
      %1032 = vmatprep.subr.mxu0 0.0
      %1033 = vmatpush1.xpose.msra.mxu0 0.0
      %1034 = vmatprep.subr.mxu0 0.0
      %1035 = vmatpush1.xpose.msra.mxu0 0.0
      %1036 = vmatprep.subr.mxu0 0.0
      %1037 = vmatpush1.xpose.msra.mxu0 0.0
      %1038 = vmatprep.subr.mxu0 0.0
      %1039 = vmatpush1.xpose.msra.mxu0 0.0
      %1040 = vmatprep.subr.mxu0 0.0
      %1041 = vmatpush1.xpose.msra.mxu0 0.0
      %1042 = vmatprep.subr.mxu0 0.0
      %1043 = vmatpush1.xpose.msra.mxu0 0.0
      %1044 = vmatprep.subr.mxu0 0.0
      %1045 = vmatpush1.xpose.msra.mxu0 0.0
      %1046 = vmatprep.subr.mxu0 0.0
      %1047 = vmatpush1.xpose.msra.mxu0 0.0
      %1048 = vmatprep.subr.mxu0 0.0
      %1049 = vmatpush1.xpose.msra.mxu0 0.0
      %1050 = vmatprep.subr.mxu0 0.0
      %1051 = vmatpush1.xpose.msra.mxu0 0.0
      %1052 = vmatprep.mubr.f32.mxu0 0.0
      %1053 = vmatmul.mubr.f32.gmra.mrb[0].mxu0 %v984
      %v1054 = vpop.f32.mrb[0].mxu0
      %v1055 = vadd.f32 0.0, %v1054
      %v1056 = vpop.f32.mrb[0].mxu0
      %1057 = vdwg.mxu0
      %1058 = vrot.lane.b32.xlu0 %v478, 120
      %v1059 = vpop.permute.xlu0 %1058
      %1060 = vrot.lane.b32.xlu0 %v567, 120
      %v1061 = vpop.permute.xlu0 %1060
      %v1062 = vsel %vm659, %v1059, 0
      %v1064 = vsel %vm659, %v1061, 0
      %1066 = vmatprep.subr.mxu0 0.0
      %1067 = vmatpush1.xpose.msra.mxu0 %v1064
      %1068 = vmatprep.subr.mxu0 0.0
      %1069 = vmatpush1.xpose.msra.mxu0 0.0
      %1070 = vmatprep.subr.mxu0 0.0
      %1071 = vmatpush1.xpose.msra.mxu0 0.0
      %1072 = vmatprep.subr.mxu0 0.0
      %1073 = vmatpush1.xpose.msra.mxu0 0.0
      %1074 = vmatprep.subr.mxu0 0.0
      %1075 = vmatpush1.xpose.msra.mxu0 0.0
      %1076 = vmatprep.subr.mxu0 0.0
      %1077 = vmatpush1.xpose.msra.mxu0 0.0
      %1078 = vmatprep.subr.mxu0 0.0
      %1079 = vmatpush1.xpose.msra.mxu0 0.0
      %1080 = vmatprep.subr.mxu0 0.0
      %1081 = vmatpush1.xpose.msra.mxu0 0.0
      %1082 = vmatprep.subr.mxu0 0.0
      %1083 = vmatpush1.xpose.msra.mxu0 0.0
      %1084 = vmatprep.subr.mxu0 0.0
      %1085 = vmatpush1.xpose.msra.mxu0 0.0
      %1086 = vmatprep.subr.mxu0 0.0
      %1087 = vmatpush1.xpose.msra.mxu0 0.0
      %1088 = vmatprep.subr.mxu0 0.0
      %1089 = vmatpush1.xpose.msra.mxu0 0.0
      %1090 = vmatprep.subr.mxu0 0.0
      %1091 = vmatpush1.xpose.msra.mxu0 0.0
      %1092 = vmatprep.subr.mxu0 0.0
      %1093 = vmatpush1.xpose.msra.mxu0 0.0
      %1094 = vmatprep.subr.mxu0 0.0
      %1095 = vmatpush1.xpose.msra.mxu0 0.0
      %1096 = vmatprep.subr.mxu0 0.0
      %1097 = vmatpush1.xpose.msra.mxu0 0.0
      %1098 = vmatprep.subr.mxu0 0.0
      %1099 = vmatpush1.xpose.msra.mxu0 0.0
      %1100 = vmatprep.subr.mxu0 0.0
      %1101 = vmatpush1.xpose.msra.mxu0 0.0
      %1102 = vmatprep.subr.mxu0 0.0
      %1103 = vmatpush1.xpose.msra.mxu0 0.0
      %1104 = vmatprep.subr.mxu0 0.0
      %1105 = vmatpush1.xpose.msra.mxu0 0.0
      %1106 = vmatprep.subr.mxu0 0.0
      %1107 = vmatpush1.xpose.msra.mxu0 0.0
      %1108 = vmatprep.subr.mxu0 0.0
      %1109 = vmatpush1.xpose.msra.mxu0 0.0
      %1110 = vmatprep.subr.mxu0 0.0
      %1111 = vmatpush1.xpose.msra.mxu0 0.0
      %1112 = vmatprep.subr.mxu0 0.0
      %1113 = vmatpush1.xpose.msra.mxu0 0.0
      %1114 = vmatprep.subr.mxu0 0.0
      %1115 = vmatpush1.xpose.msra.mxu0 0.0
      %1116 = vmatprep.subr.mxu0 0.0
      %1117 = vmatpush1.xpose.msra.mxu0 0.0
      %1118 = vmatprep.subr.mxu0 0.0
      %1119 = vmatpush1.xpose.msra.mxu0 0.0
      %1120 = vmatprep.subr.mxu0 0.0
      %1121 = vmatpush1.xpose.msra.mxu0 0.0
      %1122 = vmatprep.subr.mxu0 0.0
      %1123 = vmatpush1.xpose.msra.mxu0 0.0
      %1124 = vmatprep.subr.mxu0 0.0
      %1125 = vmatpush1.xpose.msra.mxu0 0.0
      %1126 = vmatprep.subr.mxu0 0.0
      %1127 = vmatpush1.xpose.msra.mxu0 0.0
      %1128 = vmatprep.subr.mxu0 0.0
      %1129 = vmatpush1.xpose.msra.mxu0 0.0
      %1130 = vmatprep.mubr.f32.mxu0 0.0
      %1131 = vmatmul.mubr.f32.gmra.mrb[0].mxu0 %v1062
      %v1132 = vpop.f32.mrb[0].mxu0
      %v1133 = vadd.f32 0.0, %v1132
      %v1134 = vpop.f32.mrb[0].mxu0
      %1135 = vdwg.mxu0
      %v1136 = vsel %vm659, %v1055, -inf
      %1137 = vmax.xlane.f32.xlu0 %v1136
      %v1138 = vpop.xlane.xlu0 %1137
      %v1139 = vsel %vm659, %v1133, -inf
      %1140 = vmax.xlane.f32.xlu0 %v1139
      %v1141 = vpop.xlane.xlu0 %1140
      %v1142 = vsub.f32 %v1055, %v1138
      %v1143 = vsub.f32 %v1133, %v1141
      %v1144 = vmul.f32 %v1142, 1.442695
      %v1145 = vpow.pop %v1144
      %v1146 = vmul.f32 %v1143, 1.442695
      %v1147 = vpow.pop %v1146
      %v1148 = vsel %vm659, %v1145, 0.0
      %1149 = vadd.xlane.f32.xlu0 %v1148
      %v1150 = vpop.xlane.xlu0 %1149
      %v1151 = vsel %vm659, %v1147, 0.0
      %1152 = vadd.xlane.f32.xlu0 %v1151
      %v1153 = vpop.xlane.xlu0 %1152
      %v1154 = vrcp.pop %v1150
      %v1155 = vrcp.pop %v1153
      %v1156 = vmul.f32 %v1145, %v1154
      %v1157 = vmul.f32 %v1147, %v1155
      %1159 = vrot.lane.b32.xlu0 %v653, 120
      %v1160 = vpop.permute.xlu0 %1159
      %v1163 = vsel %vm659, %v1156, 0
      %1165 = vmatprep.subr.mxu0 0.0
      %1166 = vmatpush1.msra.mxu0 %v1160
      %1167 = vmatprep.subr.mxu0 0.0
      %1168 = vmatpush1.msra.mxu0 0.0
      %1169 = vmatprep.subr.mxu0 0.0
      %1170 = vmatpush1.msra.mxu0 0.0
      %1171 = vmatprep.subr.mxu0 0.0
      %1172 = vmatpush1.msra.mxu0 0.0
      %1173 = vmatprep.subr.mxu0 0.0
      %1174 = vmatpush1.msra.mxu0 0.0
      %1175 = vmatprep.subr.mxu0 0.0
      %1176 = vmatpush1.msra.mxu0 0.0
      %1177 = vmatprep.subr.mxu0 0.0
      %1178 = vmatpush1.msra.mxu0 0.0
      %1179 = vmatprep.subr.mxu0 0.0
      %1180 = vmatpush1.msra.mxu0 0.0
      %1181 = vmatprep.subr.mxu0 0.0
      %1182 = vmatpush1.msra.mxu0 0.0
      %1183 = vmatprep.subr.mxu0 0.0
      %1184 = vmatpush1.msra.mxu0 0.0
      %1185 = vmatprep.subr.mxu0 0.0
      %1186 = vmatpush1.msra.mxu0 0.0
      %1187 = vmatprep.subr.mxu0 0.0
      %1188 = vmatpush1.msra.mxu0 0.0
      %1189 = vmatprep.subr.mxu0 0.0
      %1190 = vmatpush1.msra.mxu0 0.0
      %1191 = vmatprep.subr.mxu0 0.0
      %1192 = vmatpush1.msra.mxu0 0.0
      %1193 = vmatprep.subr.mxu0 0.0
      %1194 = vmatpush1.msra.mxu0 0.0
      %1195 = vmatprep.subr.mxu0 0.0
      %1196 = vmatpush1.msra.mxu0 0.0
      %1197 = vmatprep.subr.mxu0 0.0
      %1198 = vmatpush1.msra.mxu0 0.0
      %1199 = vmatprep.subr.mxu0 0.0
      %1200 = vmatpush1.msra.mxu0 0.0
      %1201 = vmatprep.subr.mxu0 0.0
      %1202 = vmatpush1.msra.mxu0 0.0
      %1203 = vmatprep.subr.mxu0 0.0
      %1204 = vmatpush1.msra.mxu0 0.0
      %1205 = vmatprep.subr.mxu0 0.0
      %1206 = vmatpush1.msra.mxu0 0.0
      %1207 = vmatprep.subr.mxu0 0.0
      %1208 = vmatpush1.msra.mxu0 0.0
      %1209 = vmatprep.subr.mxu0 0.0
      %1210 = vmatpush1.msra.mxu0 0.0
      %1211 = vmatprep.subr.mxu0 0.0
      %1212 = vmatpush1.msra.mxu0 0.0
      %1213 = vmatprep.subr.mxu0 0.0
      %1214 = vmatpush1.msra.mxu0 0.0
      %1215 = vmatprep.subr.mxu0 0.0
      %1216 = vmatpush1.msra.mxu0 0.0
      %1217 = vmatprep.subr.mxu0 0.0
      %1218 = vmatpush1.msra.mxu0 0.0
      %1219 = vmatprep.subr.mxu0 0.0
      %1220 = vmatpush1.msra.mxu0 0.0
      %1221 = vmatprep.subr.mxu0 0.0
      %1222 = vmatpush1.msra.mxu0 0.0
      %1223 = vmatprep.subr.mxu0 0.0
      %1224 = vmatpush1.msra.mxu0 0.0
      %1225 = vmatprep.subr.mxu0 0.0
      %1226 = vmatpush1.msra.mxu0 0.0
      %1227 = vmatprep.subr.mxu0 0.0
      %1228 = vmatpush1.msra.mxu0 0.0
      %1229 = vmatprep.mubr.f32.mxu0 0.0
      %1230 = vmatmul.mubr.f32.gmra.mrb[0].mxu0 %v1163
      %v1231 = vpop.f32.mrb[0].mxu0
      %v1232 = vadd.f32 0.0, %v1231
      %v1233 = vpop.f32.mrb[0].mxu0
      %1234 = vdwg.mxu0
      %1236 = vrot.lane.b32.xlu0 %v656, 120
      %v1237 = vpop.permute.xlu0 %1236
      %v1240 = vsel %vm659, %v1157, 0
      %1242 = vmatprep.subr.mxu0 0.0
      %1243 = vmatpush1.msra.mxu0 %v1237
      %1244 = vmatprep.subr.mxu0 0.0
      %1245 = vmatpush1.msra.mxu0 0.0
      %1246 = vmatprep.subr.mxu0 0.0
      %1247 = vmatpush1.msra.mxu0 0.0
      %1248 = vmatprep.subr.mxu0 0.0
      %1249 = vmatpush1.msra.mxu0 0.0
      %1250 = vmatprep.subr.mxu0 0.0
      %1251 = vmatpush1.msra.mxu0 0.0
      %1252 = vmatprep.subr.mxu0 0.0
      %1253 = vmatpush1.msra.mxu0 0.0
      %1254 = vmatprep.subr.mxu0 0.0
      %1255 = vmatpush1.msra.mxu0 0.0
      %1256 = vmatprep.subr.mxu0 0.0
      %1257 = vmatpush1.msra.mxu0 0.0
      %1258 = vmatprep.subr.mxu0 0.0
      %1259 = vmatpush1.msra.mxu0 0.0
      %1260 = vmatprep.subr.mxu0 0.0
      %1261 = vmatpush1.msra.mxu0 0.0
      %1262 = vmatprep.subr.mxu0 0.0
      %1263 = vmatpush1.msra.mxu0 0.0
      %1264 = vmatprep.subr.mxu0 0.0
      %1265 = vmatpush1.msra.mxu0 0.0
      %1266 = vmatprep.subr.mxu0 0.0
      %1267 = vmatpush1.msra.mxu0 0.0
      %1268 = vmatprep.subr.mxu0 0.0
      %1269 = vmatpush1.msra.mxu0 0.0
      %1270 = vmatprep.subr.mxu0 0.0
      %1271 = vmatpush1.msra.mxu0 0.0
      %1272 = vmatprep.subr.mxu0 0.0
      %1273 = vmatpush1.msra.mxu0 0.0
      %1274 = vmatprep.subr.mxu0 0.0
      %1275 = vmatpush1.msra.mxu0 0.0
      %1276 = vmatprep.subr.mxu0 0.0
      %1277 = vmatpush1.msra.mxu0 0.0
      %1278 = vmatprep.subr.mxu0 0.0
      %1279 = vmatpush1.msra.mxu0 0.0
      %1280 = vmatprep.subr.mxu0 0.0
      %1281 = vmatpush1.msra.mxu0 0.0
      %1282 = vmatprep.subr.mxu0 0.0
      %1283 = vmatpush1.msra.mxu0 0.0
      %1284 = vmatprep.subr.mxu0 0.0
      %1285 = vmatpush1.msra.mxu0 0.0
      %1286 = vmatprep.subr.mxu0 0.0
      %1287 = vmatpush1.msra.mxu0 0.0
      %1288 = vmatprep.subr.mxu0 0.0
      %1289 = vmatpush1.msra.mxu0 0.0
      %1290 = vmatprep.subr.mxu0 0.0
      %1291 = vmatpush1.msra.mxu0 0.0
      %1292 = vmatprep.subr.mxu0 0.0
      %1293 = vmatpush1.msra.mxu0 0.0
      %1294 = vmatprep.subr.mxu0 0.0
      %1295 = vmatpush1.msra.mxu0 0.0
      %1296 = vmatprep.subr.mxu0 0.0
      %1297 = vmatpush1.msra.mxu0 0.0
      %1298 = vmatprep.subr.mxu0 0.0
      %1299 = vmatpush1.msra.mxu0 0.0
      %1300 = vmatprep.subr.mxu0 0.0
      %1301 = vmatpush1.msra.mxu0 0.0
      %1302 = vmatprep.subr.mxu0 0.0
      %1303 = vmatpush1.msra.mxu0 0.0
      %1304 = vmatprep.subr.mxu0 0.0
      %1305 = vmatpush1.msra.mxu0 0.0
      %1306 = vmatprep.mubr.f32.mxu0 0.0
      %1307 = vmatmul.mubr.f32.gmra.mrb[0].mxu0 %v1240
      %v1308 = vpop.f32.mrb[0].mxu0
      %v1309 = vadd.f32 0.0, %v1308
      %v1310 = vpop.f32.mrb[0].mxu0
      %1311 = vdwg.mxu0
      %1314 = vrot.lane.b32.xlu0 %v1232, 8
      %v1315 = vpop.permute.xlu0 %1314
      %1316 = vrot.lane.b32.xlu0 %v1309, 8
      %v1317 = vpop.permute.xlu0 %1316
      %v1320 = vsel %vm659, %v904, %v1315
      %v1321 = vsel %vm659, %v977, %v1317
      %v1322 = vpack.c.bf16 %v1321, %v1320
      %v1325 = vunpack.c.l.b16 %v389
      %v1326 = vunpack.c.l.b16 %v390
      %v1327 = vpack.c.b16 %v1326, %v1325
      %vm1329 = vcmask 130048
      %v1331 = vsel %vm1329, %v1322, 0
      %1333 = vmatprep.subr.bf16.mxu0 0
      %1334 = vmatpush1.bf16.msra.mxu0 %v1327
      %1335 = vmatprep.subr.bf16.mxu0 0
      %1336 = vmatpush1.bf16.msra.mxu0 0
      %1337 = vmatprep.subr.bf16.mxu0 0
      %1338 = vmatpush1.bf16.msra.mxu0 0
      %1339 = vmatprep.subr.bf16.mxu0 0
      %1340 = vmatpush1.bf16.msra.mxu0 0
      %1341 = vmatprep.subr.bf16.mxu0 0
      %1342 = vmatpush1.bf16.msra.mxu0 0
      %1343 = vmatprep.subr.bf16.mxu0 0
      %1344 = vmatpush1.bf16.msra.mxu0 0
      %1345 = vmatprep.subr.bf16.mxu0 0
      %1346 = vmatpush1.bf16.msra.mxu0 0
      %1347 = vmatprep.subr.bf16.mxu0 0
      %1348 = vmatpush1.bf16.msra.mxu0 0
      %1349 = vmatprep.subr.bf16.mxu0 0
      %1350 = vmatpush1.bf16.msra.mxu0 0
      %1351 = vmatprep.subr.bf16.mxu0 0
      %1352 = vmatpush1.bf16.msra.mxu0 0
      %1353 = vmatprep.subr.bf16.mxu0 0
      %1354 = vmatpush1.bf16.msra.mxu0 0
      %1355 = vmatprep.subr.bf16.mxu0 0
      %1356 = vmatpush1.bf16.msra.mxu0 0
      %1357 = vmatprep.subr.bf16.mxu0 0
      %1358 = vmatpush1.bf16.msra.mxu0 0
      %1359 = vmatprep.subr.bf16.mxu0 0
      %1360 = vmatpush1.bf16.msra.mxu0 0
      %1361 = vmatprep.subr.bf16.mxu0 0
      %1362 = vmatpush1.bf16.msra.mxu0 0
      %1363 = vmatprep.subr.bf16.mxu0 0
      %1364 = vmatpush1.bf16.msra.mxu0 0
      %1365 = vmatprep.mubr.bf16.mxu0 0
      %1366 = vmatmul.mubr.bf16.gmra.mrb[0].mxu0 %v1331
      %v1367 = vpop.f32.mrb[0].mxu0
      %v1368 = vadd.f32 0.0, %v1367
      %v1369 = vpop.f32.mrb[0].mxu0
      %v1370 = vpop.f32.mrb[0].mxu0
      %v1371 = vadd.f32 0.0, %v1370
      %v1372 = vpop.f32.mrb[0].mxu0
      %1373 = vdwg.mxu0
      %v1374 = vadd.f32 %v339, %v1368
      %v1375 = vadd.f32 %v340, %v1371
      %1376 = vst [vmem:[%s314] sm:$0xff] %v1374
      %1377 = vst [vmem:[%s314 + $0x8] sm:$0xff] %v1375
      %v1378 = vadd.f32 %v1374, %v1375
      %v1379 = vrot.slane %v1378, 4
      %v1380 = vadd.f32 %v1378, %v1379
      %v1381 = vrot.slane %v1380, 2
      %v1382 = vadd.f32 %v1380, %v1381
      %v1383 = vrot.slane %v1382, 1
      %v1384 = vadd.f32 %v1382, %v1383
      %v1385 = vmul.f32 %v1374, %v1374
      %v1386 = vmul.f32 %v1375, %v1375
      %v1387 = vadd.f32 %v1385, %v1386
      %v1388 = vrot.slane %v1387, 4
      %v1389 = vadd.f32 %v1387, %v1388
      %v1390 = vrot.slane %v1389, 2
      %v1391 = vadd.f32 %v1389, %v1390
      %v1392 = vrot.slane %v1391, 1
      %v1393 = vadd.f32 %v1391, %v1392
      %vm1394 = vcmask 1040384
      %v1395 = vsel %vm1394, %v1384, %v1393
      %1396 = vst [vmem:[%s319] sm:$0x3] %v1395
      %s1397 = smul.u32 2, %s20
      %p1398 = scmp.lt.s32.totalorder %s1397, 3
      %s1399 = scalar_select %p1398, %s1397, 3
      %s1400 = smul.addr %s1399, 8
      %s1401 = scalar_lea.vmem %s7, %s1400
      %p1402 = scmp.lt.s32.totalorder %s20, 1
      %s1403 = scalar_select %p1402, %s20, 1
      %s1404 = smul.addr %s1403, 2
      %s1405 = scalar_lea.vmem %s8, %s1404
      // Predicated region
      $region49: #{encoder_forward.7} parent=47 // pred_check
        %p1406 = pneg %p190
      $region50: #{encoder_forward.7} parent=47 // pred_check_branch
        %1408 = sbr.rel (%p1406) target = $region52
      $region51: #{encoder_forward.7} parent=47 // pred_region
        %s1409 = smul.u32 2, %s20
      $region52: #{encoder_forward.7} parent=47 // pred_fallthru
        _
      // Predicated region
      $region53: #{encoder_forward.7} parent=47 // pred_check
        %p1410 = pneg %p216
      $region54: #{encoder_forward.7} parent=47 // pred_check_branch
        %1412 = sbr.rel (%p1410) target = $region56
      $region55: #{encoder_forward.7} parent=47 // pred_region
        _
      $region56: #{encoder_forward.7} parent=47 // pred_fallthru
        _
    $region48: #{encoder_forward.7} parent=5 // pred_fallthru
      _
    %p1413 = scmp.le.s32.totalorder 2, %s15
    // Predicated region
    $region57: #{encoder_forward.7} parent=5 // pred_check
      %p1414 = pneg %p1413
    $region58: #{encoder_forward.7} parent=5 // pred_check_branch
      %1416 = sbr.rel (%p1414) target = $region60
    $region59: #{encoder_forward.7} parent=5 // pred_region
      %s1417 = ssub.s32 %s15, 2
      // Predicated region
      $region61: #{encoder_forward.7} parent=59 // pred_check
        %p1418 = pneg %p196
      $region62: #{encoder_forward.7} parent=59 // pred_check_branch
        %1420 = sbr.rel (%p1418) target = $region64
      $region63: #{encoder_forward.7} parent=59 // pred_region
        %s1421 = smul.u32 2, %s21
        %p1422 = scmp.lt.s32.totalorder %s1421, 3
        %s1423 = scalar_select %p1422, %s1421, 3
        %s1424 = smul.addr %s1423, 8
        %s1425 = scalar_lea.vmem %s7, %s1424
      $region64: #{encoder_forward.7} parent=59 // pred_fallthru
        _
      // Predicated region
      $region65: #{encoder_forward.7} parent=59 // pred_check
        %p1426 = pneg %p222
      $region66: #{encoder_forward.7} parent=59 // pred_check_branch
        %1428 = sbr.rel (%p1426) target = $region68
      $region67: #{encoder_forward.7} parent=59 // pred_region
        %p1429 = scmp.lt.s32.totalorder %s21, 1
        %s1430 = scalar_select %p1429, %s21, 1
        %s1431 = smul.addr %s1430, 2
        %s1432 = scalar_lea.vmem %s8, %s1431
      $region68: #{encoder_forward.7} parent=59 // pred_fallthru
        _
    $region60: #{encoder_forward.7} parent=5 // pred_fallthru
      _
  $region6: #{encoder_forward.7} parent=0 // loop_footer
    %s19 = sadd.s32 1, %s15
  $region7: #{encoder_forward.7} parent=0 // loop_footer_branch
    %14 = sbr.rel target = $region3
  $region8: #{encoder_forward.7} parent=0 // loop_exit
    _

</llo_original>
